<compile_context>
chip_gen: v5e
topology: v5e:2x2
jax: 0.10.0
libtpu: 0.0.40
codegen_flags: <defaults>
</compile_context>

<pallas_src>
import math

import jax
import jax.numpy as jnp
from jax import lax
from jax.experimental import pallas as pl
from jax.experimental.pallas import tpu as pltpu

BN_EPS = 1e-5


# ----------------------------------------------------------------------------
# Fused whole-block kernel (generated per static config)
# ----------------------------------------------------------------------------
def _make_block_kernel(taps1, taps2, res_tap, Ho, Wo, Cin, C1, has_ds):
    M = Ho * Wo

    def kernel(*refs):
        if has_ds:
            (x_ref, w1_ref, b1_ref, w2_ref, b2_ref, m1_ref, m2_ref,
             wd_ref, bd_ref, m3_ref, o_ref, t_ref) = refs
        else:
            (x_ref, w1_ref, b1_ref, w2_ref, b2_ref, m1_ref, m2_ref,
             o_ref, t_ref) = refs

        # ---- conv1 (BN1 scale pre-folded into weights): in-VMEM im2col as 9 MXU matmuls
        acc = None
        for t, (rb, cb) in enumerate(taps1):
            patch = x_ref[0, rb:rb + Ho, cb:cb + Wo, :].reshape(M, Cin)
            d = jnp.dot(patch, w1_ref[t], preferred_element_type=jnp.float32)
            acc = d if acc is None else acc + d
        # relu(bn1(conv1(x))) * mask1   (mask is per-channel, broadcast from (1, C1))
        y1 = jnp.maximum(acc + b1_ref[...], 0.0) * m1_ref[0]

        # ---- residual path (downsample conv1x1 + bn + mask3, or identity) ----
        rb, cb = res_tap
        xr = x_ref[0, rb:rb + Ho, cb:cb + Wo, :]
        if has_ds:
            xd = xr.reshape(M, Cin)
            resid = (jnp.dot(xd, wd_ref[...], preferred_element_type=jnp.float32)
                     + bd_ref[...]) * m3_ref[0]
        else:
            resid = xr.reshape(M, Cin).astype(jnp.float32)

        # ---- stage conv1 output as conv2's zero-padded bf16 input (VMEM only) ----
        t_ref[...] = jnp.zeros_like(t_ref)
        t_ref[1:1 + Ho, 1:1 + Wo, :] = y1.reshape(Ho, Wo, C1).astype(t_ref.dtype)

        # ---- conv2 (BN2 scale pre-folded) + bias, * mask2, + residual, relu ----
        acc2 = None
        for t, (ki, kj) in enumerate(taps2):
            patch = t_ref[ki:ki + Ho, kj:kj + Wo, :].reshape(M, C1)
            d = jnp.dot(patch, w2_ref[t], preferred_element_type=jnp.float32)
            acc2 = d if acc2 is None else acc2 + d
        y2 = jnp.maximum((acc2 + b2_ref[...]) * m2_ref[0] + resid, 0.0)
        o_ref[...] = y2.reshape(1, Ho, Wo, C1).astype(o_ref.dtype)

    return kernel


# ----------------------------------------------------------------------------
# Wrapper: layout prep (phase split for stride 2), BlockSpecs, pallas_call
# ----------------------------------------------------------------------------
def basic_block_ad_forward(fp, x_nchw, mask1, mask2, mask3=None):
    s = fp["stride"]
    x = jnp.transpose(x_nchw, (0, 2, 3, 1))                       # NCHW -> NHWC
    N, H, W, Cin = x.shape
    C1 = fp["w1"].shape[-1]
    Ho = (H + 2 - 3) // s + 1
    Wo = (W + 2 - 3) // s + 1
    has_ds = "wd" in fp
    if not has_ds:
        assert s == 1 and Cin == C1, "identity residual requires stride=1, Cin==Cout"
    else:
        assert mask3 is not None

    xpad = jnp.pad(x, ((0, 0), (1, 1), (1, 1), (0, 0))).astype(jnp.bfloat16)
    if s == 1:
        xin = xpad                                                # (N, H+2, W+2, Cin)
        taps1 = [(ki, kj) for ki in range(3) for kj in range(3)]
        res_tap = (1, 1)                                          # x[ho, wo] in padded coords
    else:
        assert s == 2 and H % 2 == 0 and W % 2 == 0
        # Phase split (space-to-depth of the padded image, ~1x traffic) so every
        # stride-2 tap becomes a contiguous in-kernel slice.
        phases = [xpad[:, a::2, b::2, :] for a in (0, 1) for b in (0, 1)]
        Hh = Ho + 1                                               # each phase: (Ho+1, Wo+1)
        xin = jnp.concatenate(phases, axis=1)                     # (N, 4*(Ho+1), Wo+1, Cin)
        taps1 = [((2 * (ki % 2) + (kj % 2)) * Hh + ki // 2, kj // 2)
                 for ki in range(3) for kj in range(3)]
        res_tap = (3 * Hh, 0)                                     # phase (odd,odd) = x[2ho, 2wo]
    taps2 = [(ki, kj) for ki in range(3) for kj in range(3)]
    Hin, Win = int(xin.shape[1]), int(xin.shape[2])

    m1 = mask1.reshape(N, C1)[:, None, :].astype(jnp.float32)     # (N, 1, C1)
    m2 = mask2.reshape(N, C1)[:, None, :].astype(jnp.float32)

    in_specs = [
        pl.BlockSpec((1, Hin, Win, Cin), lambda n: (n, 0, 0, 0)),   # one image per step
        pl.BlockSpec((9, Cin, C1), lambda n: (0, 0, 0)),            # resident folded conv1 slab
        pl.BlockSpec((1, C1), lambda n: (0, 0)),
        pl.BlockSpec((9, C1, C1), lambda n: (0, 0, 0)),             # resident folded conv2 slab
        pl.BlockSpec((1, C1), lambda n: (0, 0)),
        pl.BlockSpec((1, 1, C1), lambda n: (n, 0, 0)),              # per-image, per-channel masks
        pl.BlockSpec((1, 1, C1), lambda n: (n, 0, 0)),
    ]
    args = [xin, fp["w1"], fp["b1"], fp["w2"], fp["b2"], m1, m2]
    if has_ds:
        m3 = mask3.reshape(N, C1)[:, None, :].astype(jnp.float32)
        in_specs += [pl.BlockSpec((Cin, C1), lambda n: (0, 0)),
                     pl.BlockSpec((1, C1), lambda n: (0, 0)),
                     pl.BlockSpec((1, 1, C1), lambda n: (n, 0, 0))]
        args += [fp["wd"], fp["bd"], m3]

    # VMEM budget: double-buffered in/out blocks + scratch + compiler headroom, <=48 MiB.
    bf, f4 = 2, 4
    block_bytes = (Hin * Win * Cin * bf
                   + 9 * Cin * C1 * bf + 9 * C1 * C1 * bf
                   + 4 * C1 * f4
                   + Ho * Wo * C1 * f4)
    if has_ds:
        block_bytes += Cin * C1 * bf + 2 * C1 * f4
    scratch_bytes = (Ho + 2) * (Wo + 2) * C1 * bf
    vmem_limit = int(min(max(2 * block_bytes + scratch_bytes + (4 << 20), 16 << 20),
                         48 << 20))

    kernel = _make_block_kernel(taps1, taps2, res_tap, Ho, Wo, Cin, C1, has_ds)
    out = pl.pallas_call(
        kernel,
        out_shape=jax.ShapeDtypeStruct((N, Ho, Wo, C1), jnp.float32),
        grid_spec=pltpu.PrefetchScalarGridSpec(
            num_scalar_prefetch=0,
            grid=(N,),
            in_specs=in_specs,
            out_specs=pl.BlockSpec((1, Ho, Wo, C1), lambda n: (n, 0, 0, 0)),
            scratch_shapes=[pltpu.VMEM((Ho + 2, Wo + 2, C1), jnp.bfloat16)],
        ),
        compiler_params=pltpu.CompilerParams(
            dimension_semantics=("parallel",),
            vmem_limit_bytes=vmem_limit),
    )(*args)
    return jnp.transpose(out, (0, 3, 1, 2))                       # NHWC -> NCHW


# ----------------------------------------------------------------------------
# Parameter init (PyTorch-style kaiming conv init) and inference-mode BN folding
# ----------------------------------------------------------------------------
def _conv_init(key, kh, kw, cin, cout):
    n = kh * kw * cout
    return jax.random.normal(key, (kh, kw, cin, cout), jnp.float32) * math.sqrt(2.0 / n)


def _bn_fold(key, c):
    kg, kb, km, kv = jax.random.split(key, 4)
    gamma = 1.0 + 0.1 * jax.random.normal(kg, (c,), jnp.float32)
    beta = 0.1 * jax.random.normal(kb, (c,), jnp.float32)
    mean = 0.1 * jax.random.normal(km, (c,), jnp.float32)
    var = jnp.abs(1.0 + 0.1 * jax.random.normal(kv, (c,), jnp.float32))
    scale = gamma / jnp.sqrt(var + BN_EPS)
    bias = beta - mean * scale
    return scale, bias


def init_basic_block_params(key, inplanes, planes, stride=1):
    keys = jax.random.split(key, 6)
    p = {"stride": stride}
    p["conv1_w"] = _conv_init(keys[0], 3, 3, inplanes, planes)
    p["bn1_s"], p["bn1_b"] = _bn_fold(keys[1], planes)
    p["conv2_w"] = _conv_init(keys[2], 3, 3, planes, planes)
    p["bn2_s"], p["bn2_b"] = _bn_fold(keys[3], planes)
    if stride != 1 or inplanes != planes:
        p["ds_w"] = _conv_init(keys[4], 1, 1, inplanes, planes)
        p["ds_s"], p["ds_b"] = _bn_fold(keys[5], planes)
    return p


def fold_block_params(params):
    """Fold the BN scale into the conv weight columns (bf16) -> epilogue is +bias only."""
    w1 = params["conv1_w"].astype(jnp.float32)
    kh, kw, cin, c1 = w1.shape
    fp = {"stride": params["stride"]}
    fp["w1"] = (w1 * params["bn1_s"]).reshape(kh * kw, cin, c1).astype(jnp.bfloat16)
    fp["b1"] = params["bn1_b"].reshape(1, c1).astype(jnp.float32)
    w2 = params["conv2_w"].astype(jnp.float32)
    fp["w2"] = (w2 * params["bn2_s"]).reshape(9, c1, c1).astype(jnp.bfloat16)
    fp["b2"] = params["bn2_b"].reshape(1, c1).astype(jnp.float32)
    if "ds_w" in params:
        wd = params["ds_w"].astype(jnp.float32)
        fp["wd"] = (wd * params["ds_s"]).reshape(cin, c1).astype(jnp.bfloat16)
        fp["bd"] = params["ds_b"].reshape(1, c1).astype(jnp.float32)
    return fp


# ----------------------------------------------------------------------------
# Pure-XLA reference (same folded bf16 weights / bf16 rounding points)
# ----------------------------------------------------------------------------
def reference_forward(fp, x_nchw, mask1, mask2, mask3=None):
    s = fp["stride"]
    x = jnp.transpose(x_nchw, (0, 2, 3, 1)).astype(jnp.bfloat16).astype(jnp.float32)
    N, H, W, Cin = x.shape
    C1 = fp["w1"].shape[-1]

    def conv(inp, w, stride, pad):
        return lax.conv_general_dilated(
            inp, w.astype(jnp.float32), window_strides=(stride, stride),
            padding=((pad, pad), (pad, pad)),
            dimension_numbers=("NHWC", "HWIO", "NHWC"),
            precision=lax.Precision.HIGHEST)

    m1 = mask1.reshape(N, C1)[:, None, None, :].astype(jnp.float32)
    m2 = mask2.reshape(N, C1)[:, None, None, :].astype(jnp.float32)

    out = conv(x, fp["w1"].reshape(3, 3, Cin, C1), s, 1) + fp["b1"].reshape(1, 1, 1, C1)
    out = jnp.maximum(out, 0.0) * m1
    out = out.astype(jnp.bfloat16).astype(jnp.float32)             # mirror bf16 staging

    if "wd" in fp:
        m3 = mask3.reshape(N, C1)[:, None, None, :].astype(jnp.float32)
        res = conv(x, fp["wd"].reshape(1, 1, Cin, C1), s, 0) + fp["bd"].reshape(1, 1, 1, C1)
        res = res * m3
    else:
        res = x

    y = conv(out, fp["w2"].reshape(3, 3, C1, C1), 1, 1) + fp["b2"].reshape(1, 1, 1, C1)
    y = jnp.maximum(y * m2 + res, 0.0)
    return jnp.transpose(y, (0, 3, 1, 2))


# ----------------------------------------------------------------------------
if __name__ == "__main__":
    key = jax.random.PRNGKey(0)
    kp, kx, k1, k2, k3 = jax.random.split(key, 5)

    # ResNet-like shapes implied by the block: 64 -> 128 channels, stride 2,
    # 16x16 input -> 8x8 output, downsample path active.
    N, inplanes, planes, H, W, stride = 2, 64, 128, 16, 16, 2
    params = init_basic_block_params(kp, inplanes, planes, stride=stride)
    fp = fold_block_params(params)

    x = jax.random.normal(kx, (N, inplanes, H, W), jnp.float32)
    Ho = (H + 2 - 3) // stride + 1
    Wo = (W + 2 - 3) // stride + 1

    # TODO(synk): AD_Block masks modeled as external per-channel sigmoid inputs.
    mask1 = jax.nn.sigmoid(jax.random.normal(k1, (N, planes, 1, 1), jnp.float32))
    mask2 = jax.nn.sigmoid(jax.random.normal(k2, (N, planes, 1, 1), jnp.float32))
    mask3 = jax.nn.sigmoid(jax.random.normal(k3, (N, planes, 1, 1), jnp.float32))

    fwd = jax.jit(lambda xx, a, b, c: basic_block_ad_forward(fp, xx, a, b, c))
    out = fwd(x, mask1, mask2, mask3)
    jax.block_until_ready(out)

    assert out.shape == (N, planes, Ho, Wo), out.shape
    assert bool(jnp.all(jnp.isfinite(out))), "non-finite output"

    ref = reference_forward(fp, x, mask1, mask2, mask3)
    err = float(jnp.max(jnp.abs(out - ref)))
    assert err < 2e-2, f"max abs error vs reference: {err}"

    print("KERNEL_OK")
</pallas_src>

<mosaic_0001>
module attributes {stable_mosaic.version = 11 : i64} {
  func.func @kernel(%arg0: i32, %arg1: memref<1x36x9x64xbf16, #tpu.memory_space<vmem>>, %arg2: memref<9x64x128xbf16, #tpu.memory_space<vmem>>, %arg3: memref<1x128xf32, #tpu.memory_space<vmem>>, %arg4: memref<9x128x128xbf16, #tpu.memory_space<vmem>>, %arg5: memref<1x128xf32, #tpu.memory_space<vmem>>, %arg6: memref<1x1x128xf32, #tpu.memory_space<vmem>>, %arg7: memref<1x1x128xf32, #tpu.memory_space<vmem>>, %arg8: memref<64x128xbf16, #tpu.memory_space<vmem>>, %arg9: memref<1x128xf32, #tpu.memory_space<vmem>>, %arg10: memref<1x1x128xf32, #tpu.memory_space<vmem>>, %arg11: memref<1x8x8x128xf32, #tpu.memory_space<vmem>>, %arg12: memref<10x10x128xbf16, #tpu.memory_space<vmem>>) attributes {dimension_semantics = [#tpu.dimension_semantics<parallel>], iteration_bounds = array<i64: 2>, scalar_prefetch = 0 : i64, scratch_operands = 1 : i64, tpu.core_type = #tpu.core_type<tc>, window_params = [{transform_indices = @transform_0, window_bounds = array<i64: 1, 36, 9, 64>}, {pipeline_mode = #tpu.pipeline_mode<synchronous>, transform_indices = @transform_1, window_bounds = array<i64: 9, 64, 128>}, {pipeline_mode = #tpu.pipeline_mode<synchronous>, transform_indices = @transform_2, window_bounds = array<i64: 1, 128>}, {pipeline_mode = #tpu.pipeline_mode<synchronous>, transform_indices = @transform_3, window_bounds = array<i64: 9, 128, 128>}, {pipeline_mode = #tpu.pipeline_mode<synchronous>, transform_indices = @transform_4, window_bounds = array<i64: 1, 128>}, {transform_indices = @transform_5, window_bounds = array<i64: 1, 1, 128>}, {transform_indices = @transform_6, window_bounds = array<i64: 1, 1, 128>}, {pipeline_mode = #tpu.pipeline_mode<synchronous>, transform_indices = @transform_7, window_bounds = array<i64: 64, 128>}, {pipeline_mode = #tpu.pipeline_mode<synchronous>, transform_indices = @transform_8, window_bounds = array<i64: 1, 128>}, {transform_indices = @transform_9, window_bounds = array<i64: 1, 1, 128>}, {transform_indices = @transform_10, window_bounds = array<i64: 1, 8, 8, 128>}]} {
    %c0 = arith.constant 0 : index
    %c0_0 = arith.constant 0 : index
    %c0_1 = arith.constant 0 : index
    %c0_2 = arith.constant 0 : index
    %0 = vector.load %arg1[%c0, %c0_0, %c0_1, %c0_2] : memref<1x36x9x64xbf16, #tpu.memory_space<vmem>>, vector<1x8x8x64xbf16>
    %1 = vector.shape_cast %0 : vector<1x8x8x64xbf16> to vector<8x8x64xbf16>
    %2 = vector.shape_cast %1 : vector<8x8x64xbf16> to vector<64x64xbf16>
    %c0_3 = arith.constant 0 : index
    %c0_4 = arith.constant 0 : index
    %c0_5 = arith.constant 0 : index
    %3 = vector.load %arg2[%c0_3, %c0_4, %c0_5] : memref<9x64x128xbf16, #tpu.memory_space<vmem>>, vector<1x64x128xbf16>
    %4 = vector.shape_cast %3 : vector<1x64x128xbf16> to vector<64x128xbf16>
    %cst = arith.constant dense<0.000000e+00> : vector<64x128xf32>
    %5 = tpu.matmul %2, %4, %cst {dimension_numbers = #tpu.dot_dimension_numbers<[1], [0], [0], [1], [0, 0, 1, 1], [], []>} : vector<64x64xbf16>, vector<64x128xbf16>, vector<64x128xf32> -> vector<64x128xf32>
    %c0_6 = arith.constant 0 : index
    %c9 = arith.constant 9 : index
    %c0_7 = arith.constant 0 : index
    %c0_8 = arith.constant 0 : index
    %6 = vector.load %arg1[%c0_6, %c9, %c0_7, %c0_8] : memref<1x36x9x64xbf16, #tpu.memory_space<vmem>>, vector<1x8x8x64xbf16>
    %7 = vector.shape_cast %6 : vector<1x8x8x64xbf16> to vector<8x8x64xbf16>
    %8 = vector.shape_cast %7 : vector<8x8x64xbf16> to vector<64x64xbf16>
    %c1 = arith.constant 1 : index
    %c0_9 = arith.constant 0 : index
    %c0_10 = arith.constant 0 : index
    %9 = vector.load %arg2[%c1, %c0_9, %c0_10] : memref<9x64x128xbf16, #tpu.memory_space<vmem>>, vector<1x64x128xbf16>
    %10 = vector.shape_cast %9 : vector<1x64x128xbf16> to vector<64x128xbf16>
    %cst_11 = arith.constant dense<0.000000e+00> : vector<64x128xf32>
    %11 = tpu.matmul %8, %10, %cst_11 {dimension_numbers = #tpu.dot_dimension_numbers<[1], [0], [0], [1], [0, 0, 1, 1], [], []>} : vector<64x64xbf16>, vector<64x128xbf16>, vector<64x128xf32> -> vector<64x128xf32>
    %12 = arith.addf %5, %11 : vector<64x128xf32>
    %c0_12 = arith.constant 0 : index
    %c0_13 = arith.constant 0 : index
    %c1_14 = arith.constant 1 : index
    %c0_15 = arith.constant 0 : index
    %13 = vector.load %arg1[%c0_12, %c0_13, %c1_14, %c0_15] : memref<1x36x9x64xbf16, #tpu.memory_space<vmem>>, vector<1x8x8x64xbf16>
    %14 = vector.shape_cast %13 : vector<1x8x8x64xbf16> to vector<8x8x64xbf16>
    %15 = vector.shape_cast %14 : vector<8x8x64xbf16> to vector<64x64xbf16>
    %c2 = arith.constant 2 : index
    %c0_16 = arith.constant 0 : index
    %c0_17 = arith.constant 0 : index
    %16 = vector.load %arg2[%c2, %c0_16, %c0_17] : memref<9x64x128xbf16, #tpu.memory_space<vmem>>, vector<1x64x128xbf16>
    %17 = vector.shape_cast %16 : vector<1x64x128xbf16> to vector<64x128xbf16>
    %cst_18 = arith.constant dense<0.000000e+00> : vector<64x128xf32>
    %18 = tpu.matmul %15, %17, %cst_18 {dimension_numbers = #tpu.dot_dimension_numbers<[1], [0], [0], [1], [0, 0, 1, 1], [], []>} : vector<64x64xbf16>, vector<64x128xbf16>, vector<64x128xf32> -> vector<64x128xf32>
    %19 = arith.addf %12, %18 : vector<64x128xf32>
    %c0_19 = arith.constant 0 : index
    %c18 = arith.constant 18 : index
    %c0_20 = arith.constant 0 : index
    %c0_21 = arith.constant 0 : index
    %20 = vector.load %arg1[%c0_19, %c18, %c0_20, %c0_21] : memref<1x36x9x64xbf16, #tpu.memory_space<vmem>>, vector<1x8x8x64xbf16>
    %21 = vector.shape_cast %20 : vector<1x8x8x64xbf16> to vector<8x8x64xbf16>
    %22 = vector.shape_cast %21 : vector<8x8x64xbf16> to vector<64x64xbf16>
    %c3 = arith.constant 3 : index
    %c0_22 = arith.constant 0 : index
    %c0_23 = arith.constant 0 : index
    %23 = vector.load %arg2[%c3, %c0_22, %c0_23] : memref<9x64x128xbf16, #tpu.memory_space<vmem>>, vector<1x64x128xbf16>
    %24 = vector.shape_cast %23 : vector<1x64x128xbf16> to vector<64x128xbf16>
    %cst_24 = arith.constant dense<0.000000e+00> : vector<64x128xf32>
    %25 = tpu.matmul %22, %24, %cst_24 {dimension_numbers = #tpu.dot_dimension_numbers<[1], [0], [0], [1], [0, 0, 1, 1], [], []>} : vector<64x64xbf16>, vector<64x128xbf16>, vector<64x128xf32> -> vector<64x128xf32>
    %26 = arith.addf %19, %25 : vector<64x128xf32>
    %c0_25 = arith.constant 0 : index
    %c27 = arith.constant 27 : index
    %c0_26 = arith.constant 0 : index
    %c0_27 = arith.constant 0 : index
    %27 = vector.load %arg1[%c0_25, %c27, %c0_26, %c0_27] : memref<1x36x9x64xbf16, #tpu.memory_space<vmem>>, vector<1x8x8x64xbf16>
    %28 = vector.shape_cast %27 : vector<1x8x8x64xbf16> to vector<8x8x64xbf16>
    %29 = vector.shape_cast %28 : vector<8x8x64xbf16> to vector<64x64xbf16>
    %c4 = arith.constant 4 : index
    %c0_28 = arith.constant 0 : index
    %c0_29 = arith.constant 0 : index
    %30 = vector.load %arg2[%c4, %c0_28, %c0_29] : memref<9x64x128xbf16, #tpu.memory_space<vmem>>, vector<1x64x128xbf16>
    %31 = vector.shape_cast %30 : vector<1x64x128xbf16> to vector<64x128xbf16>
    %cst_30 = arith.constant dense<0.000000e+00> : vector<64x128xf32>
    %32 = tpu.matmul %29, %31, %cst_30 {dimension_numbers = #tpu.dot_dimension_numbers<[1], [0], [0], [1], [0, 0, 1, 1], [], []>} : vector<64x64xbf16>, vector<64x128xbf16>, vector<64x128xf32> -> vector<64x128xf32>
    %33 = arith.addf %26, %32 : vector<64x128xf32>
    %c0_31 = arith.constant 0 : index
    %c18_32 = arith.constant 18 : index
    %c1_33 = arith.constant 1 : index
    %c0_34 = arith.constant 0 : index
    %34 = vector.load %arg1[%c0_31, %c18_32, %c1_33, %c0_34] : memref<1x36x9x64xbf16, #tpu.memory_space<vmem>>, vector<1x8x8x64xbf16>
    %35 = vector.shape_cast %34 : vector<1x8x8x64xbf16> to vector<8x8x64xbf16>
    %36 = vector.shape_cast %35 : vector<8x8x64xbf16> to vector<64x64xbf16>
    %c5 = arith.constant 5 : index
    %c0_35 = arith.constant 0 : index
    %c0_36 = arith.constant 0 : index
    %37 = vector.load %arg2[%c5, %c0_35, %c0_36] : memref<9x64x128xbf16, #tpu.memory_space<vmem>>, vector<1x64x128xbf16>
    %38 = vector.shape_cast %37 : vector<1x64x128xbf16> to vector<64x128xbf16>
    %cst_37 = arith.constant dense<0.000000e+00> : vector<64x128xf32>
    %39 = tpu.matmul %36, %38, %cst_37 {dimension_numbers = #tpu.dot_dimension_numbers<[1], [0], [0], [1], [0, 0, 1, 1], [], []>} : vector<64x64xbf16>, vector<64x128xbf16>, vector<64x128xf32> -> vector<64x128xf32>
    %40 = arith.addf %33, %39 : vector<64x128xf32>
    %c0_38 = arith.constant 0 : index
    %c1_39 = arith.constant 1 : index
    %c0_40 = arith.constant 0 : index
    %c0_41 = arith.constant 0 : index
    %41 = vector.load %arg1[%c0_38, %c1_39, %c0_40, %c0_41] : memref<1x36x9x64xbf16, #tpu.memory_space<vmem>>, vector<1x8x8x64xbf16>
    %42 = vector.shape_cast %41 : vector<1x8x8x64xbf16> to vector<8x8x64xbf16>
    %43 = vector.shape_cast %42 : vector<8x8x64xbf16> to vector<64x64xbf16>
    %c6 = arith.constant 6 : index
    %c0_42 = arith.constant 0 : index
    %c0_43 = arith.constant 0 : index
    %44 = vector.load %arg2[%c6, %c0_42, %c0_43] : memref<9x64x128xbf16, #tpu.memory_space<vmem>>, vector<1x64x128xbf16>
    %45 = vector.shape_cast %44 : vector<1x64x128xbf16> to vector<64x128xbf16>
    %cst_44 = arith.constant dense<0.000000e+00> : vector<64x128xf32>
    %46 = tpu.matmul %43, %45, %cst_44 {dimension_numbers = #tpu.dot_dimension_numbers<[1], [0], [0], [1], [0, 0, 1, 1], [], []>} : vector<64x64xbf16>, vector<64x128xbf16>, vector<64x128xf32> -> vector<64x128xf32>
    %47 = arith.addf %40, %46 : vector<64x128xf32>
    %c0_45 = arith.constant 0 : index
    %c10 = arith.constant 10 : index
    %c0_46 = arith.constant 0 : index
    %c0_47 = arith.constant 0 : index
    %48 = vector.load %arg1[%c0_45, %c10, %c0_46, %c0_47] : memref<1x36x9x64xbf16, #tpu.memory_space<vmem>>, vector<1x8x8x64xbf16>
    %49 = vector.shape_cast %48 : vector<1x8x8x64xbf16> to vector<8x8x64xbf16>
    %50 = vector.shape_cast %49 : vector<8x8x64xbf16> to vector<64x64xbf16>
    %c7 = arith.constant 7 : index
    %c0_48 = arith.constant 0 : index
    %c0_49 = arith.constant 0 : index
    %51 = vector.load %arg2[%c7, %c0_48, %c0_49] : memref<9x64x128xbf16, #tpu.memory_space<vmem>>, vector<1x64x128xbf16>
    %52 = vector.shape_cast %51 : vector<1x64x128xbf16> to vector<64x128xbf16>
    %cst_50 = arith.constant dense<0.000000e+00> : vector<64x128xf32>
    %53 = tpu.matmul %50, %52, %cst_50 {dimension_numbers = #tpu.dot_dimension_numbers<[1], [0], [0], [1], [0, 0, 1, 1], [], []>} : vector<64x64xbf16>, vector<64x128xbf16>, vector<64x128xf32> -> vector<64x128xf32>
    %54 = arith.addf %47, %53 : vector<64x128xf32>
    %c0_51 = arith.constant 0 : index
    %c1_52 = arith.constant 1 : index
    %c1_53 = arith.constant 1 : index
    %c0_54 = arith.constant 0 : index
    %55 = vector.load %arg1[%c0_51, %c1_52, %c1_53, %c0_54] : memref<1x36x9x64xbf16, #tpu.memory_space<vmem>>, vector<1x8x8x64xbf16>
    %56 = vector.shape_cast %55 : vector<1x8x8x64xbf16> to vector<8x8x64xbf16>
    %57 = vector.shape_cast %56 : vector<8x8x64xbf16> to vector<64x64xbf16>
    %c8 = arith.constant 8 : index
    %c0_55 = arith.constant 0 : index
    %c0_56 = arith.constant 0 : index
    %58 = vector.load %arg2[%c8, %c0_55, %c0_56] : memref<9x64x128xbf16, #tpu.memory_space<vmem>>, vector<1x64x128xbf16>
    %59 = vector.shape_cast %58 : vector<1x64x128xbf16> to vector<64x128xbf16>
    %cst_57 = arith.constant dense<0.000000e+00> : vector<64x128xf32>
    %60 = tpu.matmul %57, %59, %cst_57 {dimension_numbers = #tpu.dot_dimension_numbers<[1], [0], [0], [1], [0, 0, 1, 1], [], []>} : vector<64x64xbf16>, vector<64x128xbf16>, vector<64x128xf32> -> vector<64x128xf32>
    %61 = arith.addf %54, %60 : vector<64x128xf32>
    %c0_58 = arith.constant 0 : index
    %c0_59 = arith.constant 0 : index
    %62 = vector.load %arg3[%c0_58, %c0_59] : memref<1x128xf32, #tpu.memory_space<vmem>>, vector<1x128xf32>
    %63 = vector.broadcast %62 : vector<1x128xf32> to vector<64x128xf32>
    %64 = arith.addf %61, %63 : vector<64x128xf32>
    %cst_60 = arith.constant 0.000000e+00 : f32
    %65 = vector.broadcast %cst_60 : f32 to vector<64x128xf32>
    %66 = arith.maximumf %64, %65 : vector<64x128xf32>
    %c0_61 = arith.constant 0 : index
    %c0_62 = arith.constant 0 : index
    %c0_63 = arith.constant 0 : index
    %67 = vector.load %arg6[%c0_61, %c0_62, %c0_63] : memref<1x1x128xf32, #tpu.memory_space<vmem>>, vector<1x1x128xf32>
    %68 = vector.shape_cast %67 : vector<1x1x128xf32> to vector<1x128xf32>
    %69 = vector.broadcast %68 : vector<1x128xf32> to vector<64x128xf32>
    %70 = arith.mulf %66, %69 : vector<64x128xf32>
    %c0_64 = arith.constant 0 : index
    %c27_65 = arith.constant 27 : index
    %c0_66 = arith.constant 0 : index
    %c0_67 = arith.constant 0 : index
    %71 = vector.load %arg1[%c0_64, %c27_65, %c0_66, %c0_67] : memref<1x36x9x64xbf16, #tpu.memory_space<vmem>>, vector<1x8x8x64xbf16>
    %72 = vector.shape_cast %71 : vector<1x8x8x64xbf16> to vector<8x8x64xbf16>
    %73 = vector.shape_cast %72 : vector<8x8x64xbf16> to vector<64x64xbf16>
    %c0_68 = arith.constant 0 : index
    %c0_69 = arith.constant 0 : index
    %74 = vector.load %arg8[%c0_68, %c0_69] : memref<64x128xbf16, #tpu.memory_space<vmem>>, vector<64x128xbf16>
    %cst_70 = arith.constant dense<0.000000e+00> : vector<64x128xf32>
    %75 = tpu.matmul %73, %74, %cst_70 {dimension_numbers = #tpu.dot_dimension_numbers<[1], [0], [0], [1], [0, 0, 1, 1], [], []>} : vector<64x64xbf16>, vector<64x128xbf16>, vector<64x128xf32> -> vector<64x128xf32>
    %c0_71 = arith.constant 0 : index
    %c0_72 = arith.constant 0 : index
    %76 = vector.load %arg9[%c0_71, %c0_72] : memref<1x128xf32, #tpu.memory_space<vmem>>, vector<1x128xf32>
    %77 = vector.broadcast %76 : vector<1x128xf32> to vector<64x128xf32>
    %78 = arith.addf %75, %77 : vector<64x128xf32>
    %c0_73 = arith.constant 0 : index
    %c0_74 = arith.constant 0 : index
    %c0_75 = arith.constant 0 : index
    %79 = vector.load %arg10[%c0_73, %c0_74, %c0_75] : memref<1x1x128xf32, #tpu.memory_space<vmem>>, vector<1x1x128xf32>
    %80 = vector.shape_cast %79 : vector<1x1x128xf32> to vector<1x128xf32>
    %81 = vector.broadcast %80 : vector<1x128xf32> to vector<64x128xf32>
    %82 = arith.mulf %78, %81 : vector<64x128xf32>
    %cst_76 = arith.constant 0.000000e+00 : bf16
    %83 = vector.broadcast %cst_76 : bf16 to vector<10x10x128xbf16>
    %c0_77 = arith.constant 0 : index
    %c0_78 = arith.constant 0 : index
    %c0_79 = arith.constant 0 : index
    %84 = vector.load %arg12[%c0_77, %c0_78, %c0_79] : memref<10x10x128xbf16, #tpu.memory_space<vmem>>, vector<10x10x128xbf16>
    tpu.vector_store %arg12[%c0_77, %c0_78, %c0_79], %83 {strides = array<i32>} : memref<10x10x128xbf16, #tpu.memory_space<vmem>>, vector<10x10x128xbf16>,
    %85 = vector.shape_cast %70 : vector<64x128xf32> to vector<8x8x128xf32>
    %86 = arith.truncf %85 : vector<8x8x128xf32> to vector<8x8x128xbf16>
    %c1_80 = arith.constant 1 : index
    %c1_81 = arith.constant 1 : index
    %c0_82 = arith.constant 0 : index
    %87 = vector.load %arg12[%c1_80, %c1_81, %c0_82] : memref<10x10x128xbf16, #tpu.memory_space<vmem>>, vector<8x8x128xbf16>
    tpu.vector_store %arg12[%c1_80, %c1_81, %c0_82], %86 {strides = array<i32>} : memref<10x10x128xbf16, #tpu.memory_space<vmem>>, vector<8x8x128xbf16>,
    %c0_83 = arith.constant 0 : index
    %c0_84 = arith.constant 0 : index
    %c0_85 = arith.constant 0 : index
    %88 = vector.load %arg12[%c0_83, %c0_84, %c0_85] : memref<10x10x128xbf16, #tpu.memory_space<vmem>>, vector<8x8x128xbf16>
    %89 = vector.shape_cast %88 : vector<8x8x128xbf16> to vector<64x128xbf16>
    %c0_86 = arith.constant 0 : index
    %c0_87 = arith.constant 0 : index
    %c0_88 = arith.constant 0 : index
    %90 = vector.load %arg4[%c0_86, %c0_87, %c0_88] : memref<9x128x128xbf16, #tpu.memory_space<vmem>>, vector<1x128x128xbf16>
    %91 = vector.shape_cast %90 : vector<1x128x128xbf16> to vector<128x128xbf16>
    %cst_89 = arith.constant dense<0.000000e+00> : vector<64x128xf32>
    %92 = tpu.matmul %89, %91, %cst_89 {dimension_numbers = #tpu.dot_dimension_numbers<[1], [0], [0], [1], [0, 0, 1, 1], [], []>} : vector<64x128xbf16>, vector<128x128xbf16>, vector<64x128xf32> -> vector<64x128xf32>
    %c0_90 = arith.constant 0 : index
    %c1_91 = arith.constant 1 : index
    %c0_92 = arith.constant 0 : index
    %93 = vector.load %arg12[%c0_90, %c1_91, %c0_92] : memref<10x10x128xbf16, #tpu.memory_space<vmem>>, vector<8x8x128xbf16>
    %94 = vector.shape_cast %93 : vector<8x8x128xbf16> to vector<64x128xbf16>
    %c1_93 = arith.constant 1 : index
    %c0_94 = arith.constant 0 : index
    %c0_95 = arith.constant 0 : index
    %95 = vector.load %arg4[%c1_93, %c0_94, %c0_95] : memref<9x128x128xbf16, #tpu.memory_space<vmem>>, vector<1x128x128xbf16>
    %96 = vector.shape_cast %95 : vector<1x128x128xbf16> to vector<128x128xbf16>
    %cst_96 = arith.constant dense<0.000000e+00> : vector<64x128xf32>
    %97 = tpu.matmul %94, %96, %cst_96 {dimension_numbers = #tpu.dot_dimension_numbers<[1], [0], [0], [1], [0, 0, 1, 1], [], []>} : vector<64x128xbf16>, vector<128x128xbf16>, vector<64x128xf32> -> vector<64x128xf32>
    %98 = arith.addf %92, %97 : vector<64x128xf32>
    %c0_97 = arith.constant 0 : index
    %c2_98 = arith.constant 2 : index
    %c0_99 = arith.constant 0 : index
    %99 = vector.load %arg12[%c0_97, %c2_98, %c0_99] : memref<10x10x128xbf16, #tpu.memory_space<vmem>>, vector<8x8x128xbf16>
    %100 = vector.shape_cast %99 : vector<8x8x128xbf16> to vector<64x128xbf16>
    %c2_100 = arith.constant 2 : index
    %c0_101 = arith.constant 0 : index
    %c0_102 = arith.constant 0 : index
    %101 = vector.load %arg4[%c2_100, %c0_101, %c0_102] : memref<9x128x128xbf16, #tpu.memory_space<vmem>>, vector<1x128x128xbf16>
    %102 = vector.shape_cast %101 : vector<1x128x128xbf16> to vector<128x128xbf16>
    %cst_103 = arith.constant dense<0.000000e+00> : vector<64x128xf32>
    %103 = tpu.matmul %100, %102, %cst_103 {dimension_numbers = #tpu.dot_dimension_numbers<[1], [0], [0], [1], [0, 0, 1, 1], [], []>} : vector<64x128xbf16>, vector<128x128xbf16>, vector<64x128xf32> -> vector<64x128xf32>
    %104 = arith.addf %98, %103 : vector<64x128xf32>
    %c1_104 = arith.constant 1 : index
    %c0_105 = arith.constant 0 : index
    %c0_106 = arith.constant 0 : index
    %105 = vector.load %arg12[%c1_104, %c0_105, %c0_106] : memref<10x10x128xbf16, #tpu.memory_space<vmem>>, vector<8x8x128xbf16>
    %106 = vector.shape_cast %105 : vector<8x8x128xbf16> to vector<64x128xbf16>
    %c3_107 = arith.constant 3 : index
    %c0_108 = arith.constant 0 : index
    %c0_109 = arith.constant 0 : index
    %107 = vector.load %arg4[%c3_107, %c0_108, %c0_109] : memref<9x128x128xbf16, #tpu.memory_space<vmem>>, vector<1x128x128xbf16>
    %108 = vector.shape_cast %107 : vector<1x128x128xbf16> to vector<128x128xbf16>
    %cst_110 = arith.constant dense<0.000000e+00> : vector<64x128xf32>
    %109 = tpu.matmul %106, %108, %cst_110 {dimension_numbers = #tpu.dot_dimension_numbers<[1], [0], [0], [1], [0, 0, 1, 1], [], []>} : vector<64x128xbf16>, vector<128x128xbf16>, vector<64x128xf32> -> vector<64x128xf32>
    %110 = arith.addf %104, %109 : vector<64x128xf32>
    %c1_111 = arith.constant 1 : index
    %c1_112 = arith.constant 1 : index
    %c0_113 = arith.constant 0 : index
    %111 = vector.load %arg12[%c1_111, %c1_112, %c0_113] : memref<10x10x128xbf16, #tpu.memory_space<vmem>>, vector<8x8x128xbf16>
    %112 = vector.shape_cast %111 : vector<8x8x128xbf16> to vector<64x128xbf16>
    %c4_114 = arith.constant 4 : index
    %c0_115 = arith.constant 0 : index
    %c0_116 = arith.constant 0 : index
    %113 = vector.load %arg4[%c4_114, %c0_115, %c0_116] : memref<9x128x128xbf16, #tpu.memory_space<vmem>>, vector<1x128x128xbf16>
    %114 = vector.shape_cast %113 : vector<1x128x128xbf16> to vector<128x128xbf16>
    %cst_117 = arith.constant dense<0.000000e+00> : vector<64x128xf32>
    %115 = tpu.matmul %112, %114, %cst_117 {dimension_numbers = #tpu.dot_dimension_numbers<[1], [0], [0], [1], [0, 0, 1, 1], [], []>} : vector<64x128xbf16>, vector<128x128xbf16>, vector<64x128xf32> -> vector<64x128xf32>
    %116 = arith.addf %110, %115 : vector<64x128xf32>
    %c1_118 = arith.constant 1 : index
    %c2_119 = arith.constant 2 : index
    %c0_120 = arith.constant 0 : index
    %117 = vector.load %arg12[%c1_118, %c2_119, %c0_120] : memref<10x10x128xbf16, #tpu.memory_space<vmem>>, vector<8x8x128xbf16>
    %118 = vector.shape_cast %117 : vector<8x8x128xbf16> to vector<64x128xbf16>
    %c5_121 = arith.constant 5 : index
    %c0_122 = arith.constant 0 : index
    %c0_123 = arith.constant 0 : index
    %119 = vector.load %arg4[%c5_121, %c0_122, %c0_123] : memref<9x128x128xbf16, #tpu.memory_space<vmem>>, vector<1x128x128xbf16>
    %120 = vector.shape_cast %119 : vector<1x128x128xbf16> to vector<128x128xbf16>
    %cst_124 = arith.constant dense<0.000000e+00> : vector<64x128xf32>
    %121 = tpu.matmul %118, %120, %cst_124 {dimension_numbers = #tpu.dot_dimension_numbers<[1], [0], [0], [1], [0, 0, 1, 1], [], []>} : vector<64x128xbf16>, vector<128x128xbf16>, vector<64x128xf32> -> vector<64x128xf32>
    %122 = arith.addf %116, %121 : vector<64x128xf32>
    %c2_125 = arith.constant 2 : index
    %c0_126 = arith.constant 0 : index
    %c0_127 = arith.constant 0 : index
    %123 = vector.load %arg12[%c2_125, %c0_126, %c0_127] : memref<10x10x128xbf16, #tpu.memory_space<vmem>>, vector<8x8x128xbf16>
    %124 = vector.shape_cast %123 : vector<8x8x128xbf16> to vector<64x128xbf16>
    %c6_128 = arith.constant 6 : index
    %c0_129 = arith.constant 0 : index
    %c0_130 = arith.constant 0 : index
    %125 = vector.load %arg4[%c6_128, %c0_129, %c0_130] : memref<9x128x128xbf16, #tpu.memory_space<vmem>>, vector<1x128x128xbf16>
    %126 = vector.shape_cast %125 : vector<1x128x128xbf16> to vector<128x128xbf16>
    %cst_131 = arith.constant dense<0.000000e+00> : vector<64x128xf32>
    %127 = tpu.matmul %124, %126, %cst_131 {dimension_numbers = #tpu.dot_dimension_numbers<[1], [0], [0], [1], [0, 0, 1, 1], [], []>} : vector<64x128xbf16>, vector<128x128xbf16>, vector<64x128xf32> -> vector<64x128xf32>
    %128 = arith.addf %122, %127 : vector<64x128xf32>
    %c2_132 = arith.constant 2 : index
    %c1_133 = arith.constant 1 : index
    %c0_134 = arith.constant 0 : index
    %129 = vector.load %arg12[%c2_132, %c1_133, %c0_134] : memref<10x10x128xbf16, #tpu.memory_space<vmem>>, vector<8x8x128xbf16>
    %130 = vector.shape_cast %129 : vector<8x8x128xbf16> to vector<64x128xbf16>
    %c7_135 = arith.constant 7 : index
    %c0_136 = arith.constant 0 : index
    %c0_137 = arith.constant 0 : index
    %131 = vector.load %arg4[%c7_135, %c0_136, %c0_137] : memref<9x128x128xbf16, #tpu.memory_space<vmem>>, vector<1x128x128xbf16>
    %132 = vector.shape_cast %131 : vector<1x128x128xbf16> to vector<128x128xbf16>
    %cst_138 = arith.constant dense<0.000000e+00> : vector<64x128xf32>
    %133 = tpu.matmul %130, %132, %cst_138 {dimension_numbers = #tpu.dot_dimension_numbers<[1], [0], [0], [1], [0, 0, 1, 1], [], []>} : vector<64x128xbf16>, vector<128x128xbf16>, vector<64x128xf32> -> vector<64x128xf32>
    %134 = arith.addf %128, %133 : vector<64x128xf32>
    %c2_139 = arith.constant 2 : index
    %c2_140 = arith.constant 2 : index
    %c0_141 = arith.constant 0 : index
    %135 = vector.load %arg12[%c2_139, %c2_140, %c0_141] : memref<10x10x128xbf16, #tpu.memory_space<vmem>>, vector<8x8x128xbf16>
    %136 = vector.shape_cast %135 : vector<8x8x128xbf16> to vector<64x128xbf16>
    %c8_142 = arith.constant 8 : index
    %c0_143 = arith.constant 0 : index
    %c0_144 = arith.constant 0 : index
    %137 = vector.load %arg4[%c8_142, %c0_143, %c0_144] : memref<9x128x128xbf16, #tpu.memory_space<vmem>>, vector<1x128x128xbf16>
    %138 = vector.shape_cast %137 : vector<1x128x128xbf16> to vector<128x128xbf16>
    %cst_145 = arith.constant dense<0.000000e+00> : vector<64x128xf32>
    %139 = tpu.matmul %136, %138, %cst_145 {dimension_numbers = #tpu.dot_dimension_numbers<[1], [0], [0], [1], [0, 0, 1, 1], [], []>} : vector<64x128xbf16>, vector<128x128xbf16>, vector<64x128xf32> -> vector<64x128xf32>
    %140 = arith.addf %134, %139 : vector<64x128xf32>
    %c0_146 = arith.constant 0 : index
    %c0_147 = arith.constant 0 : index
    %141 = vector.load %arg5[%c0_146, %c0_147] : memref<1x128xf32, #tpu.memory_space<vmem>>, vector<1x128xf32>
    %142 = vector.broadcast %141 : vector<1x128xf32> to vector<64x128xf32>
    %143 = arith.addf %140, %142 : vector<64x128xf32>
    %c0_148 = arith.constant 0 : index
    %c0_149 = arith.constant 0 : index
    %c0_150 = arith.constant 0 : index
    %144 = vector.load %arg7[%c0_148, %c0_149, %c0_150] : memref<1x1x128xf32, #tpu.memory_space<vmem>>, vector<1x1x128xf32>
    %145 = vector.shape_cast %144 : vector<1x1x128xf32> to vector<1x128xf32>
    %146 = vector.broadcast %145 : vector<1x128xf32> to vector<64x128xf32>
    %147 = arith.mulf %143, %146 : vector<64x128xf32>
    %148 = arith.addf %147, %82 : vector<64x128xf32>
    %cst_151 = arith.constant 0.000000e+00 : f32
    %149 = vector.broadcast %cst_151 : f32 to vector<64x128xf32>
    %150 = arith.maximumf %148, %149 : vector<64x128xf32>
    %151 = vector.shape_cast %150 : vector<64x128xf32> to vector<1x8x8x128xf32>
    %c0_152 = arith.constant 0 : index
    %c0_153 = arith.constant 0 : index
    %c0_154 = arith.constant 0 : index
    %c0_155 = arith.constant 0 : index
    %152 = vector.load %arg11[%c0_152, %c0_153, %c0_154, %c0_155] : memref<1x8x8x128xf32, #tpu.memory_space<vmem>>, vector<1x8x8x128xf32>
    tpu.vector_store %arg11[%c0_152, %c0_153, %c0_154, %c0_155], %151 {strides = array<i32>} : memref<1x8x8x128xf32, #tpu.memory_space<vmem>>, vector<1x8x8x128xf32>,
    return
  }
  func.func @transform_0(%arg0: i32) -> (i32, i32, i32, i32) {
    %c0_i32 = arith.constant 0 : i32
    %c0_i32_0 = arith.constant 0 : i32
    %c0_i32_1 = arith.constant 0 : i32
    %c0_i32_2 = arith.constant 0 : i32
    return %arg0, %c0_i32, %c0_i32_0, %c0_i32_1 : i32, i32, i32, i32
  }
  func.func @transform_1(%arg0: i32) -> (i32, i32, i32) {
    %c0_i32 = arith.constant 0 : i32
    %c0_i32_0 = arith.constant 0 : i32
    %c0_i32_1 = arith.constant 0 : i32
    %c0_i32_2 = arith.constant 0 : i32
    return %c0_i32, %c0_i32_0, %c0_i32_1 : i32, i32, i32
  }
  func.func @transform_2(%arg0: i32) -> (i32, i32) {
    %c0_i32 = arith.constant 0 : i32
    %c0_i32_0 = arith.constant 0 : i32
    %c0_i32_1 = arith.constant 0 : i32
    return %c0_i32, %c0_i32_0 : i32, i32
  }
  func.func @transform_3(%arg0: i32) -> (i32, i32, i32) {
    %c0_i32 = arith.constant 0 : i32
    %c0_i32_0 = arith.constant 0 : i32
    %c0_i32_1 = arith.constant 0 : i32
    %c0_i32_2 = arith.constant 0 : i32
    return %c0_i32, %c0_i32_0, %c0_i32_1 : i32, i32, i32
  }
  func.func @transform_4(%arg0: i32) -> (i32, i32) {
    %c0_i32 = arith.constant 0 : i32
    %c0_i32_0 = arith.constant 0 : i32
    %c0_i32_1 = arith.constant 0 : i32
    return %c0_i32, %c0_i32_0 : i32, i32
  }
  func.func @transform_5(%arg0: i32) -> (i32, i32, i32) {
    %c0_i32 = arith.constant 0 : i32
    %c0_i32_0 = arith.constant 0 : i32
    %c0_i32_1 = arith.constant 0 : i32
    return %arg0, %c0_i32, %c0_i32_0 : i32, i32, i32
  }
  func.func @transform_6(%arg0: i32) -> (i32, i32, i32) {
    %c0_i32 = arith.constant 0 : i32
    %c0_i32_0 = arith.constant 0 : i32
    %c0_i32_1 = arith.constant 0 : i32
    return %arg0, %c0_i32, %c0_i32_0 : i32, i32, i32
  }
  func.func @transform_7(%arg0: i32) -> (i32, i32) {
    %c0_i32 = arith.constant 0 : i32
    %c0_i32_0 = arith.constant 0 : i32
    %c0_i32_1 = arith.constant 0 : i32
    return %c0_i32, %c0_i32_0 : i32, i32
  }
  func.func @transform_8(%arg0: i32) -> (i32, i32) {
    %c0_i32 = arith.constant 0 : i32
    %c0_i32_0 = arith.constant 0 : i32
    %c0_i32_1 = arith.constant 0 : i32
    return %c0_i32, %c0_i32_0 : i32, i32
  }
  func.func @transform_9(%arg0: i32) -> (i32, i32, i32) {
    %c0_i32 = arith.constant 0 : i32
    %c0_i32_0 = arith.constant 0 : i32
    %c0_i32_1 = arith.constant 0 : i32
    return %arg0, %c0_i32, %c0_i32_0 : i32, i32, i32
  }
  func.func @transform_10(%arg0: i32) -> (i32, i32, i32, i32) {
    %c0_i32 = arith.constant 0 : i32
    %c0_i32_0 = arith.constant 0 : i32
    %c0_i32_1 = arith.constant 0 : i32
    %c0_i32_2 = arith.constant 0 : i32
    return %arg0, %c0_i32, %c0_i32_0, %c0_i32_1 : i32, i32, i32, i32
  }
}

</mosaic_0001>

<llo_original>
// kernel: _lambda_.1
$region0: #{_lambda_.1}
  #allocation0 [shape = 'u32[]', space=smem, size = 0x4, offset = 0x4, fixed_abs, tag = 'smem constant byte address 0x4 - core index']
  #allocation1 [shape = 'u32[72,128]{1,0:T(1,128)}', space=vmem, size = 0x9000, scoped, tag = 'internal scratch']
  #allocation2 [shape = 'bf16[10,10,128]{2,1,0:T(8,128)(2,1)}', space=vmem, size = 0xa000, scoped, tag = 'scratch operand']
  %s0 = inlined_call_operand.vmem [shape: bf16[2,36,9,64], index: 0, kind: input, shape index: {}]
  %s1 = inlined_call_operand.vmem [shape: bf16[9,64,128], index: 1, kind: input, shape index: {}]
  %s2 = inlined_call_operand.vmem [shape: f32[1,128], index: 2, kind: input, shape index: {}]
  %s3 = inlined_call_operand.vmem [shape: bf16[9,128,128], index: 3, kind: input, shape index: {}]
  %s4 = inlined_call_operand.vmem [shape: f32[1,128], index: 4, kind: input, shape index: {}]
  %s5 = inlined_call_operand.vmem [shape: f32[2,1,128], index: 5, kind: input, shape index: {}]
  %s6 = inlined_call_operand.vmem [shape: f32[2,1,128], index: 6, kind: input, shape index: {}]
  %s7 = inlined_call_operand.vmem [shape: bf16[64,128], index: 7, kind: input, shape index: {}]
  %s8 = inlined_call_operand.vmem [shape: f32[1,128], index: 8, kind: input, shape index: {}]
  %s9 = inlined_call_operand.vmem [shape: f32[2,1,128], index: 9, kind: input, shape index: {}]
  %s10 = inlined_call_operand.hbm [shape: f32[2,8,8,128], index: 10, kind: output, shape index: {}]
  %s11 = sld [smem:[#allocation0]]
  $region73: #{_lambda_.1} parent=0
    _
  %s13 = ssub.s32 1, %s11
  %s14 = scalar_select 0, %s13, %s11
  $region1: #{_lambda_.1} parent=0
    #allocation3 [shape = 'u8[65536]{0}', space=vmem, size = 0x10000, scoped, tag = 'output window, operand 0']
    #allocation4 [shape = 's32[2]{0}', space=sflag, size = 0x8, scoped, tag = 'scoped memory for _lambda_.1']
    %15 = vsyncpa [#allocation4], 0
    %s16 = scalar_lea.sflag [#allocation4], 1
    %17 = vsyncpa %s16, 0
    loop: start=0, step=1, limit=4
    $region2: #{_lambda_.1} parent=1 // loop_pre_header
      _
    $region3: #{_lambda_.1} parent=1 // loop_header
      %s19 = sphi 0, %s23
      %p20 = scmp.ge.s32.totalorder %s19, 4
      %s29 = sphi 0, %s31
      %s32 = sphi 0, %s29
      %s33 = sphi 0, %s32
      %s49 = sphi 0, %s33
      %s53 = sphi 0, %s53
      %s55 = sphi 0, %s53
      %s56 = sphi 0, %s55
      %s70 = sphi 0, %s56
      %s74 = sphi 0, %s74
      %s76 = sphi 0, %s74
      %s77 = sphi 0, %s76
      %s91 = sphi 0, %s77
      %s95 = sphi 0, %s95
      %s97 = sphi 0, %s95
      %s98 = sphi 0, %s97
      %s112 = sphi 0, %s98
      %s116 = sphi 0, %s116
      %s118 = sphi 0, %s116
      %s119 = sphi 0, %s118
      %s133 = sphi 0, %s119
      %s139 = sphi 0, %s141
      %s142 = sphi 0, %s139
      %s143 = sphi 0, %s142
      %s159 = sphi 0, %s143
      %s165 = sphi 0, %s167
      %s168 = sphi 0, %s165
      %s169 = sphi 0, %s168
      %s185 = sphi 0, %s169
      %s189 = sphi 0, %s189
      %s191 = sphi 0, %s189
      %s192 = sphi 0, %s191
      %s206 = sphi 0, %s192
      %s210 = sphi 0, %s210
      %s212 = sphi 0, %s210
      %s213 = sphi 0, %s212
      %s227 = sphi 0, %s213
      %s233 = sphi 0, %s235
      %s236 = sphi 0, %s233
      %s237 = sphi 0, %s236
      %s253 = sphi 0, %s237
      %s259 = sphi 0, %s261
      %s262 = sphi 0, %s259
      %s263 = sphi 0, %s262
      %s279 = sphi 0, %s263
    $region4: #{_lambda_.1} parent=1 // loop_header_branch
      %22 = sbr.rel (%p20) target = $region8
    $region5: #{_lambda_.1} parent=1 // loop_body
      %s24 = ssub.s32 %s19, 1
      %s25 = ssub.s32 %s19, 2
      %s26 = sadd.s32 %s19, 1
      %s27 = ssub.s32 %s19, %s26
      %p28 = scmp.eq.s32.totalorder %s27, 0
      %s30 = sadd.s32 %s29, 1
      %s31 = scalar_select %p28, %s29, %s30
      %p34 = pneg %p28
      %p35 = scmp.eq.s32.totalorder %s19, 1
      %p36 = por %p34, %p35
      %p37 = scmp.ne.s32.totalorder %s29, %s32
      %p38 = scmp.eq.s32.totalorder %s19, 0
      %p39 = por %p37, %p38
      %p40 = scmp.ne.s32.totalorder %s29, %s32
      %p41 = scmp.eq.s32.totalorder %s24, 1
      %p42 = por %p40, %p41
      %p43 = scmp.ne.s32.totalorder %s32, %s33
      %p44 = scmp.eq.s32.totalorder %s24, 0
      %p45 = por %p43, %p44
      %p46 = scmp.ne.s32.totalorder %s32, %s33
      %p47 = scmp.eq.s32.totalorder %s25, 1
      %p48 = por %p46, %p47
      %p50 = scmp.ne.s32.totalorder %s33, %s49
      %p51 = scmp.eq.s32.totalorder %s25, 0
      %p52 = por %p50, %p51
      %s54 = sadd.s32 %s53, 1
      %p57 = scmp.eq.s32.totalorder %s19, 1
      %p58 = scmp.ne.s32.totalorder %s53, %s55
      %p59 = scmp.eq.s32.totalorder %s19, 0
      %p60 = por %p58, %p59
      %p61 = scmp.ne.s32.totalorder %s53, %s55
      %p62 = scmp.eq.s32.totalorder %s24, 1
      %p63 = por %p61, %p62
      %p64 = scmp.ne.s32.totalorder %s55, %s56
      %p65 = scmp.eq.s32.totalorder %s24, 0
      %p66 = por %p64, %p65
      %p67 = scmp.ne.s32.totalorder %s55, %s56
      %p68 = scmp.eq.s32.totalorder %s25, 1
      %p69 = por %p67, %p68
      %p71 = scmp.ne.s32.totalorder %s56, %s70
      %p72 = scmp.eq.s32.totalorder %s25, 0
      %p73 = por %p71, %p72
      %s75 = sadd.s32 %s74, 1
      %p78 = scmp.eq.s32.totalorder %s19, 1
      %p79 = scmp.ne.s32.totalorder %s74, %s76
      %p80 = scmp.eq.s32.totalorder %s19, 0
      %p81 = por %p79, %p80
      %p82 = scmp.ne.s32.totalorder %s74, %s76
      %p83 = scmp.eq.s32.totalorder %s24, 1
      %p84 = por %p82, %p83
      %p85 = scmp.ne.s32.totalorder %s76, %s77
      %p86 = scmp.eq.s32.totalorder %s24, 0
      %p87 = por %p85, %p86
      %p88 = scmp.ne.s32.totalorder %s76, %s77
      %p89 = scmp.eq.s32.totalorder %s25, 1
      %p90 = por %p88, %p89
      %p92 = scmp.ne.s32.totalorder %s77, %s91
      %p93 = scmp.eq.s32.totalorder %s25, 0
      %p94 = por %p92, %p93
      %s96 = sadd.s32 %s95, 1
      %p99 = scmp.eq.s32.totalorder %s19, 1
      %p100 = scmp.ne.s32.totalorder %s95, %s97
      %p101 = scmp.eq.s32.totalorder %s19, 0
      %p102 = por %p100, %p101
      %p103 = scmp.ne.s32.totalorder %s95, %s97
      %p104 = scmp.eq.s32.totalorder %s24, 1
      %p105 = por %p103, %p104
      %p106 = scmp.ne.s32.totalorder %s97, %s98
      %p107 = scmp.eq.s32.totalorder %s24, 0
      %p108 = por %p106, %p107
      %p109 = scmp.ne.s32.totalorder %s97, %s98
      %p110 = scmp.eq.s32.totalorder %s25, 1
      %p111 = por %p109, %p110
      %p113 = scmp.ne.s32.totalorder %s98, %s112
      %p114 = scmp.eq.s32.totalorder %s25, 0
      %p115 = por %p113, %p114
      %s117 = sadd.s32 %s116, 1
      %p120 = scmp.eq.s32.totalorder %s19, 1
      %p121 = scmp.ne.s32.totalorder %s116, %s118
      %p122 = scmp.eq.s32.totalorder %s19, 0
      %p123 = por %p121, %p122
      %p124 = scmp.ne.s32.totalorder %s116, %s118
      %p125 = scmp.eq.s32.totalorder %s24, 1
      %p126 = por %p124, %p125
      %p127 = scmp.ne.s32.totalorder %s118, %s119
      %p128 = scmp.eq.s32.totalorder %s24, 0
      %p129 = por %p127, %p128
      %p130 = scmp.ne.s32.totalorder %s118, %s119
      %p131 = scmp.eq.s32.totalorder %s25, 1
      %p132 = por %p130, %p131
      %p134 = scmp.ne.s32.totalorder %s119, %s133
      %p135 = scmp.eq.s32.totalorder %s25, 0
      %p136 = por %p134, %p135
      %s137 = ssub.s32 %s19, %s26
      %p138 = scmp.eq.s32.totalorder %s137, 0
      %s140 = sadd.s32 %s139, 1
      %s141 = scalar_select %p138, %s139, %s140
      %p144 = pneg %p138
      %p145 = scmp.eq.s32.totalorder %s19, 1
      %p146 = por %p144, %p145
      %p147 = scmp.ne.s32.totalorder %s139, %s142
      %p148 = scmp.eq.s32.totalorder %s19, 0
      %p149 = por %p147, %p148
      %p150 = scmp.ne.s32.totalorder %s139, %s142
      %p151 = scmp.eq.s32.totalorder %s24, 1
      %p152 = por %p150, %p151
      %p153 = scmp.ne.s32.totalorder %s142, %s143
      %p154 = scmp.eq.s32.totalorder %s24, 0
      %p155 = por %p153, %p154
      %p156 = scmp.ne.s32.totalorder %s142, %s143
      %p157 = scmp.eq.s32.totalorder %s25, 1
      %p158 = por %p156, %p157
      %p160 = scmp.ne.s32.totalorder %s143, %s159
      %p161 = scmp.eq.s32.totalorder %s25, 0
      %p162 = por %p160, %p161
      %s163 = ssub.s32 %s19, %s26
      %p164 = scmp.eq.s32.totalorder %s163, 0
      %s166 = sadd.s32 %s165, 1
      %s167 = scalar_select %p164, %s165, %s166
      %p170 = pneg %p164
      %p171 = scmp.eq.s32.totalorder %s19, 1
      %p172 = por %p170, %p171
      %p173 = scmp.ne.s32.totalorder %s165, %s168
      %p174 = scmp.eq.s32.totalorder %s19, 0
      %p175 = por %p173, %p174
      %p176 = scmp.ne.s32.totalorder %s165, %s168
      %p177 = scmp.eq.s32.totalorder %s24, 1
      %p178 = por %p176, %p177
      %p179 = scmp.ne.s32.totalorder %s168, %s169
      %p180 = scmp.eq.s32.totalorder %s24, 0
      %p181 = por %p179, %p180
      %p182 = scmp.ne.s32.totalorder %s168, %s169
      %p183 = scmp.eq.s32.totalorder %s25, 1
      %p184 = por %p182, %p183
      %p186 = scmp.ne.s32.totalorder %s169, %s185
      %p187 = scmp.eq.s32.totalorder %s25, 0
      %p188 = por %p186, %p187
      %s190 = sadd.s32 %s189, 1
      %p193 = scmp.eq.s32.totalorder %s19, 1
      %p194 = scmp.ne.s32.totalorder %s189, %s191
      %p195 = scmp.eq.s32.totalorder %s19, 0
      %p196 = por %p194, %p195
      %p197 = scmp.ne.s32.totalorder %s189, %s191
      %p198 = scmp.eq.s32.totalorder %s24, 1
      %p199 = por %p197, %p198
      %p200 = scmp.ne.s32.totalorder %s191, %s192
      %p201 = scmp.eq.s32.totalorder %s24, 0
      %p202 = por %p200, %p201
      %p203 = scmp.ne.s32.totalorder %s191, %s192
      %p204 = scmp.eq.s32.totalorder %s25, 1
      %p205 = por %p203, %p204
      %p207 = scmp.ne.s32.totalorder %s192, %s206
      %p208 = scmp.eq.s32.totalorder %s25, 0
      %p209 = por %p207, %p208
      %s211 = sadd.s32 %s210, 1
      %p214 = scmp.eq.s32.totalorder %s19, 1
      %p215 = scmp.ne.s32.totalorder %s210, %s212
      %p216 = scmp.eq.s32.totalorder %s19, 0
      %p217 = por %p215, %p216
      %p218 = scmp.ne.s32.totalorder %s210, %s212
      %p219 = scmp.eq.s32.totalorder %s24, 1
      %p220 = por %p218, %p219
      %p221 = scmp.ne.s32.totalorder %s212, %s213
      %p222 = scmp.eq.s32.totalorder %s24, 0
      %p223 = por %p221, %p222
      %p224 = scmp.ne.s32.totalorder %s212, %s213
      %p225 = scmp.eq.s32.totalorder %s25, 1
      %p226 = por %p224, %p225
      %p228 = scmp.ne.s32.totalorder %s213, %s227
      %p229 = scmp.eq.s32.totalorder %s25, 0
      %p230 = por %p228, %p229
      %s231 = ssub.s32 %s19, %s26
      %p232 = scmp.eq.s32.totalorder %s231, 0
      %s234 = sadd.s32 %s233, 1
      %s235 = scalar_select %p232, %s233, %s234
      %p238 = pneg %p232
      %p239 = scmp.eq.s32.totalorder %s19, 1
      %p240 = por %p238, %p239
      %p241 = scmp.ne.s32.totalorder %s233, %s236
      %p242 = scmp.eq.s32.totalorder %s19, 0
      %p243 = por %p241, %p242
      %p244 = scmp.ne.s32.totalorder %s233, %s236
      %p245 = scmp.eq.s32.totalorder %s24, 1
      %p246 = por %p244, %p245
      %p247 = scmp.ne.s32.totalorder %s236, %s237
      %p248 = scmp.eq.s32.totalorder %s24, 0
      %p249 = por %p247, %p248
      %p250 = scmp.ne.s32.totalorder %s236, %s237
      %p251 = scmp.eq.s32.totalorder %s25, 1
      %p252 = por %p250, %p251
      %p254 = scmp.ne.s32.totalorder %s237, %s253
      %p255 = scmp.eq.s32.totalorder %s25, 0
      %p256 = por %p254, %p255
      %s257 = ssub.s32 %s19, %s26
      %p258 = scmp.eq.s32.totalorder %s257, 0
      %s260 = sadd.s32 %s259, 1
      %s261 = scalar_select %p258, %s259, %s260
      %p264 = pneg %p258
      %p265 = scmp.eq.s32.totalorder %s19, 1
      %p266 = por %p264, %p265
      %p267 = scmp.ne.s32.totalorder %s259, %s262
      %p268 = scmp.eq.s32.totalorder %s19, 0
      %p269 = por %p267, %p268
      %p270 = scmp.ne.s32.totalorder %s259, %s262
      %p271 = scmp.eq.s32.totalorder %s24, 1
      %p272 = por %p270, %p271
      %p273 = scmp.ne.s32.totalorder %s262, %s263
      %p274 = scmp.eq.s32.totalorder %s24, 0
      %p275 = por %p273, %p274
      %p276 = scmp.ne.s32.totalorder %s262, %s263
      %p277 = scmp.eq.s32.totalorder %s25, 1
      %p278 = por %p276, %p277
      %p280 = scmp.ne.s32.totalorder %s263, %s279
      %p281 = scmp.eq.s32.totalorder %s25, 0
      %p282 = por %p280, %p281
      %p283 = scmp.le.s32.totalorder 1, %s19
      %p284 = scmp.lt.s32.totalorder %s19, 3
      %p285 = pnand %p283, %p284
      %p286 = pneg %p285
      // Predicated region
      $region9: #{_lambda_.1} parent=5 // pred_check
        _
      $region10: #{_lambda_.1} parent=5 // pred_check_branch
        %288 = sbr.rel (%p285) target = $region12
      $region11: #{_lambda_.1} parent=5 // pred_region
        %s289 = ssub.s32 %s19, 1
        // Predicated region
        $region13: #{_lambda_.1} parent=11 // pred_check
          %p290 = pneg %p66
        $region14: #{_lambda_.1} parent=11 // pred_check_branch
          %292 = sbr.rel (%p290) target = $region16
        $region15: #{_lambda_.1} parent=11 // pred_region
          _
        $region16: #{_lambda_.1} parent=11 // pred_fallthru
          _
        // Predicated region
        $region17: #{_lambda_.1} parent=11 // pred_check
          %p293 = pneg %p87
        $region18: #{_lambda_.1} parent=11 // pred_check_branch
          %295 = sbr.rel (%p293) target = $region20
        $region19: #{_lambda_.1} parent=11 // pred_region
          _
        $region20: #{_lambda_.1} parent=11 // pred_fallthru
          _
        // Predicated region
        $region21: #{_lambda_.1} parent=11 // pred_check
          %p296 = pneg %p108
        $region22: #{_lambda_.1} parent=11 // pred_check_branch
          %298 = sbr.rel (%p296) target = $region24
        $region23: #{_lambda_.1} parent=11 // pred_region
          _
        $region24: #{_lambda_.1} parent=11 // pred_fallthru
          _
        // Predicated region
        $region25: #{_lambda_.1} parent=11 // pred_check
          %p299 = pneg %p129
        $region26: #{_lambda_.1} parent=11 // pred_check_branch
          %301 = sbr.rel (%p299) target = $region28
        $region27: #{_lambda_.1} parent=11 // pred_region
          _
        $region28: #{_lambda_.1} parent=11 // pred_fallthru
          _
        // Predicated region
        $region29: #{_lambda_.1} parent=11 // pred_check
          %p302 = pneg %p202
        $region30: #{_lambda_.1} parent=11 // pred_check_branch
          %304 = sbr.rel (%p302) target = $region32
        $region31: #{_lambda_.1} parent=11 // pred_region
          _
        $region32: #{_lambda_.1} parent=11 // pred_fallthru
          _
        // Predicated region
        $region33: #{_lambda_.1} parent=11 // pred_check
          %p305 = pneg %p223
        $region34: #{_lambda_.1} parent=11 // pred_check_branch
          %307 = sbr.rel (%p305) target = $region36
        $region35: #{_lambda_.1} parent=11 // pred_region
          _
        $region36: #{_lambda_.1} parent=11 // pred_fallthru
          _
      $region12: #{_lambda_.1} parent=5 // pred_fallthru
        _
      %p308 = scmp.lt.s32.totalorder %s19, 2
      // Predicated region
      $region37: #{_lambda_.1} parent=5 // pred_check
        %p309 = pneg %p308
      $region38: #{_lambda_.1} parent=5 // pred_check_branch
        %311 = sbr.rel (%p309) target = $region40
      $region39: #{_lambda_.1} parent=5 // pred_region
        // Predicated region
        $region41: #{_lambda_.1} parent=39 // pred_check
          %p312 = pneg %p39
        $region42: #{_lambda_.1} parent=39 // pred_check_branch
          %314 = sbr.rel (%p312) target = $region44
        $region43: #{_lambda_.1} parent=39 // pred_region
          %p315 = scmp.lt.s32.totalorder %s19, 1
          %s316 = scalar_select %p315, %s19, 1
          %s317 = smul.addr %s316, 72
          %s318 = smul.addr %s317, 4
          %s319 = scalar_lea.vmem %s0, %s318
        $region44: #{_lambda_.1} parent=39 // pred_fallthru
          _
        // Predicated region
        $region45: #{_lambda_.1} parent=39 // pred_check
          %p320 = pneg %p149
        $region46: #{_lambda_.1} parent=39 // pred_check_branch
          %322 = sbr.rel (%p320) target = $region48
        $region47: #{_lambda_.1} parent=39 // pred_region
          %p323 = scmp.lt.s32.totalorder %s19, 1
          %s324 = scalar_select %p323, %s19, 1
          %s325 = scalar_lea.vmem %s5, %s324
        $region48: #{_lambda_.1} parent=39 // pred_fallthru
          _
        // Predicated region
        $region49: #{_lambda_.1} parent=39 // pred_check
          %p326 = pneg %p175
        $region50: #{_lambda_.1} parent=39 // pred_check_branch
          %328 = sbr.rel (%p326) target = $region52
        $region51: #{_lambda_.1} parent=39 // pred_region
          %p329 = scmp.lt.s32.totalorder %s19, 1
          %s330 = scalar_select %p329, %s19, 1
          %s331 = scalar_lea.vmem %s6, %s330
        $region52: #{_lambda_.1} parent=39 // pred_fallthru
          _
        // Predicated region
        $region53: #{_lambda_.1} parent=39 // pred_check
          %p332 = pneg %p243
        $region54: #{_lambda_.1} parent=39 // pred_check_branch
          %334 = sbr.rel (%p332) target = $region56
        $region55: #{_lambda_.1} parent=39 // pred_region
          %p335 = scmp.lt.s32.totalorder %s19, 1
          %s336 = scalar_select %p335, %s19, 1
          %s337 = scalar_lea.vmem %s9, %s336
        $region56: #{_lambda_.1} parent=39 // pred_fallthru
          _
      $region40: #{_lambda_.1} parent=5 // pred_fallthru
        _
      %p338 = scmp.le.s32.totalorder 1, %s19
      %p339 = scmp.lt.s32.totalorder %s19, 3
      %p340 = pnand %p338, %p339
      %p341 = pneg %p340
      // Predicated region
      $region57: #{_lambda_.1} parent=5 // pred_check
        _
      $region58: #{_lambda_.1} parent=5 // pred_check_branch
        %343 = sbr.rel (%p340) target = $region60
      $region59: #{_lambda_.1} parent=5 // pred_region
        %s344 = ssub.s32 %s19, 1
        %p345 = scmp.lt.s32.totalorder %s24, 1
        %s346 = scalar_select %p345, %s24, 1
        %s347 = smul.addr %s346, 72
        %s348 = smul.addr %s347, 4
        %s349 = scalar_lea.vmem %s0, %s348
        %p350 = pneg %p45
        %p351 = pneg %p42
        %p352 = pneg %p66
        %p353 = pneg %p63
        %p354 = pneg %p87
        %p355 = pneg %p84
        %p356 = pneg %p108
        %p357 = pneg %p105
        %p358 = pneg %p129
        %p359 = pneg %p126
        %p360 = scmp.lt.s32.totalorder %s24, 1
        %s361 = scalar_select %p360, %s24, 1
        %s362 = scalar_lea.vmem %s5, %s361
        %p363 = pneg %p155
        %p364 = pneg %p152
        %p365 = scmp.lt.s32.totalorder %s24, 1
        %s366 = scalar_select %p365, %s24, 1
        %s367 = scalar_lea.vmem %s6, %s366
        %p368 = pneg %p181
        %p369 = pneg %p178
        %p370 = pneg %p202
        %p371 = pneg %p199
        %p372 = pneg %p223
        %p373 = pneg %p220
        %p374 = scmp.lt.s32.totalorder %s24, 1
        %s375 = scalar_select %p374, %s24, 1
        %s376 = scalar_lea.vmem %s9, %s375
        %p377 = pneg %p249
        %p378 = pneg %p246
        %p379 = pneg %p275
        %p380 = pneg %p272
        %s381 = sand.u32 %s262, 1
        %s382 = scalar_lea.sflag [#allocation4], %s381
        %s383 = sand.u32 %s262, 1
        %s384 = smul.addr %s383, 64
        %s385 = scalar_lea.vmem [#allocation3], %s384
        %p386 = scmp.lt.s32.totalorder %s24, 1
        %s387 = scalar_select %p386, %s24, 1
        %s388 = smul.addr %s387, 72
        %s389 = smul.addr %s388, 4
        %s390 = scalar_lea.vmem %s0, %s389
        %p391 = scmp.lt.s32.totalorder %s24, 1
        %s392 = scalar_select %p391, %s24, 1
        %s393 = scalar_lea.vmem %s5, %s392
        %p394 = scmp.lt.s32.totalorder %s24, 1
        %s395 = scalar_select %p394, %s24, 1
        %s396 = scalar_lea.vmem %s6, %s395
        %p397 = scmp.lt.s32.totalorder %s24, 1
        %s398 = scalar_select %p397, %s24, 1
        %s399 = scalar_lea.vmem %s9, %s398
        %v401 = vld [vmem:[%s390] sm:$0xf]
        %v402 = vld [vmem:[%s390 + $0x8] sm:$0xf]
        %v403 = vld [vmem:[%s390 + $0x10] sm:$0xf]
        %v404 = vld [vmem:[%s390 + $0x18] sm:$0xf]
        %v405 = vld [vmem:[%s390 + $0x20] sm:$0xf]
        %v406 = vld [vmem:[%s390 + $0x28] sm:$0xf]
        %v407 = vld [vmem:[%s390 + $0x30] sm:$0xf]
        %v408 = vld [vmem:[%s390 + $0x38] sm:$0xf]
        %v409 = vld [vmem:[%s1] sm:$0xf]
        %v410 = vld [vmem:[%s1 + $0x4] sm:$0xf]
        %v411 = vld [vmem:[%s1 + $0x8] sm:$0xf]
        %v412 = vld [vmem:[%s1 + $0xc] sm:$0xf]
        %v413 = vld [vmem:[%s1 + $0x10] sm:$0xf]
        %v414 = vld [vmem:[%s1 + $0x14] sm:$0xf]
        %v415 = vld [vmem:[%s1 + $0x18] sm:$0xf]
        %v416 = vld [vmem:[%s1 + $0x1c] sm:$0xf]
        %s417 = scalar_lea.vmem %s390, 72
        %v418 = vld [vmem:[%s417] sm:$0xf]
        %v419 = vld [vmem:[%s417 + $0x8] sm:$0xf]
        %v420 = vld [vmem:[%s417 + $0x10] sm:$0xf]
        %v421 = vld [vmem:[%s417 + $0x18] sm:$0xf]
        %v422 = vld [vmem:[%s417 + $0x20] sm:$0xf]
        %v423 = vld [vmem:[%s417 + $0x28] sm:$0xf]
        %v424 = vld [vmem:[%s417 + $0x30] sm:$0xf]
        %v425 = vld [vmem:[%s417 + $0x38] sm:$0xf]
        %s426 = scalar_lea.vmem %s1, 32
        %v427 = vld [vmem:[%s426] sm:$0xf]
        %v428 = vld [vmem:[%s426 + $0x4] sm:$0xf]
        %v429 = vld [vmem:[%s426 + $0x8] sm:$0xf]
        %v430 = vld [vmem:[%s426 + $0xc] sm:$0xf]
        %v431 = vld [vmem:[%s426 + $0x10] sm:$0xf]
        %v432 = vld [vmem:[%s426 + $0x14] sm:$0xf]
        %v433 = vld [vmem:[%s426 + $0x18] sm:$0xf]
        %v434 = vld [vmem:[%s426 + $0x1c] sm:$0xf]
        %v443 = vunpack.c.l.b16 %v418
        %v444 = vunpack.c.l.b16 %v419
        %v445 = vunpack.c.l.b16 %v420
        %v446 = vunpack.c.l.b16 %v421
        %v447 = vunpack.c.l.b16 %v422
        %v448 = vunpack.c.l.b16 %v423
        %v449 = vunpack.c.l.b16 %v424
        %v450 = vunpack.c.l.b16 %v425
        %v451 = vpack.c.b16 %v444, %v443
        %v452 = vpack.c.b16 %v446, %v445
        %v453 = vpack.c.b16 %v448, %v447
        %v454 = vpack.c.b16 %v450, %v449
        %v463 = vunpack.c.l.b16 %v427
        %v464 = vunpack.c.l.b16 %v428
        %v465 = vunpack.c.l.b16 %v429
        %v466 = vunpack.c.l.b16 %v430
        %v467 = vunpack.c.l.b16 %v431
        %v468 = vunpack.c.l.b16 %v432
        %v469 = vunpack.c.l.b16 %v433
        %v470 = vunpack.c.l.b16 %v434
        %v471 = vpack.c.b16 %v464, %v463
        %v472 = vpack.c.b16 %v466, %v465
        %v473 = vpack.c.b16 %v468, %v467
        %v474 = vpack.c.b16 %v470, %v469
        %vm479 = vcmask 523264
        %v481 = vsel %vm479, %v451, 0
        %v484 = vsel %vm479, %v452, 0
        %v487 = vsel %vm479, %v453, 0
        %v490 = vsel %vm479, %v454, 0
        %492 = vmatpush.bf16.msra.mxu0 0
        %493 = vmatpush.bf16.msra.mxu0 0
        %494 = vmatpush.bf16.msra.mxu0 0
        %495 = vmatpush.bf16.msra.mxu0 0
        %496 = vmatpush.bf16.msra.mxu0 %v474
        %497 = vmatpush.bf16.msra.mxu0 %v473
        %498 = vmatpush.bf16.msra.mxu0 %v472
        %499 = vmatpush.bf16.msra.mxu0 %v471
        %500 = vmatmul.bf16.gmra.mxu0 %v481
        %v501 = vpop.f32.mrf.mxu0
        %v502 = vadd.f32 0.0, %v501
        %v503 = vpop.f32.mrf.mxu0
        %v504 = vadd.f32 0.0, %v503
        %505 = vmatmul.bf16.gmra.mxu0 %v484
        %v506 = vpop.f32.mrf.mxu0
        %v507 = vadd.f32 0.0, %v506
        %v508 = vpop.f32.mrf.mxu0
        %v509 = vadd.f32 0.0, %v508
        %510 = vmatmul.bf16.gmra.mxu0 %v487
        %v511 = vpop.f32.mrf.mxu0
        %v512 = vadd.f32 0.0, %v511
        %v513 = vpop.f32.mrf.mxu0
        %v514 = vadd.f32 0.0, %v513
        %515 = vmatmul.bf16.gmra.mxu0 %v490
        %v516 = vpop.f32.mrf.mxu0
        %v517 = vadd.f32 0.0, %v516
        %v518 = vpop.f32.mrf.mxu0
        %v519 = vadd.f32 0.0, %v518
        %520 = vdwg.mxu0
        %v529 = vunpack.c.l.b16 %v401
        %v530 = vunpack.c.l.b16 %v402
        %v531 = vunpack.c.l.b16 %v403
        %v532 = vunpack.c.l.b16 %v404
        %v533 = vunpack.c.l.b16 %v405
        %v534 = vunpack.c.l.b16 %v406
        %v535 = vunpack.c.l.b16 %v407
        %v536 = vunpack.c.l.b16 %v408
        %v537 = vpack.c.b16 %v530, %v529
        %v538 = vpack.c.b16 %v532, %v531
        %v539 = vpack.c.b16 %v534, %v533
        %v540 = vpack.c.b16 %v536, %v535
        %v549 = vunpack.c.l.b16 %v409
        %v550 = vunpack.c.l.b16 %v410
        %v551 = vunpack.c.l.b16 %v411
        %v552 = vunpack.c.l.b16 %v412
        %v553 = vunpack.c.l.b16 %v413
        %v554 = vunpack.c.l.b16 %v414
        %v555 = vunpack.c.l.b16 %v415
        %v556 = vunpack.c.l.b16 %v416
        %v557 = vpack.c.b16 %v550, %v549
        %v558 = vpack.c.b16 %v552, %v551
        %v559 = vpack.c.b16 %v554, %v553
        %v560 = vpack.c.b16 %v556, %v555
        %v566 = vsel %vm479, %v537, 0
        %v569 = vsel %vm479, %v538, 0
        %v572 = vsel %vm479, %v539, 0
        %v575 = vsel %vm479, %v540, 0
        %577 = vmatpush.bf16.msra.mxu0 0
        %578 = vmatpush.bf16.msra.mxu0 0
        %579 = vmatpush.bf16.msra.mxu0 0
        %580 = vmatpush.bf16.msra.mxu0 0
        %581 = vmatpush.bf16.msra.mxu0 %v560
        %582 = vmatpush.bf16.msra.mxu0 %v559
        %583 = vmatpush.bf16.msra.mxu0 %v558
        %584 = vmatpush.bf16.msra.mxu0 %v557
        %585 = vmatmul.bf16.gmra.mxu0 %v566
        %v586 = vpop.f32.mrf.mxu0
        %v587 = vadd.f32 %v502, %v586
        %v588 = vpop.f32.mrf.mxu0
        %v589 = vadd.f32 %v504, %v588
        %590 = vmatmul.bf16.gmra.mxu0 %v569
        %v591 = vpop.f32.mrf.mxu0
        %v592 = vadd.f32 %v507, %v591
        %v593 = vpop.f32.mrf.mxu0
        %v594 = vadd.f32 %v509, %v593
        %595 = vmatmul.bf16.gmra.mxu0 %v572
        %v596 = vpop.f32.mrf.mxu0
        %v597 = vadd.f32 %v512, %v596
        %v598 = vpop.f32.mrf.mxu0
        %v599 = vadd.f32 %v514, %v598
        %600 = vmatmul.bf16.gmra.mxu0 %v575
        %v601 = vpop.f32.mrf.mxu0
        %v602 = vadd.f32 %v517, %v601
        %v603 = vpop.f32.mrf.mxu0
        %v604 = vadd.f32 %v519, %v603
        %605 = vdwg.mxu0
        %v606 = vld [vmem:[%s390] sm:$0xf]
        %v607 = vld [vmem:[%s390 + $0x4] sm:$0x1]
        %v608 = vld [vmem:[%s390 + $0x8] sm:$0xf]
        %v609 = vld [vmem:[%s390 + $0xc] sm:$0x1]
        %v610 = vld [vmem:[%s390 + $0x10] sm:$0xf]
        %v611 = vld [vmem:[%s390 + $0x14] sm:$0x1]
        %v612 = vld [vmem:[%s390 + $0x18] sm:$0xf]
        %v613 = vld [vmem:[%s390 + $0x1c] sm:$0x1]
        %v614 = vld [vmem:[%s390 + $0x20] sm:$0xf]
        %v615 = vld [vmem:[%s390 + $0x24] sm:$0x1]
        %v616 = vld [vmem:[%s390 + $0x28] sm:$0xf]
        %v617 = vld [vmem:[%s390 + $0x2c] sm:$0x1]
        %v618 = vld [vmem:[%s390 + $0x30] sm:$0xf]
        %v619 = vld [vmem:[%s390 + $0x34] sm:$0x1]
        %v620 = vld [vmem:[%s390 + $0x38] sm:$0xf]
        %v621 = vld [vmem:[%s390 + $0x3c] sm:$0x1]
        %vm622 = vsmask.f32 3328
        %vm623 = vsmask.f32 7440
        %vm624 = vmor %vm622, %vm623
        %v626 = vshrl.u32 %v606, 16
        %v628 = vrot.slane %v626, 4
        %v629 = vshll.u32 %v606, 16
        %v631 = vrot.slane %v629, 5
        %v632 = vor.u32 %v628, %v631
        %v633 = vrot.slane %v632, 4
        %v635 = vshll.u32 %v607, 16
        %v637 = vrot.slane %v635, 5
        %v638 = vsel %vm624, %v633, %v637
        %v640 = vshrl.u32 %v608, 16
        %v642 = vrot.slane %v640, 4
        %v643 = vshll.u32 %v608, 16
        %v645 = vrot.slane %v643, 5
        %v646 = vor.u32 %v642, %v645
        %v647 = vrot.slane %v646, 4
        %v649 = vshll.u32 %v609, 16
        %v651 = vrot.slane %v649, 5
        %v652 = vsel %vm624, %v647, %v651
        %v654 = vshrl.u32 %v610, 16
        %v656 = vrot.slane %v654, 4
        %v657 = vshll.u32 %v610, 16
        %v659 = vrot.slane %v657, 5
        %v660 = vor.u32 %v656, %v659
        %v661 = vrot.slane %v660, 4
        %v663 = vshll.u32 %v611, 16
        %v665 = vrot.slane %v663, 5
        %v666 = vsel %vm624, %v661, %v665
        %v668 = vshrl.u32 %v612, 16
        %v670 = vrot.slane %v668, 4
        %v671 = vshll.u32 %v612, 16
        %v673 = vrot.slane %v671, 5
        %v674 = vor.u32 %v670, %v673
        %v675 = vrot.slane %v674, 4
        %v677 = vshll.u32 %v613, 16
        %v679 = vrot.slane %v677, 5
        %v680 = vsel %vm624, %v675, %v679
        %v682 = vshrl.u32 %v614, 16
        %v684 = vrot.slane %v682, 4
        %v685 = vshll.u32 %v614, 16
        %v687 = vrot.slane %v685, 5
        %v688 = vor.u32 %v684, %v687
        %v689 = vrot.slane %v688, 4
        %v691 = vshll.u32 %v615, 16
        %v693 = vrot.slane %v691, 5
        %v694 = vsel %vm624, %v689, %v693
        %v696 = vshrl.u32 %v616, 16
        %v698 = vrot.slane %v696, 4
        %v699 = vshll.u32 %v616, 16
        %v701 = vrot.slane %v699, 5
        %v702 = vor.u32 %v698, %v701
        %v703 = vrot.slane %v702, 4
        %v705 = vshll.u32 %v617, 16
        %v707 = vrot.slane %v705, 5
        %v708 = vsel %vm624, %v703, %v707
        %v710 = vshrl.u32 %v618, 16
        %v712 = vrot.slane %v710, 4
        %v713 = vshll.u32 %v618, 16
        %v715 = vrot.slane %v713, 5
        %v716 = vor.u32 %v712, %v715
        %v717 = vrot.slane %v716, 4
        %v719 = vshll.u32 %v619, 16
        %v721 = vrot.slane %v719, 5
        %v722 = vsel %vm624, %v717, %v721
        %v724 = vshrl.u32 %v620, 16
        %v726 = vrot.slane %v724, 4
        %v727 = vshll.u32 %v620, 16
        %v729 = vrot.slane %v727, 5
        %v730 = vor.u32 %v726, %v729
        %v731 = vrot.slane %v730, 4
        %v733 = vshll.u32 %v621, 16
        %v735 = vrot.slane %v733, 5
        %v736 = vsel %vm624, %v731, %v735
        %s737 = scalar_lea.vmem %s1, 64
        %v738 = vld [vmem:[%s737] sm:$0xf]
        %v739 = vld [vmem:[%s737 + $0x4] sm:$0xf]
        %v740 = vld [vmem:[%s737 + $0x8] sm:$0xf]
        %v741 = vld [vmem:[%s737 + $0xc] sm:$0xf]
        %v742 = vld [vmem:[%s737 + $0x10] sm:$0xf]
        %v743 = vld [vmem:[%s737 + $0x14] sm:$0xf]
        %v744 = vld [vmem:[%s737 + $0x18] sm:$0xf]
        %v745 = vld [vmem:[%s737 + $0x1c] sm:$0xf]
        %v746 = vunpack.c.l.b16 %v638
        %v747 = vunpack.c.l.b16 %v652
        %v748 = vunpack.c.l.b16 %v666
        %v749 = vunpack.c.l.b16 %v680
        %v750 = vunpack.c.l.b16 %v694
        %v751 = vunpack.c.l.b16 %v708
        %v752 = vunpack.c.l.b16 %v722
        %v753 = vunpack.c.l.b16 %v736
        %v754 = vpack.c.b16 %v747, %v746
        %v755 = vpack.c.b16 %v749, %v748
        %v756 = vpack.c.b16 %v751, %v750
        %v757 = vpack.c.b16 %v753, %v752
        %v766 = vunpack.c.l.b16 %v738
        %v767 = vunpack.c.l.b16 %v739
        %v768 = vunpack.c.l.b16 %v740
        %v769 = vunpack.c.l.b16 %v741
        %v770 = vunpack.c.l.b16 %v742
        %v771 = vunpack.c.l.b16 %v743
        %v772 = vunpack.c.l.b16 %v744
        %v773 = vunpack.c.l.b16 %v745
        %v774 = vpack.c.b16 %v767, %v766
        %v775 = vpack.c.b16 %v769, %v768
        %v776 = vpack.c.b16 %v771, %v770
        %v777 = vpack.c.b16 %v773, %v772
        %v783 = vsel %vm479, %v754, 0
        %v786 = vsel %vm479, %v755, 0
        %v789 = vsel %vm479, %v756, 0
        %v792 = vsel %vm479, %v757, 0
        %794 = vmatpush.bf16.msra.mxu0 0
        %795 = vmatpush.bf16.msra.mxu0 0
        %796 = vmatpush.bf16.msra.mxu0 0
        %797 = vmatpush.bf16.msra.mxu0 0
        %798 = vmatpush.bf16.msra.mxu0 %v777
        %799 = vmatpush.bf16.msra.mxu0 %v776
        %800 = vmatpush.bf16.msra.mxu0 %v775
        %801 = vmatpush.bf16.msra.mxu0 %v774
        %802 = vmatmul.bf16.gmra.mxu0 %v783
        %v803 = vpop.f32.mrf.mxu0
        %v804 = vadd.f32 0.0, %v803
        %v805 = vpop.f32.mrf.mxu0
        %v806 = vadd.f32 0.0, %v805
        %807 = vmatmul.bf16.gmra.mxu0 %v786
        %v808 = vpop.f32.mrf.mxu0
        %v809 = vadd.f32 0.0, %v808
        %v810 = vpop.f32.mrf.mxu0
        %v811 = vadd.f32 0.0, %v810
        %812 = vmatmul.bf16.gmra.mxu0 %v789
        %v813 = vpop.f32.mrf.mxu0
        %v814 = vadd.f32 0.0, %v813
        %v815 = vpop.f32.mrf.mxu0
        %v816 = vadd.f32 0.0, %v815
        %817 = vmatmul.bf16.gmra.mxu0 %v792
        %v818 = vpop.f32.mrf.mxu0
        %v819 = vadd.f32 0.0, %v818
        %v820 = vpop.f32.mrf.mxu0
        %v821 = vadd.f32 0.0, %v820
        %822 = vdwg.mxu0
        %v823 = vadd.f32 %v587, %v804
        %v824 = vadd.f32 %v589, %v806
        %v825 = vadd.f32 %v592, %v809
        %v826 = vadd.f32 %v594, %v811
        %v827 = vadd.f32 %v597, %v814
        %v828 = vadd.f32 %v599, %v816
        %v829 = vadd.f32 %v602, %v819
        %v830 = vadd.f32 %v604, %v821
        %s831 = scalar_lea.vmem %s390, 144
        %v832 = vld [vmem:[%s831] sm:$0xf]
        %v833 = vld [vmem:[%s831 + $0x8] sm:$0xf]
        %v834 = vld [vmem:[%s831 + $0x10] sm:$0xf]
        %v835 = vld [vmem:[%s831 + $0x18] sm:$0xf]
        %v836 = vld [vmem:[%s831 + $0x20] sm:$0xf]
        %v837 = vld [vmem:[%s831 + $0x28] sm:$0xf]
        %v838 = vld [vmem:[%s831 + $0x30] sm:$0xf]
        %v839 = vld [vmem:[%s831 + $0x38] sm:$0xf]
        %s840 = scalar_lea.vmem %s1, 96
        %v841 = vld [vmem:[%s840] sm:$0xf]
        %v842 = vld [vmem:[%s840 + $0x4] sm:$0xf]
        %v843 = vld [vmem:[%s840 + $0x8] sm:$0xf]
        %v844 = vld [vmem:[%s840 + $0xc] sm:$0xf]
        %v845 = vld [vmem:[%s840 + $0x10] sm:$0xf]
        %v846 = vld [vmem:[%s840 + $0x14] sm:$0xf]
        %v847 = vld [vmem:[%s840 + $0x18] sm:$0xf]
        %v848 = vld [vmem:[%s840 + $0x1c] sm:$0xf]
        %v857 = vunpack.c.l.b16 %v832
        %v858 = vunpack.c.l.b16 %v833
        %v859 = vunpack.c.l.b16 %v834
        %v860 = vunpack.c.l.b16 %v835
        %v861 = vunpack.c.l.b16 %v836
        %v862 = vunpack.c.l.b16 %v837
        %v863 = vunpack.c.l.b16 %v838
        %v864 = vunpack.c.l.b16 %v839
        %v865 = vpack.c.b16 %v858, %v857
        %v866 = vpack.c.b16 %v860, %v859
        %v867 = vpack.c.b16 %v862, %v861
        %v868 = vpack.c.b16 %v864, %v863
        %v877 = vunpack.c.l.b16 %v841
        %v878 = vunpack.c.l.b16 %v842
        %v879 = vunpack.c.l.b16 %v843
        %v880 = vunpack.c.l.b16 %v844
        %v881 = vunpack.c.l.b16 %v845
        %v882 = vunpack.c.l.b16 %v846
        %v883 = vunpack.c.l.b16 %v847
        %v884 = vunpack.c.l.b16 %v848
        %v885 = vpack.c.b16 %v878, %v877
        %v886 = vpack.c.b16 %v880, %v879
        %v887 = vpack.c.b16 %v882, %v881
        %v888 = vpack.c.b16 %v884, %v883
        %v894 = vsel %vm479, %v865, 0
        %v897 = vsel %vm479, %v866, 0
        %v900 = vsel %vm479, %v867, 0
        %v903 = vsel %vm479, %v868, 0
        %905 = vmatpush.bf16.msra.mxu0 0
        %906 = vmatpush.bf16.msra.mxu0 0
        %907 = vmatpush.bf16.msra.mxu0 0
        %908 = vmatpush.bf16.msra.mxu0 0
        %909 = vmatpush.bf16.msra.mxu0 %v888
        %910 = vmatpush.bf16.msra.mxu0 %v887
        %911 = vmatpush.bf16.msra.mxu0 %v886
        %912 = vmatpush.bf16.msra.mxu0 %v885
        %913 = vmatmul.bf16.gmra.mxu0 %v894
        %v914 = vpop.f32.mrf.mxu0
        %v915 = vadd.f32 0.0, %v914
        %v916 = vpop.f32.mrf.mxu0
        %v917 = vadd.f32 0.0, %v916
        %918 = vmatmul.bf16.gmra.mxu0 %v897
        %v919 = vpop.f32.mrf.mxu0
        %v920 = vadd.f32 0.0, %v919
        %v921 = vpop.f32.mrf.mxu0
        %v922 = vadd.f32 0.0, %v921
        %923 = vmatmul.bf16.gmra.mxu0 %v900
        %v924 = vpop.f32.mrf.mxu0
        %v925 = vadd.f32 0.0, %v924
        %v926 = vpop.f32.mrf.mxu0
        %v927 = vadd.f32 0.0, %v926
        %928 = vmatmul.bf16.gmra.mxu0 %v903
        %v929 = vpop.f32.mrf.mxu0
        %v930 = vadd.f32 0.0, %v929
        %v931 = vpop.f32.mrf.mxu0
        %v932 = vadd.f32 0.0, %v931
        %933 = vdwg.mxu0
        %v934 = vadd.f32 %v823, %v915
        %v935 = vadd.f32 %v824, %v917
        %v936 = vadd.f32 %v825, %v920
        %v937 = vadd.f32 %v826, %v922
        %v938 = vadd.f32 %v827, %v925
        %v939 = vadd.f32 %v828, %v927
        %v940 = vadd.f32 %v829, %v930
        %v941 = vadd.f32 %v830, %v932
        %s942 = scalar_lea.vmem %s390, 216
        %v943 = vld [vmem:[%s942] sm:$0xf]
        %v944 = vld [vmem:[%s942 + $0x8] sm:$0xf]
        %v945 = vld [vmem:[%s942 + $0x10] sm:$0xf]
        %v946 = vld [vmem:[%s942 + $0x18] sm:$0xf]
        %v947 = vld [vmem:[%s942 + $0x20] sm:$0xf]
        %v948 = vld [vmem:[%s942 + $0x28] sm:$0xf]
        %v949 = vld [vmem:[%s942 + $0x30] sm:$0xf]
        %v950 = vld [vmem:[%s942 + $0x38] sm:$0xf]
        %s951 = scalar_lea.vmem %s1, 128
        %v952 = vld [vmem:[%s951] sm:$0xf]
        %v953 = vld [vmem:[%s951 + $0x4] sm:$0xf]
        %v954 = vld [vmem:[%s951 + $0x8] sm:$0xf]
        %v955 = vld [vmem:[%s951 + $0xc] sm:$0xf]
        %v956 = vld [vmem:[%s951 + $0x10] sm:$0xf]
        %v957 = vld [vmem:[%s951 + $0x14] sm:$0xf]
        %v958 = vld [vmem:[%s951 + $0x18] sm:$0xf]
        %v959 = vld [vmem:[%s951 + $0x1c] sm:$0xf]
        %v968 = vunpack.c.l.b16 %v943
        %v969 = vunpack.c.l.b16 %v944
        %v970 = vunpack.c.l.b16 %v945
        %v971 = vunpack.c.l.b16 %v946
        %v972 = vunpack.c.l.b16 %v947
        %v973 = vunpack.c.l.b16 %v948
        %v974 = vunpack.c.l.b16 %v949
        %v975 = vunpack.c.l.b16 %v950
        %v976 = vpack.c.b16 %v969, %v968
        %v977 = vpack.c.b16 %v971, %v970
        %v978 = vpack.c.b16 %v973, %v972
        %v979 = vpack.c.b16 %v975, %v974
        %v988 = vunpack.c.l.b16 %v952
        %v989 = vunpack.c.l.b16 %v953
        %v990 = vunpack.c.l.b16 %v954
        %v991 = vunpack.c.l.b16 %v955
        %v992 = vunpack.c.l.b16 %v956
        %v993 = vunpack.c.l.b16 %v957
        %v994 = vunpack.c.l.b16 %v958
        %v995 = vunpack.c.l.b16 %v959
        %v996 = vpack.c.b16 %v989, %v988
        %v997 = vpack.c.b16 %v991, %v990
        %v998 = vpack.c.b16 %v993, %v992
        %v999 = vpack.c.b16 %v995, %v994
        %v1005 = vsel %vm479, %v976, 0
        %v1008 = vsel %vm479, %v977, 0
        %v1011 = vsel %vm479, %v978, 0
        %v1014 = vsel %vm479, %v979, 0
        %1016 = vmatpush.bf16.msra.mxu0 0
        %1017 = vmatpush.bf16.msra.mxu0 0
        %1018 = vmatpush.bf16.msra.mxu0 0
        %1019 = vmatpush.bf16.msra.mxu0 0
        %1020 = vmatpush.bf16.msra.mxu0 %v999
        %1021 = vmatpush.bf16.msra.mxu0 %v998
        %1022 = vmatpush.bf16.msra.mxu0 %v997
        %1023 = vmatpush.bf16.msra.mxu0 %v996
        %1024 = vmatmul.bf16.gmra.mxu0 %v1005
        %v1025 = vpop.f32.mrf.mxu0
        %v1026 = vadd.f32 0.0, %v1025
        %v1027 = vpop.f32.mrf.mxu0
        %v1028 = vadd.f32 0.0, %v1027
        %1029 = vmatmul.bf16.gmra.mxu0 %v1008
        %v1030 = vpop.f32.mrf.mxu0
        %v1031 = vadd.f32 0.0, %v1030
        %v1032 = vpop.f32.mrf.mxu0
        %v1033 = vadd.f32 0.0, %v1032
        %1034 = vmatmul.bf16.gmra.mxu0 %v1011
        %v1035 = vpop.f32.mrf.mxu0
        %v1036 = vadd.f32 0.0, %v1035
        %v1037 = vpop.f32.mrf.mxu0
        %v1038 = vadd.f32 0.0, %v1037
        %1039 = vmatmul.bf16.gmra.mxu0 %v1014
        %v1040 = vpop.f32.mrf.mxu0
        %v1041 = vadd.f32 0.0, %v1040
        %v1042 = vpop.f32.mrf.mxu0
        %v1043 = vadd.f32 0.0, %v1042
        %1044 = vdwg.mxu0
        %v1045 = vadd.f32 %v934, %v1026
        %v1046 = vadd.f32 %v935, %v1028
        %v1047 = vadd.f32 %v936, %v1031
        %v1048 = vadd.f32 %v937, %v1033
        %v1049 = vadd.f32 %v938, %v1036
        %v1050 = vadd.f32 %v939, %v1038
        %v1051 = vadd.f32 %v940, %v1041
        %v1052 = vadd.f32 %v941, %v1043
        %v1053 = vld [vmem:[%s831] sm:$0xf]
        %v1054 = vld [vmem:[%s831 + $0x4] sm:$0x1]
        %v1055 = vld [vmem:[%s831 + $0x8] sm:$0xf]
        %v1056 = vld [vmem:[%s831 + $0xc] sm:$0x1]
        %v1057 = vld [vmem:[%s831 + $0x10] sm:$0xf]
        %v1058 = vld [vmem:[%s831 + $0x14] sm:$0x1]
        %v1059 = vld [vmem:[%s831 + $0x18] sm:$0xf]
        %v1060 = vld [vmem:[%s831 + $0x1c] sm:$0x1]
        %v1061 = vld [vmem:[%s831 + $0x20] sm:$0xf]
        %v1062 = vld [vmem:[%s831 + $0x24] sm:$0x1]
        %v1063 = vld [vmem:[%s831 + $0x28] sm:$0xf]
        %v1064 = vld [vmem:[%s831 + $0x2c] sm:$0x1]
        %v1065 = vld [vmem:[%s831 + $0x30] sm:$0xf]
        %v1066 = vld [vmem:[%s831 + $0x34] sm:$0x1]
        %v1067 = vld [vmem:[%s831 + $0x38] sm:$0xf]
        %v1068 = vld [vmem:[%s831 + $0x3c] sm:$0x1]
        %v1070 = vshrl.u32 %v1053, 16
        %v1072 = vrot.slane %v1070, 4
        %v1073 = vshll.u32 %v1053, 16
        %v1075 = vrot.slane %v1073, 5
        %v1076 = vor.u32 %v1072, %v1075
        %v1077 = vrot.slane %v1076, 4
        %v1079 = vshll.u32 %v1054, 16
        %v1081 = vrot.slane %v1079, 5
        %v1082 = vsel %vm624, %v1077, %v1081
        %v1084 = vshrl.u32 %v1055, 16
        %v1086 = vrot.slane %v1084, 4
        %v1087 = vshll.u32 %v1055, 16
        %v1089 = vrot.slane %v1087, 5
        %v1090 = vor.u32 %v1086, %v1089
        %v1091 = vrot.slane %v1090, 4
        %v1093 = vshll.u32 %v1056, 16
        %v1095 = vrot.slane %v1093, 5
        %v1096 = vsel %vm624, %v1091, %v1095
        %v1098 = vshrl.u32 %v1057, 16
        %v1100 = vrot.slane %v1098, 4
        %v1101 = vshll.u32 %v1057, 16
        %v1103 = vrot.slane %v1101, 5
        %v1104 = vor.u32 %v1100, %v1103
        %v1105 = vrot.slane %v1104, 4
        %v1107 = vshll.u32 %v1058, 16
        %v1109 = vrot.slane %v1107, 5
        %v1110 = vsel %vm624, %v1105, %v1109
        %v1112 = vshrl.u32 %v1059, 16
        %v1114 = vrot.slane %v1112, 4
        %v1115 = vshll.u32 %v1059, 16
        %v1117 = vrot.slane %v1115, 5
        %v1118 = vor.u32 %v1114, %v1117
        %v1119 = vrot.slane %v1118, 4
        %v1121 = vshll.u32 %v1060, 16
        %v1123 = vrot.slane %v1121, 5
        %v1124 = vsel %vm624, %v1119, %v1123
        %v1126 = vshrl.u32 %v1061, 16
        %v1128 = vrot.slane %v1126, 4
        %v1129 = vshll.u32 %v1061, 16
        %v1131 = vrot.slane %v1129, 5
        %v1132 = vor.u32 %v1128, %v1131
        %v1133 = vrot.slane %v1132, 4
        %v1135 = vshll.u32 %v1062, 16
        %v1137 = vrot.slane %v1135, 5
        %v1138 = vsel %vm624, %v1133, %v1137
        %v1140 = vshrl.u32 %v1063, 16
        %v1142 = vrot.slane %v1140, 4
        %v1143 = vshll.u32 %v1063, 16
        %v1145 = vrot.slane %v1143, 5
        %v1146 = vor.u32 %v1142, %v1145
        %v1147 = vrot.slane %v1146, 4
        %v1149 = vshll.u32 %v1064, 16
        %v1151 = vrot.slane %v1149, 5
        %v1152 = vsel %vm624, %v1147, %v1151
        %v1154 = vshrl.u32 %v1065, 16
        %v1156 = vrot.slane %v1154, 4
        %v1157 = vshll.u32 %v1065, 16
        %v1159 = vrot.slane %v1157, 5
        %v1160 = vor.u32 %v1156, %v1159
        %v1161 = vrot.slane %v1160, 4
        %v1163 = vshll.u32 %v1066, 16
        %v1165 = vrot.slane %v1163, 5
        %v1166 = vsel %vm624, %v1161, %v1165
        %v1168 = vshrl.u32 %v1067, 16
        %v1170 = vrot.slane %v1168, 4
        %v1171 = vshll.u32 %v1067, 16
        %v1173 = vrot.slane %v1171, 5
        %v1174 = vor.u32 %v1170, %v1173
        %v1175 = vrot.slane %v1174, 4
        %v1177 = vshll.u32 %v1068, 16
        %v1179 = vrot.slane %v1177, 5
        %v1180 = vsel %vm624, %v1175, %v1179
        %s1181 = scalar_lea.vmem %s1, 160
        %v1182 = vld [vmem:[%s1181] sm:$0xf]
        %v1183 = vld [vmem:[%s1181 + $0x4] sm:$0xf]
        %v1184 = vld [vmem:[%s1181 + $0x8] sm:$0xf]
        %v1185 = vld [vmem:[%s1181 + $0xc] sm:$0xf]
        %v1186 = vld [vmem:[%s1181 + $0x10] sm:$0xf]
        %v1187 = vld [vmem:[%s1181 + $0x14] sm:$0xf]
        %v1188 = vld [vmem:[%s1181 + $0x18] sm:$0xf]
        %v1189 = vld [vmem:[%s1181 + $0x1c] sm:$0xf]
        %v1190 = vunpack.c.l.b16 %v1082
        %v1191 = vunpack.c.l.b16 %v1096
        %v1192 = vunpack.c.l.b16 %v1110
        %v1193 = vunpack.c.l.b16 %v1124
        %v1194 = vunpack.c.l.b16 %v1138
        %v1195 = vunpack.c.l.b16 %v1152
        %v1196 = vunpack.c.l.b16 %v1166
        %v1197 = vunpack.c.l.b16 %v1180
        %v1198 = vpack.c.b16 %v1191, %v1190
        %v1199 = vpack.c.b16 %v1193, %v1192
        %v1200 = vpack.c.b16 %v1195, %v1194
        %v1201 = vpack.c.b16 %v1197, %v1196
        %v1210 = vunpack.c.l.b16 %v1182
        %v1211 = vunpack.c.l.b16 %v1183
        %v1212 = vunpack.c.l.b16 %v1184
        %v1213 = vunpack.c.l.b16 %v1185
        %v1214 = vunpack.c.l.b16 %v1186
        %v1215 = vunpack.c.l.b16 %v1187
        %v1216 = vunpack.c.l.b16 %v1188
        %v1217 = vunpack.c.l.b16 %v1189
        %v1218 = vpack.c.b16 %v1211, %v1210
        %v1219 = vpack.c.b16 %v1213, %v1212
        %v1220 = vpack.c.b16 %v1215, %v1214
        %v1221 = vpack.c.b16 %v1217, %v1216
        %v1227 = vsel %vm479, %v1198, 0
        %v1230 = vsel %vm479, %v1199, 0
        %v1233 = vsel %vm479, %v1200, 0
        %v1236 = vsel %vm479, %v1201, 0
        %1238 = vmatpush.bf16.msra.mxu0 0
        %1239 = vmatpush.bf16.msra.mxu0 0
        %1240 = vmatpush.bf16.msra.mxu0 0
        %1241 = vmatpush.bf16.msra.mxu0 0
        %1242 = vmatpush.bf16.msra.mxu0 %v1221
        %1243 = vmatpush.bf16.msra.mxu0 %v1220
        %1244 = vmatpush.bf16.msra.mxu0 %v1219
        %1245 = vmatpush.bf16.msra.mxu0 %v1218
        %1246 = vmatmul.bf16.gmra.mxu0 %v1227
        %v1247 = vpop.f32.mrf.mxu0
        %v1248 = vadd.f32 0.0, %v1247
        %v1249 = vpop.f32.mrf.mxu0
        %v1250 = vadd.f32 0.0, %v1249
        %1251 = vmatmul.bf16.gmra.mxu0 %v1230
        %v1252 = vpop.f32.mrf.mxu0
        %v1253 = vadd.f32 0.0, %v1252
        %v1254 = vpop.f32.mrf.mxu0
        %v1255 = vadd.f32 0.0, %v1254
        %1256 = vmatmul.bf16.gmra.mxu0 %v1233
        %v1257 = vpop.f32.mrf.mxu0
        %v1258 = vadd.f32 0.0, %v1257
        %v1259 = vpop.f32.mrf.mxu0
        %v1260 = vadd.f32 0.0, %v1259
        %1261 = vmatmul.bf16.gmra.mxu0 %v1236
        %v1262 = vpop.f32.mrf.mxu0
        %v1263 = vadd.f32 0.0, %v1262
        %v1264 = vpop.f32.mrf.mxu0
        %v1265 = vadd.f32 0.0, %v1264
        %1266 = vdwg.mxu0
        %v1267 = vadd.f32 %v1045, %v1248
        %v1268 = vadd.f32 %v1046, %v1250
        %v1269 = vadd.f32 %v1047, %v1253
        %v1270 = vadd.f32 %v1048, %v1255
        %v1271 = vadd.f32 %v1049, %v1258
        %v1272 = vadd.f32 %v1050, %v1260
        %v1273 = vadd.f32 %v1051, %v1263
        %v1274 = vadd.f32 %v1052, %v1265
        %s1275 = scalar_lea.vmem %s390, 8
        %v1276 = vld [vmem:[%s1275] sm:$0xf]
        %v1277 = vld [vmem:[%s1275 + $0x8] sm:$0xf]
        %v1278 = vld [vmem:[%s1275 + $0x10] sm:$0xf]
        %v1279 = vld [vmem:[%s1275 + $0x18] sm:$0xf]
        %v1280 = vld [vmem:[%s1275 + $0x20] sm:$0xf]
        %v1281 = vld [vmem:[%s1275 + $0x28] sm:$0xf]
        %v1282 = vld [vmem:[%s1275 + $0x30] sm:$0xf]
        %v1283 = vld [vmem:[%s1275 + $0x38] sm:$0xf]
        %s1284 = scalar_lea.vmem %s1, 192
        %v1285 = vld [vmem:[%s1284] sm:$0xf]
        %v1286 = vld [vmem:[%s1284 + $0x4] sm:$0xf]
        %v1287 = vld [vmem:[%s1284 + $0x8] sm:$0xf]
        %v1288 = vld [vmem:[%s1284 + $0xc] sm:$0xf]
        %v1289 = vld [vmem:[%s1284 + $0x10] sm:$0xf]
        %v1290 = vld [vmem:[%s1284 + $0x14] sm:$0xf]
        %v1291 = vld [vmem:[%s1284 + $0x18] sm:$0xf]
        %v1292 = vld [vmem:[%s1284 + $0x1c] sm:$0xf]
        %v1301 = vunpack.c.l.b16 %v1276
        %v1302 = vunpack.c.l.b16 %v1277
        %v1303 = vunpack.c.l.b16 %v1278
        %v1304 = vunpack.c.l.b16 %v1279
        %v1305 = vunpack.c.l.b16 %v1280
        %v1306 = vunpack.c.l.b16 %v1281
        %v1307 = vunpack.c.l.b16 %v1282
        %v1308 = vunpack.c.l.b16 %v1283
        %v1309 = vpack.c.b16 %v1302, %v1301
        %v1310 = vpack.c.b16 %v1304, %v1303
        %v1311 = vpack.c.b16 %v1306, %v1305
        %v1312 = vpack.c.b16 %v1308, %v1307
        %v1321 = vunpack.c.l.b16 %v1285
        %v1322 = vunpack.c.l.b16 %v1286
        %v1323 = vunpack.c.l.b16 %v1287
        %v1324 = vunpack.c.l.b16 %v1288
        %v1325 = vunpack.c.l.b16 %v1289
        %v1326 = vunpack.c.l.b16 %v1290
        %v1327 = vunpack.c.l.b16 %v1291
        %v1328 = vunpack.c.l.b16 %v1292
        %v1329 = vpack.c.b16 %v1322, %v1321
        %v1330 = vpack.c.b16 %v1324, %v1323
        %v1331 = vpack.c.b16 %v1326, %v1325
        %v1332 = vpack.c.b16 %v1328, %v1327
        %v1338 = vsel %vm479, %v1309, 0
        %v1341 = vsel %vm479, %v1310, 0
        %v1344 = vsel %vm479, %v1311, 0
        %v1347 = vsel %vm479, %v1312, 0
        %1349 = vmatpush.bf16.msra.mxu0 0
        %1350 = vmatpush.bf16.msra.mxu0 0
        %1351 = vmatpush.bf16.msra.mxu0 0
        %1352 = vmatpush.bf16.msra.mxu0 0
        %1353 = vmatpush.bf16.msra.mxu0 %v1332
        %1354 = vmatpush.bf16.msra.mxu0 %v1331
        %1355 = vmatpush.bf16.msra.mxu0 %v1330
        %1356 = vmatpush.bf16.msra.mxu0 %v1329
        %1357 = vmatmul.bf16.gmra.mxu0 %v1338
        %v1358 = vpop.f32.mrf.mxu0
        %v1359 = vadd.f32 0.0, %v1358
        %v1360 = vpop.f32.mrf.mxu0
        %v1361 = vadd.f32 0.0, %v1360
        %1362 = vmatmul.bf16.gmra.mxu0 %v1341
        %v1363 = vpop.f32.mrf.mxu0
        %v1364 = vadd.f32 0.0, %v1363
        %v1365 = vpop.f32.mrf.mxu0
        %v1366 = vadd.f32 0.0, %v1365
        %1367 = vmatmul.bf16.gmra.mxu0 %v1344
        %v1368 = vpop.f32.mrf.mxu0
        %v1369 = vadd.f32 0.0, %v1368
        %v1370 = vpop.f32.mrf.mxu0
        %v1371 = vadd.f32 0.0, %v1370
        %1372 = vmatmul.bf16.gmra.mxu0 %v1347
        %v1373 = vpop.f32.mrf.mxu0
        %v1374 = vadd.f32 0.0, %v1373
        %v1375 = vpop.f32.mrf.mxu0
        %v1376 = vadd.f32 0.0, %v1375
        %1377 = vdwg.mxu0
        %v1378 = vadd.f32 %v1267, %v1359
        %v1379 = vadd.f32 %v1268, %v1361
        %v1380 = vadd.f32 %v1269, %v1364
        %v1381 = vadd.f32 %v1270, %v1366
        %v1382 = vadd.f32 %v1271, %v1369
        %v1383 = vadd.f32 %v1272, %v1371
        %v1384 = vadd.f32 %v1273, %v1374
        %v1385 = vadd.f32 %v1274, %v1376
        %s1386 = scalar_lea.vmem %s390, 80
        %v1387 = vld [vmem:[%s1386] sm:$0xf]
        %v1388 = vld [vmem:[%s1386 + $0x8] sm:$0xf]
        %v1389 = vld [vmem:[%s1386 + $0x10] sm:$0xf]
        %v1390 = vld [vmem:[%s1386 + $0x18] sm:$0xf]
        %v1391 = vld [vmem:[%s1386 + $0x20] sm:$0xf]
        %v1392 = vld [vmem:[%s1386 + $0x28] sm:$0xf]
        %v1393 = vld [vmem:[%s1386 + $0x30] sm:$0xf]
        %v1394 = vld [vmem:[%s1386 + $0x38] sm:$0xf]
        %s1395 = scalar_lea.vmem %s1, 224
        %v1396 = vld [vmem:[%s1395] sm:$0xf]
        %v1397 = vld [vmem:[%s1395 + $0x4] sm:$0xf]
        %v1398 = vld [vmem:[%s1395 + $0x8] sm:$0xf]
        %v1399 = vld [vmem:[%s1395 + $0xc] sm:$0xf]
        %v1400 = vld [vmem:[%s1395 + $0x10] sm:$0xf]
        %v1401 = vld [vmem:[%s1395 + $0x14] sm:$0xf]
        %v1402 = vld [vmem:[%s1395 + $0x18] sm:$0xf]
        %v1403 = vld [vmem:[%s1395 + $0x1c] sm:$0xf]
        %v1412 = vunpack.c.l.b16 %v1387
        %v1413 = vunpack.c.l.b16 %v1388
        %v1414 = vunpack.c.l.b16 %v1389
        %v1415 = vunpack.c.l.b16 %v1390
        %v1416 = vunpack.c.l.b16 %v1391
        %v1417 = vunpack.c.l.b16 %v1392
        %v1418 = vunpack.c.l.b16 %v1393
        %v1419 = vunpack.c.l.b16 %v1394
        %v1420 = vpack.c.b16 %v1413, %v1412
        %v1421 = vpack.c.b16 %v1415, %v1414
        %v1422 = vpack.c.b16 %v1417, %v1416
        %v1423 = vpack.c.b16 %v1419, %v1418
        %v1432 = vunpack.c.l.b16 %v1396
        %v1433 = vunpack.c.l.b16 %v1397
        %v1434 = vunpack.c.l.b16 %v1398
        %v1435 = vunpack.c.l.b16 %v1399
        %v1436 = vunpack.c.l.b16 %v1400
        %v1437 = vunpack.c.l.b16 %v1401
        %v1438 = vunpack.c.l.b16 %v1402
        %v1439 = vunpack.c.l.b16 %v1403
        %v1440 = vpack.c.b16 %v1433, %v1432
        %v1441 = vpack.c.b16 %v1435, %v1434
        %v1442 = vpack.c.b16 %v1437, %v1436
        %v1443 = vpack.c.b16 %v1439, %v1438
        %v1449 = vsel %vm479, %v1420, 0
        %v1452 = vsel %vm479, %v1421, 0
        %v1455 = vsel %vm479, %v1422, 0
        %v1458 = vsel %vm479, %v1423, 0
        %1460 = vmatpush.bf16.msra.mxu0 0
        %1461 = vmatpush.bf16.msra.mxu0 0
        %1462 = vmatpush.bf16.msra.mxu0 0
        %1463 = vmatpush.bf16.msra.mxu0 0
        %1464 = vmatpush.bf16.msra.mxu0 %v1443
        %1465 = vmatpush.bf16.msra.mxu0 %v1442
        %1466 = vmatpush.bf16.msra.mxu0 %v1441
        %1467 = vmatpush.bf16.msra.mxu0 %v1440
        %1468 = vmatmul.bf16.gmra.mxu0 %v1449
        %v1469 = vpop.f32.mrf.mxu0
        %v1470 = vadd.f32 0.0, %v1469
        %v1471 = vpop.f32.mrf.mxu0
        %v1472 = vadd.f32 0.0, %v1471
        %1473 = vmatmul.bf16.gmra.mxu0 %v1452
        %v1474 = vpop.f32.mrf.mxu0
        %v1475 = vadd.f32 0.0, %v1474
        %v1476 = vpop.f32.mrf.mxu0
        %v1477 = vadd.f32 0.0, %v1476
        %1478 = vmatmul.bf16.gmra.mxu0 %v1455
        %v1479 = vpop.f32.mrf.mxu0
        %v1480 = vadd.f32 0.0, %v1479
        %v1481 = vpop.f32.mrf.mxu0
        %v1482 = vadd.f32 0.0, %v1481
        %1483 = vmatmul.bf16.gmra.mxu0 %v1458
        %v1484 = vpop.f32.mrf.mxu0
        %v1485 = vadd.f32 0.0, %v1484
        %v1486 = vpop.f32.mrf.mxu0
        %v1487 = vadd.f32 0.0, %v1486
        %1488 = vdwg.mxu0
        %v1489 = vadd.f32 %v1378, %v1470
        %v1490 = vadd.f32 %v1379, %v1472
        %v1491 = vadd.f32 %v1380, %v1475
        %v1492 = vadd.f32 %v1381, %v1477
        %v1493 = vadd.f32 %v1382, %v1480
        %v1494 = vadd.f32 %v1383, %v1482
        %v1495 = vadd.f32 %v1384, %v1485
        %v1496 = vadd.f32 %v1385, %v1487
        %v1497 = vld [vmem:[%s1275] sm:$0xf]
        %v1498 = vld [vmem:[%s1275 + $0x4] sm:$0x1]
        %v1499 = vld [vmem:[%s1275 + $0x8] sm:$0xf]
        %v1500 = vld [vmem:[%s1275 + $0xc] sm:$0x1]
        %v1501 = vld [vmem:[%s1275 + $0x10] sm:$0xf]
        %v1502 = vld [vmem:[%s1275 + $0x14] sm:$0x1]
        %v1503 = vld [vmem:[%s1275 + $0x18] sm:$0xf]
        %v1504 = vld [vmem:[%s1275 + $0x1c] sm:$0x1]
        %v1505 = vld [vmem:[%s1275 + $0x20] sm:$0xf]
        %v1506 = vld [vmem:[%s1275 + $0x24] sm:$0x1]
        %v1507 = vld [vmem:[%s1275 + $0x28] sm:$0xf]
        %v1508 = vld [vmem:[%s1275 + $0x2c] sm:$0x1]
        %v1509 = vld [vmem:[%s1275 + $0x30] sm:$0xf]
        %v1510 = vld [vmem:[%s1275 + $0x34] sm:$0x1]
        %v1511 = vld [vmem:[%s1275 + $0x38] sm:$0xf]
        %v1512 = vld [vmem:[%s1275 + $0x3c] sm:$0x1]
        %v1514 = vshrl.u32 %v1497, 16
        %v1516 = vrot.slane %v1514, 4
        %v1517 = vshll.u32 %v1497, 16
        %v1519 = vrot.slane %v1517, 5
        %v1520 = vor.u32 %v1516, %v1519
        %v1521 = vrot.slane %v1520, 4
        %v1523 = vshll.u32 %v1498, 16
        %v1525 = vrot.slane %v1523, 5
        %v1526 = vsel %vm624, %v1521, %v1525
        %v1528 = vshrl.u32 %v1499, 16
        %v1530 = vrot.slane %v1528, 4
        %v1531 = vshll.u32 %v1499, 16
        %v1533 = vrot.slane %v1531, 5
        %v1534 = vor.u32 %v1530, %v1533
        %v1535 = vrot.slane %v1534, 4
        %v1537 = vshll.u32 %v1500, 16
        %v1539 = vrot.slane %v1537, 5
        %v1540 = vsel %vm624, %v1535, %v1539
        %v1542 = vshrl.u32 %v1501, 16
        %v1544 = vrot.slane %v1542, 4
        %v1545 = vshll.u32 %v1501, 16
        %v1547 = vrot.slane %v1545, 5
        %v1548 = vor.u32 %v1544, %v1547
        %v1549 = vrot.slane %v1548, 4
        %v1551 = vshll.u32 %v1502, 16
        %v1553 = vrot.slane %v1551, 5
        %v1554 = vsel %vm624, %v1549, %v1553
        %v1556 = vshrl.u32 %v1503, 16
        %v1558 = vrot.slane %v1556, 4
        %v1559 = vshll.u32 %v1503, 16
        %v1561 = vrot.slane %v1559, 5
        %v1562 = vor.u32 %v1558, %v1561
        %v1563 = vrot.slane %v1562, 4
        %v1565 = vshll.u32 %v1504, 16
        %v1567 = vrot.slane %v1565, 5
        %v1568 = vsel %vm624, %v1563, %v1567
        %v1570 = vshrl.u32 %v1505, 16
        %v1572 = vrot.slane %v1570, 4
        %v1573 = vshll.u32 %v1505, 16
        %v1575 = vrot.slane %v1573, 5
        %v1576 = vor.u32 %v1572, %v1575
        %v1577 = vrot.slane %v1576, 4
        %v1579 = vshll.u32 %v1506, 16
        %v1581 = vrot.slane %v1579, 5
        %v1582 = vsel %vm624, %v1577, %v1581
        %v1584 = vshrl.u32 %v1507, 16
        %v1586 = vrot.slane %v1584, 4
        %v1587 = vshll.u32 %v1507, 16
        %v1589 = vrot.slane %v1587, 5
        %v1590 = vor.u32 %v1586, %v1589
        %v1591 = vrot.slane %v1590, 4
        %v1593 = vshll.u32 %v1508, 16
        %v1595 = vrot.slane %v1593, 5
        %v1596 = vsel %vm624, %v1591, %v1595
        %v1598 = vshrl.u32 %v1509, 16
        %v1600 = vrot.slane %v1598, 4
        %v1601 = vshll.u32 %v1509, 16
        %v1603 = vrot.slane %v1601, 5
        %v1604 = vor.u32 %v1600, %v1603
        %v1605 = vrot.slane %v1604, 4
        %v1607 = vshll.u32 %v1510, 16
        %v1609 = vrot.slane %v1607, 5
        %v1610 = vsel %vm624, %v1605, %v1609
        %v1612 = vshrl.u32 %v1511, 16
        %v1614 = vrot.slane %v1612, 4
        %v1615 = vshll.u32 %v1511, 16
        %v1617 = vrot.slane %v1615, 5
        %v1618 = vor.u32 %v1614, %v1617
        %v1619 = vrot.slane %v1618, 4
        %v1621 = vshll.u32 %v1512, 16
        %v1623 = vrot.slane %v1621, 5
        %v1624 = vsel %vm624, %v1619, %v1623
        %s1625 = scalar_lea.vmem %s1, 256
        %v1626 = vld [vmem:[%s1625] sm:$0xf]
        %v1627 = vld [vmem:[%s1625 + $0x4] sm:$0xf]
        %v1628 = vld [vmem:[%s1625 + $0x8] sm:$0xf]
        %v1629 = vld [vmem:[%s1625 + $0xc] sm:$0xf]
        %v1630 = vld [vmem:[%s1625 + $0x10] sm:$0xf]
        %v1631 = vld [vmem:[%s1625 + $0x14] sm:$0xf]
        %v1632 = vld [vmem:[%s1625 + $0x18] sm:$0xf]
        %v1633 = vld [vmem:[%s1625 + $0x1c] sm:$0xf]
        %v1634 = vunpack.c.l.b16 %v1526
        %v1635 = vunpack.c.l.b16 %v1540
        %v1636 = vunpack.c.l.b16 %v1554
        %v1637 = vunpack.c.l.b16 %v1568
        %v1638 = vunpack.c.l.b16 %v1582
        %v1639 = vunpack.c.l.b16 %v1596
        %v1640 = vunpack.c.l.b16 %v1610
        %v1641 = vunpack.c.l.b16 %v1624
        %v1642 = vpack.c.b16 %v1635, %v1634
        %v1643 = vpack.c.b16 %v1637, %v1636
        %v1644 = vpack.c.b16 %v1639, %v1638
        %v1645 = vpack.c.b16 %v1641, %v1640
        %v1654 = vunpack.c.l.b16 %v1626
        %v1655 = vunpack.c.l.b16 %v1627
        %v1656 = vunpack.c.l.b16 %v1628
        %v1657 = vunpack.c.l.b16 %v1629
        %v1658 = vunpack.c.l.b16 %v1630
        %v1659 = vunpack.c.l.b16 %v1631
        %v1660 = vunpack.c.l.b16 %v1632
        %v1661 = vunpack.c.l.b16 %v1633
        %v1662 = vpack.c.b16 %v1655, %v1654
        %v1663 = vpack.c.b16 %v1657, %v1656
        %v1664 = vpack.c.b16 %v1659, %v1658
        %v1665 = vpack.c.b16 %v1661, %v1660
        %v1671 = vsel %vm479, %v1642, 0
        %v1674 = vsel %vm479, %v1643, 0
        %v1677 = vsel %vm479, %v1644, 0
        %v1680 = vsel %vm479, %v1645, 0
        %1682 = vmatpush.bf16.msra.mxu0 0
        %1683 = vmatpush.bf16.msra.mxu0 0
        %1684 = vmatpush.bf16.msra.mxu0 0
        %1685 = vmatpush.bf16.msra.mxu0 0
        %1686 = vmatpush.bf16.msra.mxu0 %v1665
        %1687 = vmatpush.bf16.msra.mxu0 %v1664
        %1688 = vmatpush.bf16.msra.mxu0 %v1663
        %1689 = vmatpush.bf16.msra.mxu0 %v1662
        %1690 = vmatmul.bf16.gmra.mxu0 %v1671
        %v1691 = vpop.f32.mrf.mxu0
        %v1692 = vadd.f32 0.0, %v1691
        %v1693 = vpop.f32.mrf.mxu0
        %v1694 = vadd.f32 0.0, %v1693
        %1695 = vmatmul.bf16.gmra.mxu0 %v1674
        %v1696 = vpop.f32.mrf.mxu0
        %v1697 = vadd.f32 0.0, %v1696
        %v1698 = vpop.f32.mrf.mxu0
        %v1699 = vadd.f32 0.0, %v1698
        %1700 = vmatmul.bf16.gmra.mxu0 %v1677
        %v1701 = vpop.f32.mrf.mxu0
        %v1702 = vadd.f32 0.0, %v1701
        %v1703 = vpop.f32.mrf.mxu0
        %v1704 = vadd.f32 0.0, %v1703
        %1705 = vmatmul.bf16.gmra.mxu0 %v1680
        %v1706 = vpop.f32.mrf.mxu0
        %v1707 = vadd.f32 0.0, %v1706
        %v1708 = vpop.f32.mrf.mxu0
        %v1709 = vadd.f32 0.0, %v1708
        %1710 = vdwg.mxu0
        %v1711 = vadd.f32 %v1489, %v1692
        %v1712 = vadd.f32 %v1490, %v1694
        %v1713 = vadd.f32 %v1491, %v1697
        %v1714 = vadd.f32 %v1492, %v1699
        %v1715 = vadd.f32 %v1493, %v1702
        %v1716 = vadd.f32 %v1494, %v1704
        %v1717 = vadd.f32 %v1495, %v1707
        %v1718 = vadd.f32 %v1496, %v1709
        %v1719 = vld [vmem:[%s2] sm:$0x1]
        %v1721 = vperm.slane %v1719, 0
        %v1723 = vadd.f32 %v1711, %v1721
        %v1724 = vadd.f32 %v1712, %v1721
        %v1725 = vadd.f32 %v1713, %v1721
        %v1726 = vadd.f32 %v1714, %v1721
        %v1727 = vadd.f32 %v1715, %v1721
        %v1728 = vadd.f32 %v1716, %v1721
        %v1729 = vadd.f32 %v1717, %v1721
        %v1730 = vadd.f32 %v1718, %v1721
        %v1731 = vmax.f32 %v1723, 0.0
        %v1732 = vmax.f32 %v1724, 0.0
        %v1733 = vmax.f32 %v1725, 0.0
        %v1734 = vmax.f32 %v1726, 0.0
        %v1735 = vmax.f32 %v1727, 0.0
        %v1736 = vmax.f32 %v1728, 0.0
        %v1737 = vmax.f32 %v1729, 0.0
        %v1738 = vmax.f32 %v1730, 0.0
        %v1739 = vld [vmem:[%s393] sm:$0x1]
        %v1741 = vperm.slane %v1739, 0
        %v1743 = vmul.f32 %v1731, %v1741
        %v1744 = vmul.f32 %v1732, %v1741
        %v1745 = vmul.f32 %v1733, %v1741
        %v1746 = vmul.f32 %v1734, %v1741
        %v1747 = vmul.f32 %v1735, %v1741
        %v1748 = vmul.f32 %v1736, %v1741
        %v1749 = vmul.f32 %v1737, %v1741
        %v1750 = vmul.f32 %v1738, %v1741
        %v1751 = vld [vmem:[%s7] sm:$0xf]
        %v1752 = vld [vmem:[%s7 + $0x4] sm:$0xf]
        %v1753 = vld [vmem:[%s7 + $0x8] sm:$0xf]
        %v1754 = vld [vmem:[%s7 + $0xc] sm:$0xf]
        %v1755 = vld [vmem:[%s7 + $0x10] sm:$0xf]
        %v1756 = vld [vmem:[%s7 + $0x14] sm:$0xf]
        %v1757 = vld [vmem:[%s7 + $0x18] sm:$0xf]
        %v1758 = vld [vmem:[%s7 + $0x1c] sm:$0xf]
        %v1759 = vld [vmem:[%s8] sm:$0x1]
        %v1761 = vperm.slane %v1759, 0
        %v1771 = vunpack.c.l.b16 %v1751
        %v1772 = vunpack.c.l.b16 %v1752
        %v1773 = vunpack.c.l.b16 %v1753
        %v1774 = vunpack.c.l.b16 %v1754
        %v1775 = vunpack.c.l.b16 %v1755
        %v1776 = vunpack.c.l.b16 %v1756
        %v1777 = vunpack.c.l.b16 %v1757
        %v1778 = vunpack.c.l.b16 %v1758
        %v1779 = vpack.c.b16 %v1772, %v1771
        %v1780 = vpack.c.b16 %v1774, %v1773
        %v1781 = vpack.c.b16 %v1776, %v1775
        %v1782 = vpack.c.b16 %v1778, %v1777
        %1787 = vmatpush.bf16.msra.mxu0 0
        %1788 = vmatpush.bf16.msra.mxu0 0
        %1789 = vmatpush.bf16.msra.mxu0 0
        %1790 = vmatpush.bf16.msra.mxu0 0
        %1791 = vmatpush.bf16.msra.mxu0 %v1782
        %1792 = vmatpush.bf16.msra.mxu0 %v1781
        %1793 = vmatpush.bf16.msra.mxu0 %v1780
        %1794 = vmatpush.bf16.msra.mxu0 %v1779
        %1795 = vmatmul.bf16.gmra.mxu0 %v1005
        %v1796 = vpop.f32.mrf.mxu0
        %v1797 = vadd.f32 %v1761, %v1796
        %v1798 = vpop.f32.mrf.mxu0
        %v1799 = vadd.f32 %v1761, %v1798
        %1800 = vmatmul.bf16.gmra.mxu0 %v1008
        %v1801 = vpop.f32.mrf.mxu0
        %v1802 = vadd.f32 %v1761, %v1801
        %v1803 = vpop.f32.mrf.mxu0
        %v1804 = vadd.f32 %v1761, %v1803
        %1805 = vmatmul.bf16.gmra.mxu0 %v1011
        %v1806 = vpop.f32.mrf.mxu0
        %v1807 = vadd.f32 %v1761, %v1806
        %v1808 = vpop.f32.mrf.mxu0
        %v1809 = vadd.f32 %v1761, %v1808
        %1810 = vmatmul.bf16.gmra.mxu0 %v1014
        %v1811 = vpop.f32.mrf.mxu0
        %v1812 = vadd.f32 %v1761, %v1811
        %v1813 = vpop.f32.mrf.mxu0
        %v1814 = vadd.f32 %v1761, %v1813
        %1815 = vdwg.mxu0
        %v1816 = vld [vmem:[%s399] sm:$0x1]
        %v1818 = vperm.slane %v1816, 0
        %v1820 = vmul.f32 %v1797, %v1818
        %v1821 = vmul.f32 %v1799, %v1818
        %v1822 = vmul.f32 %v1802, %v1818
        %v1823 = vmul.f32 %v1804, %v1818
        %v1824 = vmul.f32 %v1807, %v1818
        %v1825 = vmul.f32 %v1809, %v1818
        %v1826 = vmul.f32 %v1812, %v1818
        %v1827 = vmul.f32 %v1814, %v1818
        %1828 = vst [vmem:[#allocation2] sm:$0xf] 0
        %1829 = vst [vmem:[#allocation2 + $0x4] sm:$0x1] 0
        %1830 = vst [vmem:[#allocation2 + $0x8] sm:$0xf] 0
        %1831 = vst [vmem:[#allocation2 + $0xc] sm:$0x1] 0
        %1832 = vst [vmem:[#allocation2 + $0x10] sm:$0xf] 0
        %1833 = vst [vmem:[#allocation2 + $0x14] sm:$0x1] 0
        %1834 = vst [vmem:[#allocation2 + $0x18] sm:$0xf] 0
        %1835 = vst [vmem:[#allocation2 + $0x1c] sm:$0x1] 0
        %1836 = vst [vmem:[#allocation2 + $0x20] sm:$0xf] 0
        %1837 = vst [vmem:[#allocation2 + $0x24] sm:$0x1] 0
        %1838 = vst [vmem:[#allocation2 + $0x28] sm:$0xf] 0
        %1839 = vst [vmem:[#allocation2 + $0x2c] sm:$0x1] 0
        %1840 = vst [vmem:[#allocation2 + $0x30] sm:$0xf] 0
        %1841 = vst [vmem:[#allocation2 + $0x34] sm:$0x1] 0
        %1842 = vst [vmem:[#allocation2 + $0x38] sm:$0xf] 0
        %1843 = vst [vmem:[#allocation2 + $0x3c] sm:$0x1] 0
        %1844 = vst [vmem:[#allocation2 + $0x40] sm:$0xf] 0
        %1845 = vst [vmem:[#allocation2 + $0x44] sm:$0x1] 0
        %1846 = vst [vmem:[#allocation2 + $0x48] sm:$0xf] 0
        %1847 = vst [vmem:[#allocation2 + $0x4c] sm:$0x1] 0
        %v1848 = vpack.c.bf16 %v1743, %v1743
        %v1849 = vpack.c.bf16 %v1744, %v1744
        %v1850 = vpack.c.bf16 %v1745, %v1745
        %v1851 = vpack.c.bf16 %v1746, %v1746
        %v1852 = vpack.c.bf16 %v1747, %v1747
        %v1853 = vpack.c.bf16 %v1748, %v1748
        %v1854 = vpack.c.bf16 %v1749, %v1749
        %v1855 = vpack.c.bf16 %v1750, %v1750
        %v1857 = vshrl.u32 %v1848, 16
        %v1859 = vrot.slane %v1857, 7
        %v1860 = vshll.u32 %v1848, 16
        %v1862 = vor.u32 %v1859, %v1860
        %v1863 = vrot.slane %v1859, 4
        %v1865 = vshrl.u32 %v1849, 16
        %v1867 = vrot.slane %v1865, 7
        %v1868 = vshll.u32 %v1849, 16
        %v1870 = vor.u32 %v1867, %v1868
        %v1871 = vrot.slane %v1867, 4
        %v1873 = vshrl.u32 %v1850, 16
        %v1875 = vrot.slane %v1873, 7
        %v1876 = vshll.u32 %v1850, 16
        %v1878 = vor.u32 %v1875, %v1876
        %v1879 = vrot.slane %v1875, 4
        %v1881 = vshrl.u32 %v1851, 16
        %v1883 = vrot.slane %v1881, 7
        %v1884 = vshll.u32 %v1851, 16
        %v1886 = vor.u32 %v1883, %v1884
        %v1887 = vrot.slane %v1883, 4
        %v1889 = vshrl.u32 %v1852, 16
        %v1891 = vrot.slane %v1889, 7
        %v1892 = vshll.u32 %v1852, 16
        %v1894 = vor.u32 %v1891, %v1892
        %v1895 = vrot.slane %v1891, 4
        %v1897 = vshrl.u32 %v1853, 16
        %v1899 = vrot.slane %v1897, 7
        %v1900 = vshll.u32 %v1853, 16
        %v1902 = vor.u32 %v1899, %v1900
        %v1903 = vrot.slane %v1899, 4
        %v1905 = vshrl.u32 %v1854, 16
        %v1907 = vrot.slane %v1905, 7
        %v1908 = vshll.u32 %v1854, 16
        %v1910 = vor.u32 %v1907, %v1908
        %v1911 = vrot.slane %v1907, 4
        %v1913 = vshrl.u32 %v1855, 16
        %v1915 = vrot.slane %v1913, 7
        %v1916 = vshll.u32 %v1855, 16
        %v1918 = vor.u32 %v1915, %v1916
        %v1919 = vrot.slane %v1915, 4
        %s1936 = scalar_lea.vmem [#allocation2], 8
        %vm1937 = vcmask 1043456
        %vm1938 = vsmask.f32 7938
        %vm1939 = vmand %vm1937, %vm1938
        %v1940 = vld [vmem:[%s1936] sm:$0xf]
        %v1941 = vsel %vm1939, %v1862, %v1940
        %1942 = vst [vmem:[%s1936] sm:$0xf] %v1941
        %vm1943 = vcmask 1040384
        %vm1944 = vsmask.f32 256
        %vm1945 = vmand %vm1943, %vm1944
        %v1946 = vld [vmem:[%s1936 + $0x4] sm:$0x1]
        %v1947 = vsel %vm1945, %v1863, %v1946
        %1948 = vst [vmem:[%s1936 + $0x4] sm:$0x1] %v1947
        %v1949 = vld [vmem:[%s1936 + $0x8] sm:$0xf]
        %v1950 = vsel %vm1939, %v1870, %v1949
        %1951 = vst [vmem:[%s1936 + $0x8] sm:$0xf] %v1950
        %v1952 = vld [vmem:[%s1936 + $0xc] sm:$0x1]
        %v1953 = vsel %vm1945, %v1871, %v1952
        %1954 = vst [vmem:[%s1936 + $0xc] sm:$0x1] %v1953
        %v1955 = vld [vmem:[%s1936 + $0x10] sm:$0xf]
        %v1956 = vsel %vm1939, %v1878, %v1955
        %1957 = vst [vmem:[%s1936 + $0x10] sm:$0xf] %v1956
        %v1958 = vld [vmem:[%s1936 + $0x14] sm:$0x1]
        %v1959 = vsel %vm1945, %v1879, %v1958
        %1960 = vst [vmem:[%s1936 + $0x14] sm:$0x1] %v1959
        %v1961 = vld [vmem:[%s1936 + $0x18] sm:$0xf]
        %v1962 = vsel %vm1939, %v1886, %v1961
        %1963 = vst [vmem:[%s1936 + $0x18] sm:$0xf] %v1962
        %v1964 = vld [vmem:[%s1936 + $0x1c] sm:$0x1]
        %v1965 = vsel %vm1945, %v1887, %v1964
        %1966 = vst [vmem:[%s1936 + $0x1c] sm:$0x1] %v1965
        %v1967 = vld [vmem:[%s1936 + $0x20] sm:$0xf]
        %v1968 = vsel %vm1939, %v1894, %v1967
        %1969 = vst [vmem:[%s1936 + $0x20] sm:$0xf] %v1968
        %v1970 = vld [vmem:[%s1936 + $0x24] sm:$0x1]
        %v1971 = vsel %vm1945, %v1895, %v1970
        %1972 = vst [vmem:[%s1936 + $0x24] sm:$0x1] %v1971
        %v1973 = vld [vmem:[%s1936 + $0x28] sm:$0xf]
        %v1974 = vsel %vm1939, %v1902, %v1973
        %1975 = vst [vmem:[%s1936 + $0x28] sm:$0xf] %v1974
        %v1976 = vld [vmem:[%s1936 + $0x2c] sm:$0x1]
        %v1977 = vsel %vm1945, %v1903, %v1976
        %1978 = vst [vmem:[%s1936 + $0x2c] sm:$0x1] %v1977
        %v1979 = vld [vmem:[%s1936 + $0x30] sm:$0xf]
        %v1980 = vsel %vm1939, %v1910, %v1979
        %1981 = vst [vmem:[%s1936 + $0x30] sm:$0xf] %v1980
        %v1982 = vld [vmem:[%s1936 + $0x34] sm:$0x1]
        %v1983 = vsel %vm1945, %v1911, %v1982
        %1984 = vst [vmem:[%s1936 + $0x34] sm:$0x1] %v1983
        %v1985 = vld [vmem:[%s1936 + $0x38] sm:$0xf]
        %v1986 = vsel %vm1939, %v1918, %v1985
        %1987 = vst [vmem:[%s1936 + $0x38] sm:$0xf] %v1986
        %v1988 = vld [vmem:[%s1936 + $0x3c] sm:$0x1]
        %v1989 = vsel %vm1945, %v1919, %v1988
        %1990 = vst [vmem:[%s1936 + $0x3c] sm:$0x1] %v1989
        %v1991 = vld [vmem:[#allocation2] sm:$0xf]
        %v1992 = vld [vmem:[#allocation2 + $0x8] sm:$0xf]
        %v1993 = vld [vmem:[#allocation2 + $0x10] sm:$0xf]
        %v1994 = vld [vmem:[#allocation2 + $0x18] sm:$0xf]
        %v1995 = vld [vmem:[#allocation2 + $0x20] sm:$0xf]
        %v1996 = vld [vmem:[#allocation2 + $0x28] sm:$0xf]
        %v1997 = vld [vmem:[#allocation2 + $0x30] sm:$0xf]
        %v1998 = vld [vmem:[#allocation2 + $0x38] sm:$0xf]
        %v1999 = vld [vmem:[%s3] sm:$0xf]
        %v2000 = vld [vmem:[%s3 + $0x4] sm:$0xf]
        %v2001 = vld [vmem:[%s3 + $0x8] sm:$0xf]
        %v2002 = vld [vmem:[%s3 + $0xc] sm:$0xf]
        %v2003 = vld [vmem:[%s3 + $0x10] sm:$0xf]
        %v2004 = vld [vmem:[%s3 + $0x14] sm:$0xf]
        %v2005 = vld [vmem:[%s3 + $0x18] sm:$0xf]
        %v2006 = vld [vmem:[%s3 + $0x1c] sm:$0xf]
        %v2007 = vld [vmem:[%s3 + $0x20] sm:$0xf]
        %v2008 = vld [vmem:[%s3 + $0x24] sm:$0xf]
        %v2009 = vld [vmem:[%s3 + $0x28] sm:$0xf]
        %v2010 = vld [vmem:[%s3 + $0x2c] sm:$0xf]
        %v2011 = vld [vmem:[%s3 + $0x30] sm:$0xf]
        %v2012 = vld [vmem:[%s3 + $0x34] sm:$0xf]
        %v2013 = vld [vmem:[%s3 + $0x38] sm:$0xf]
        %v2014 = vld [vmem:[%s3 + $0x3c] sm:$0xf]
        %v2015 = vld [vmem:[#allocation2 + $0x4] sm:$0x1]
        %v2016 = vld [vmem:[#allocation2 + $0xc] sm:$0x1]
        %v2017 = vld [vmem:[#allocation2 + $0x14] sm:$0x1]
        %v2018 = vld [vmem:[#allocation2 + $0x1c] sm:$0x1]
        %v2019 = vld [vmem:[#allocation2 + $0x24] sm:$0x1]
        %v2020 = vld [vmem:[#allocation2 + $0x2c] sm:$0x1]
        %v2021 = vld [vmem:[#allocation2 + $0x34] sm:$0x1]
        %v2022 = vld [vmem:[#allocation2 + $0x3c] sm:$0x1]
        %v2024 = vshrl.u32 %v1991, 16
        %v2026 = vrot.slane %v2024, 4
        %v2027 = vshll.u32 %v1991, 16
        %v2029 = vrot.slane %v2027, 5
        %v2030 = vor.u32 %v2026, %v2029
        %v2031 = vrot.slane %v2030, 4
        %v2033 = vshll.u32 %v2015, 16
        %v2035 = vrot.slane %v2033, 5
        %v2036 = vsel %vm624, %v2031, %v2035
        %v2038 = vshrl.u32 %v1992, 16
        %v2040 = vrot.slane %v2038, 4
        %v2041 = vshll.u32 %v1992, 16
        %v2043 = vrot.slane %v2041, 5
        %v2044 = vor.u32 %v2040, %v2043
        %v2045 = vrot.slane %v2044, 4
        %v2047 = vshll.u32 %v2016, 16
        %v2049 = vrot.slane %v2047, 5
        %v2050 = vsel %vm624, %v2045, %v2049
        %v2052 = vshrl.u32 %v1993, 16
        %v2054 = vrot.slane %v2052, 4
        %v2055 = vshll.u32 %v1993, 16
        %v2057 = vrot.slane %v2055, 5
        %v2058 = vor.u32 %v2054, %v2057
        %v2059 = vrot.slane %v2058, 4
        %v2061 = vshll.u32 %v2017, 16
        %v2063 = vrot.slane %v2061, 5
        %v2064 = vsel %vm624, %v2059, %v2063
        %v2066 = vshrl.u32 %v1994, 16
        %v2068 = vrot.slane %v2066, 4
        %v2069 = vshll.u32 %v1994, 16
        %v2071 = vrot.slane %v2069, 5
        %v2072 = vor.u32 %v2068, %v2071
        %v2073 = vrot.slane %v2072, 4
        %v2075 = vshll.u32 %v2018, 16
        %v2077 = vrot.slane %v2075, 5
        %v2078 = vsel %vm624, %v2073, %v2077
        %v2080 = vshrl.u32 %v1995, 16
        %v2082 = vrot.slane %v2080, 4
        %v2083 = vshll.u32 %v1995, 16
        %v2085 = vrot.slane %v2083, 5
        %v2086 = vor.u32 %v2082, %v2085
        %v2087 = vrot.slane %v2086, 4
        %v2089 = vshll.u32 %v2019, 16
        %v2091 = vrot.slane %v2089, 5
        %v2092 = vsel %vm624, %v2087, %v2091
        %v2094 = vshrl.u32 %v1996, 16
        %v2096 = vrot.slane %v2094, 4
        %v2097 = vshll.u32 %v1996, 16
        %v2099 = vrot.slane %v2097, 5
        %v2100 = vor.u32 %v2096, %v2099
        %v2101 = vrot.slane %v2100, 4
        %v2103 = vshll.u32 %v2020, 16
        %v2105 = vrot.slane %v2103, 5
        %v2106 = vsel %vm624, %v2101, %v2105
        %v2108 = vshrl.u32 %v1997, 16
        %v2110 = vrot.slane %v2108, 4
        %v2111 = vshll.u32 %v1997, 16
        %v2113 = vrot.slane %v2111, 5
        %v2114 = vor.u32 %v2110, %v2113
        %v2115 = vrot.slane %v2114, 4
        %v2117 = vshll.u32 %v2021, 16
        %v2119 = vrot.slane %v2117, 5
        %v2120 = vsel %vm624, %v2115, %v2119
        %v2122 = vshrl.u32 %v1998, 16
        %v2124 = vrot.slane %v2122, 4
        %v2125 = vshll.u32 %v1998, 16
        %v2127 = vrot.slane %v2125, 5
        %v2128 = vor.u32 %v2124, %v2127
        %v2129 = vrot.slane %v2128, 4
        %v2131 = vshll.u32 %v2022, 16
        %v2133 = vrot.slane %v2131, 5
        %v2134 = vsel %vm624, %v2129, %v2133
        %s2135 = scalar_lea.vmem %s3, 64
        %v2136 = vld [vmem:[%s2135] sm:$0xf]
        %v2137 = vld [vmem:[%s2135 + $0x4] sm:$0xf]
        %v2138 = vld [vmem:[%s2135 + $0x8] sm:$0xf]
        %v2139 = vld [vmem:[%s2135 + $0xc] sm:$0xf]
        %v2140 = vld [vmem:[%s2135 + $0x10] sm:$0xf]
        %v2141 = vld [vmem:[%s2135 + $0x14] sm:$0xf]
        %v2142 = vld [vmem:[%s2135 + $0x18] sm:$0xf]
        %v2143 = vld [vmem:[%s2135 + $0x1c] sm:$0xf]
        %v2144 = vld [vmem:[%s2135 + $0x20] sm:$0xf]
        %v2145 = vld [vmem:[%s2135 + $0x24] sm:$0xf]
        %v2146 = vld [vmem:[%s2135 + $0x28] sm:$0xf]
        %v2147 = vld [vmem:[%s2135 + $0x2c] sm:$0xf]
        %v2148 = vld [vmem:[%s2135 + $0x30] sm:$0xf]
        %v2149 = vld [vmem:[%s2135 + $0x34] sm:$0xf]
        %v2150 = vld [vmem:[%s2135 + $0x38] sm:$0xf]
        %v2151 = vld [vmem:[%s2135 + $0x3c] sm:$0xf]
        %v2152 = vunpack.c.l.b16 %v2036
        %v2153 = vunpack.c.l.b16 %v2050
        %v2154 = vunpack.c.l.b16 %v2064
        %v2155 = vunpack.c.l.b16 %v2078
        %v2156 = vunpack.c.l.b16 %v2092
        %v2157 = vunpack.c.l.b16 %v2106
        %v2158 = vunpack.c.l.b16 %v2120
        %v2159 = vunpack.c.l.b16 %v2134
        %v2160 = vpack.c.b16 %v2153, %v2152
        %v2161 = vpack.c.b16 %v2155, %v2154
        %v2162 = vpack.c.b16 %v2157, %v2156
        %v2163 = vpack.c.b16 %v2159, %v2158
        %v2184 = vunpack.c.l.b16 %v2136
        %v2185 = vunpack.c.l.b16 %v2137
        %v2186 = vunpack.c.l.b16 %v2138
        %v2187 = vunpack.c.l.b16 %v2139
        %v2188 = vunpack.c.l.b16 %v2140
        %v2189 = vunpack.c.l.b16 %v2141
        %v2190 = vunpack.c.l.b16 %v2142
        %v2191 = vunpack.c.l.b16 %v2143
        %v2192 = vunpack.c.l.b16 %v2144
        %v2193 = vunpack.c.l.b16 %v2145
        %v2194 = vunpack.c.l.b16 %v2146
        %v2195 = vunpack.c.l.b16 %v2147
        %v2196 = vunpack.c.l.b16 %v2148
        %v2197 = vunpack.c.l.b16 %v2149
        %v2198 = vunpack.c.l.b16 %v2150
        %v2199 = vunpack.c.l.b16 %v2151
        %v2200 = vpack.c.b16 %v2185, %v2184
        %v2201 = vpack.c.b16 %v2187, %v2186
        %v2202 = vpack.c.b16 %v2189, %v2188
        %v2203 = vpack.c.b16 %v2191, %v2190
        %v2204 = vpack.c.b16 %v2193, %v2192
        %v2205 = vpack.c.b16 %v2195, %v2194
        %v2206 = vpack.c.b16 %v2197, %v2196
        %v2207 = vpack.c.b16 %v2199, %v2198
        %2216 = vmatpush.bf16.msra.mxu0 %v2207
        %2217 = vmatpush.bf16.msra.mxu0 %v2206
        %2218 = vmatpush.bf16.msra.mxu0 %v2205
        %2219 = vmatpush.bf16.msra.mxu0 %v2204
        %2220 = vmatpush.bf16.msra.mxu0 %v2203
        %2221 = vmatpush.bf16.msra.mxu0 %v2202
        %2222 = vmatpush.bf16.msra.mxu0 %v2201
        %2223 = vmatpush.bf16.msra.mxu0 %v2200
        %2224 = vmatmul.bf16.gmra.mxu0 %v2160
        %v2225 = vpop.f32.mrf.mxu0
        %v2226 = vadd.f32 0.0, %v2225
        %v2227 = vpop.f32.mrf.mxu0
        %v2228 = vadd.f32 0.0, %v2227
        %2229 = vmatmul.bf16.gmra.mxu0 %v2161
        %v2230 = vpop.f32.mrf.mxu0
        %v2231 = vadd.f32 0.0, %v2230
        %v2232 = vpop.f32.mrf.mxu0
        %v2233 = vadd.f32 0.0, %v2232
        %2234 = vmatmul.bf16.gmra.mxu0 %v2162
        %v2235 = vpop.f32.mrf.mxu0
        %v2236 = vadd.f32 0.0, %v2235
        %v2237 = vpop.f32.mrf.mxu0
        %v2238 = vadd.f32 0.0, %v2237
        %2239 = vmatmul.bf16.gmra.mxu0 %v2163
        %v2240 = vpop.f32.mrf.mxu0
        %v2241 = vadd.f32 0.0, %v2240
        %v2242 = vpop.f32.mrf.mxu0
        %v2243 = vadd.f32 0.0, %v2242
        %2244 = vdwg.mxu0
        %v2253 = vunpack.c.l.b16 %v1991
        %v2254 = vunpack.c.l.b16 %v1992
        %v2255 = vunpack.c.l.b16 %v1993
        %v2256 = vunpack.c.l.b16 %v1994
        %v2257 = vunpack.c.l.b16 %v1995
        %v2258 = vunpack.c.l.b16 %v1996
        %v2259 = vunpack.c.l.b16 %v1997
        %v2260 = vunpack.c.l.b16 %v1998
        %v2261 = vpack.c.b16 %v2254, %v2253
        %v2262 = vpack.c.b16 %v2256, %v2255
        %v2263 = vpack.c.b16 %v2258, %v2257
        %v2264 = vpack.c.b16 %v2260, %v2259
        %v2285 = vunpack.c.l.b16 %v1999
        %v2286 = vunpack.c.l.b16 %v2000
        %v2287 = vunpack.c.l.b16 %v2001
        %v2288 = vunpack.c.l.b16 %v2002
        %v2289 = vunpack.c.l.b16 %v2003
        %v2290 = vunpack.c.l.b16 %v2004
        %v2291 = vunpack.c.l.b16 %v2005
        %v2292 = vunpack.c.l.b16 %v2006
        %v2293 = vunpack.c.l.b16 %v2007
        %v2294 = vunpack.c.l.b16 %v2008
        %v2295 = vunpack.c.l.b16 %v2009
        %v2296 = vunpack.c.l.b16 %v2010
        %v2297 = vunpack.c.l.b16 %v2011
        %v2298 = vunpack.c.l.b16 %v2012
        %v2299 = vunpack.c.l.b16 %v2013
        %v2300 = vunpack.c.l.b16 %v2014
        %v2301 = vpack.c.b16 %v2286, %v2285
        %v2302 = vpack.c.b16 %v2288, %v2287
        %v2303 = vpack.c.b16 %v2290, %v2289
        %v2304 = vpack.c.b16 %v2292, %v2291
        %v2305 = vpack.c.b16 %v2294, %v2293
        %v2306 = vpack.c.b16 %v2296, %v2295
        %v2307 = vpack.c.b16 %v2298, %v2297
        %v2308 = vpack.c.b16 %v2300, %v2299
        %2317 = vmatpush.bf16.msra.mxu0 %v2308
        %2318 = vmatpush.bf16.msra.mxu0 %v2307
        %2319 = vmatpush.bf16.msra.mxu0 %v2306
        %2320 = vmatpush.bf16.msra.mxu0 %v2305
        %2321 = vmatpush.bf16.msra.mxu0 %v2304
        %2322 = vmatpush.bf16.msra.mxu0 %v2303
        %2323 = vmatpush.bf16.msra.mxu0 %v2302
        %2324 = vmatpush.bf16.msra.mxu0 %v2301
        %2325 = vmatmul.bf16.gmra.mxu0 %v2261
        %v2326 = vpop.f32.mrf.mxu0
        %v2327 = vadd.f32 %v2226, %v2326
        %v2328 = vpop.f32.mrf.mxu0
        %v2329 = vadd.f32 %v2228, %v2328
        %2330 = vmatmul.bf16.gmra.mxu0 %v2262
        %v2331 = vpop.f32.mrf.mxu0
        %v2332 = vadd.f32 %v2231, %v2331
        %v2333 = vpop.f32.mrf.mxu0
        %v2334 = vadd.f32 %v2233, %v2333
        %2335 = vmatmul.bf16.gmra.mxu0 %v2263
        %v2336 = vpop.f32.mrf.mxu0
        %v2337 = vadd.f32 %v2236, %v2336
        %v2338 = vpop.f32.mrf.mxu0
        %v2339 = vadd.f32 %v2238, %v2338
        %2340 = vmatmul.bf16.gmra.mxu0 %v2264
        %v2341 = vpop.f32.mrf.mxu0
        %v2342 = vadd.f32 %v2241, %v2341
        %v2343 = vpop.f32.mrf.mxu0
        %v2344 = vadd.f32 %v2243, %v2343
        %2345 = vdwg.mxu0
        %v2346 = vld [vmem:[#allocation2] sm:$0xe]
        %v2347 = vld [vmem:[#allocation2 + $0x8] sm:$0xe]
        %v2348 = vld [vmem:[#allocation2 + $0x10] sm:$0xe]
        %v2349 = vld [vmem:[#allocation2 + $0x18] sm:$0xe]
        %v2350 = vld [vmem:[#allocation2 + $0x20] sm:$0xe]
        %v2351 = vld [vmem:[#allocation2 + $0x28] sm:$0xe]
        %v2352 = vld [vmem:[#allocation2 + $0x30] sm:$0xe]
        %v2353 = vld [vmem:[#allocation2 + $0x38] sm:$0xe]
        %vm2370 = vcmask 1042432
        %vm2371 = vcmask 1046532
        %vm2372 = vmor %vm2370, %vm2371
        %v2373 = vrot.slane %v2346, 5
        %v2374 = vrot.slane %v2373, 4
        %v2375 = vrot.slane %v2015, 5
        %v2376 = vsel %vm2372, %v2374, %v2375
        %v2377 = vrot.slane %v2347, 5
        %v2378 = vrot.slane %v2377, 4
        %v2379 = vrot.slane %v2016, 5
        %v2380 = vsel %vm2372, %v2378, %v2379
        %v2381 = vrot.slane %v2348, 5
        %v2382 = vrot.slane %v2381, 4
        %v2383 = vrot.slane %v2017, 5
        %v2384 = vsel %vm2372, %v2382, %v2383
        %v2385 = vrot.slane %v2349, 5
        %v2386 = vrot.slane %v2385, 4
        %v2387 = vrot.slane %v2018, 5
        %v2388 = vsel %vm2372, %v2386, %v2387
        %v2389 = vrot.slane %v2350, 5
        %v2390 = vrot.slane %v2389, 4
        %v2391 = vrot.slane %v2019, 5
        %v2392 = vsel %vm2372, %v2390, %v2391
        %v2393 = vrot.slane %v2351, 5
        %v2394 = vrot.slane %v2393, 4
        %v2395 = vrot.slane %v2020, 5
        %v2396 = vsel %vm2372, %v2394, %v2395
        %v2397 = vrot.slane %v2352, 5
        %v2398 = vrot.slane %v2397, 4
        %v2399 = vrot.slane %v2021, 5
        %v2400 = vsel %vm2372, %v2398, %v2399
        %v2401 = vrot.slane %v2353, 5
        %v2402 = vrot.slane %v2401, 4
        %v2403 = vrot.slane %v2022, 5
        %v2404 = vsel %vm2372, %v2402, %v2403
        %s2405 = scalar_lea.vmem %s3, 128
        %v2406 = vld [vmem:[%s2405] sm:$0xf]
        %v2407 = vld [vmem:[%s2405 + $0x4] sm:$0xf]
        %v2408 = vld [vmem:[%s2405 + $0x8] sm:$0xf]
        %v2409 = vld [vmem:[%s2405 + $0xc] sm:$0xf]
        %v2410 = vld [vmem:[%s2405 + $0x10] sm:$0xf]
        %v2411 = vld [vmem:[%s2405 + $0x14] sm:$0xf]
        %v2412 = vld [vmem:[%s2405 + $0x18] sm:$0xf]
        %v2413 = vld [vmem:[%s2405 + $0x1c] sm:$0xf]
        %v2414 = vld [vmem:[%s2405 + $0x20] sm:$0xf]
        %v2415 = vld [vmem:[%s2405 + $0x24] sm:$0xf]
        %v2416 = vld [vmem:[%s2405 + $0x28] sm:$0xf]
        %v2417 = vld [vmem:[%s2405 + $0x2c] sm:$0xf]
        %v2418 = vld [vmem:[%s2405 + $0x30] sm:$0xf]
        %v2419 = vld [vmem:[%s2405 + $0x34] sm:$0xf]
        %v2420 = vld [vmem:[%s2405 + $0x38] sm:$0xf]
        %v2421 = vld [vmem:[%s2405 + $0x3c] sm:$0xf]
        %v2422 = vunpack.c.l.b16 %v2376
        %v2423 = vunpack.c.l.b16 %v2380
        %v2424 = vunpack.c.l.b16 %v2384
        %v2425 = vunpack.c.l.b16 %v2388
        %v2426 = vunpack.c.l.b16 %v2392
        %v2427 = vunpack.c.l.b16 %v2396
        %v2428 = vunpack.c.l.b16 %v2400
        %v2429 = vunpack.c.l.b16 %v2404
        %v2430 = vpack.c.b16 %v2423, %v2422
        %v2431 = vpack.c.b16 %v2425, %v2424
        %v2432 = vpack.c.b16 %v2427, %v2426
        %v2433 = vpack.c.b16 %v2429, %v2428
        %v2454 = vunpack.c.l.b16 %v2406
        %v2455 = vunpack.c.l.b16 %v2407
        %v2456 = vunpack.c.l.b16 %v2408
        %v2457 = vunpack.c.l.b16 %v2409
        %v2458 = vunpack.c.l.b16 %v2410
        %v2459 = vunpack.c.l.b16 %v2411
        %v2460 = vunpack.c.l.b16 %v2412
        %v2461 = vunpack.c.l.b16 %v2413
        %v2462 = vunpack.c.l.b16 %v2414
        %v2463 = vunpack.c.l.b16 %v2415
        %v2464 = vunpack.c.l.b16 %v2416
        %v2465 = vunpack.c.l.b16 %v2417
        %v2466 = vunpack.c.l.b16 %v2418
        %v2467 = vunpack.c.l.b16 %v2419
        %v2468 = vunpack.c.l.b16 %v2420
        %v2469 = vunpack.c.l.b16 %v2421
        %v2470 = vpack.c.b16 %v2455, %v2454
        %v2471 = vpack.c.b16 %v2457, %v2456
        %v2472 = vpack.c.b16 %v2459, %v2458
        %v2473 = vpack.c.b16 %v2461, %v2460
        %v2474 = vpack.c.b16 %v2463, %v2462
        %v2475 = vpack.c.b16 %v2465, %v2464
        %v2476 = vpack.c.b16 %v2467, %v2466
        %v2477 = vpack.c.b16 %v2469, %v2468
        %2486 = vmatpush.bf16.msra.mxu0 %v2477
        %2487 = vmatpush.bf16.msra.mxu0 %v2476
        %2488 = vmatpush.bf16.msra.mxu0 %v2475
        %2489 = vmatpush.bf16.msra.mxu0 %v2474
        %2490 = vmatpush.bf16.msra.mxu0 %v2473
        %2491 = vmatpush.bf16.msra.mxu0 %v2472
        %2492 = vmatpush.bf16.msra.mxu0 %v2471
        %2493 = vmatpush.bf16.msra.mxu0 %v2470
        %2494 = vmatmul.bf16.gmra.mxu0 %v2430
        %v2495 = vpop.f32.mrf.mxu0
        %v2496 = vadd.f32 0.0, %v2495
        %v2497 = vpop.f32.mrf.mxu0
        %v2498 = vadd.f32 0.0, %v2497
        %2499 = vmatmul.bf16.gmra.mxu0 %v2431
        %v2500 = vpop.f32.mrf.mxu0
        %v2501 = vadd.f32 0.0, %v2500
        %v2502 = vpop.f32.mrf.mxu0
        %v2503 = vadd.f32 0.0, %v2502
        %2504 = vmatmul.bf16.gmra.mxu0 %v2432
        %v2505 = vpop.f32.mrf.mxu0
        %v2506 = vadd.f32 0.0, %v2505
        %v2507 = vpop.f32.mrf.mxu0
        %v2508 = vadd.f32 0.0, %v2507
        %2509 = vmatmul.bf16.gmra.mxu0 %v2433
        %v2510 = vpop.f32.mrf.mxu0
        %v2511 = vadd.f32 0.0, %v2510
        %v2512 = vpop.f32.mrf.mxu0
        %v2513 = vadd.f32 0.0, %v2512
        %2514 = vdwg.mxu0
        %v2515 = vadd.f32 %v2327, %v2496
        %v2516 = vadd.f32 %v2329, %v2498
        %v2517 = vadd.f32 %v2332, %v2501
        %v2518 = vadd.f32 %v2334, %v2503
        %v2519 = vadd.f32 %v2337, %v2506
        %v2520 = vadd.f32 %v2339, %v2508
        %v2521 = vadd.f32 %v2342, %v2511
        %v2522 = vadd.f32 %v2344, %v2513
        %v2523 = vld [vmem:[%s1936] sm:$0xf]
        %v2524 = vld [vmem:[%s1936 + $0x8] sm:$0xf]
        %v2525 = vld [vmem:[%s1936 + $0x10] sm:$0xf]
        %v2526 = vld [vmem:[%s1936 + $0x18] sm:$0xf]
        %v2527 = vld [vmem:[%s1936 + $0x20] sm:$0xf]
        %v2528 = vld [vmem:[%s1936 + $0x28] sm:$0xf]
        %v2529 = vld [vmem:[%s1936 + $0x30] sm:$0xf]
        %v2530 = vld [vmem:[%s1936 + $0x38] sm:$0xf]
        %s2531 = scalar_lea.vmem %s3, 192
        %v2532 = vld [vmem:[%s2531] sm:$0xf]
        %v2533 = vld [vmem:[%s2531 + $0x4] sm:$0xf]
        %v2534 = vld [vmem:[%s2531 + $0x8] sm:$0xf]
        %v2535 = vld [vmem:[%s2531 + $0xc] sm:$0xf]
        %v2536 = vld [vmem:[%s2531 + $0x10] sm:$0xf]
        %v2537 = vld [vmem:[%s2531 + $0x14] sm:$0xf]
        %v2538 = vld [vmem:[%s2531 + $0x18] sm:$0xf]
        %v2539 = vld [vmem:[%s2531 + $0x1c] sm:$0xf]
        %v2540 = vld [vmem:[%s2531 + $0x20] sm:$0xf]
        %v2541 = vld [vmem:[%s2531 + $0x24] sm:$0xf]
        %v2542 = vld [vmem:[%s2531 + $0x28] sm:$0xf]
        %v2543 = vld [vmem:[%s2531 + $0x2c] sm:$0xf]
        %v2544 = vld [vmem:[%s2531 + $0x30] sm:$0xf]
        %v2545 = vld [vmem:[%s2531 + $0x34] sm:$0xf]
        %v2546 = vld [vmem:[%s2531 + $0x38] sm:$0xf]
        %v2547 = vld [vmem:[%s2531 + $0x3c] sm:$0xf]
        %v2556 = vunpack.c.l.b16 %v2523
        %v2557 = vunpack.c.l.b16 %v2524
        %v2558 = vunpack.c.l.b16 %v2525
        %v2559 = vunpack.c.l.b16 %v2526
        %v2560 = vunpack.c.l.b16 %v2527
        %v2561 = vunpack.c.l.b16 %v2528
        %v2562 = vunpack.c.l.b16 %v2529
        %v2563 = vunpack.c.l.b16 %v2530
        %v2564 = vpack.c.b16 %v2557, %v2556
        %v2565 = vpack.c.b16 %v2559, %v2558
        %v2566 = vpack.c.b16 %v2561, %v2560
        %v2567 = vpack.c.b16 %v2563, %v2562
        %v2588 = vunpack.c.l.b16 %v2532
        %v2589 = vunpack.c.l.b16 %v2533
        %v2590 = vunpack.c.l.b16 %v2534
        %v2591 = vunpack.c.l.b16 %v2535
        %v2592 = vunpack.c.l.b16 %v2536
        %v2593 = vunpack.c.l.b16 %v2537
        %v2594 = vunpack.c.l.b16 %v2538
        %v2595 = vunpack.c.l.b16 %v2539
        %v2596 = vunpack.c.l.b16 %v2540
        %v2597 = vunpack.c.l.b16 %v2541
        %v2598 = vunpack.c.l.b16 %v2542
        %v2599 = vunpack.c.l.b16 %v2543
        %v2600 = vunpack.c.l.b16 %v2544
        %v2601 = vunpack.c.l.b16 %v2545
        %v2602 = vunpack.c.l.b16 %v2546
        %v2603 = vunpack.c.l.b16 %v2547
        %v2604 = vpack.c.b16 %v2589, %v2588
        %v2605 = vpack.c.b16 %v2591, %v2590
        %v2606 = vpack.c.b16 %v2593, %v2592
        %v2607 = vpack.c.b16 %v2595, %v2594
        %v2608 = vpack.c.b16 %v2597, %v2596
        %v2609 = vpack.c.b16 %v2599, %v2598
        %v2610 = vpack.c.b16 %v2601, %v2600
        %v2611 = vpack.c.b16 %v2603, %v2602
        %2620 = vmatpush.bf16.msra.mxu0 %v2611
        %2621 = vmatpush.bf16.msra.mxu0 %v2610
        %2622 = vmatpush.bf16.msra.mxu0 %v2609
        %2623 = vmatpush.bf16.msra.mxu0 %v2608
        %2624 = vmatpush.bf16.msra.mxu0 %v2607
        %2625 = vmatpush.bf16.msra.mxu0 %v2606
        %2626 = vmatpush.bf16.msra.mxu0 %v2605
        %2627 = vmatpush.bf16.msra.mxu0 %v2604
        %2628 = vmatmul.bf16.gmra.mxu0 %v2564
        %v2629 = vpop.f32.mrf.mxu0
        %v2630 = vadd.f32 0.0, %v2629
        %v2631 = vpop.f32.mrf.mxu0
        %v2632 = vadd.f32 0.0, %v2631
        %2633 = vmatmul.bf16.gmra.mxu0 %v2565
        %v2634 = vpop.f32.mrf.mxu0
        %v2635 = vadd.f32 0.0, %v2634
        %v2636 = vpop.f32.mrf.mxu0
        %v2637 = vadd.f32 0.0, %v2636
        %2638 = vmatmul.bf16.gmra.mxu0 %v2566
        %v2639 = vpop.f32.mrf.mxu0
        %v2640 = vadd.f32 0.0, %v2639
        %v2641 = vpop.f32.mrf.mxu0
        %v2642 = vadd.f32 0.0, %v2641
        %2643 = vmatmul.bf16.gmra.mxu0 %v2567
        %v2644 = vpop.f32.mrf.mxu0
        %v2645 = vadd.f32 0.0, %v2644
        %v2646 = vpop.f32.mrf.mxu0
        %v2647 = vadd.f32 0.0, %v2646
        %2648 = vdwg.mxu0
        %v2649 = vadd.f32 %v2515, %v2630
        %v2650 = vadd.f32 %v2516, %v2632
        %v2651 = vadd.f32 %v2517, %v2635
        %v2652 = vadd.f32 %v2518, %v2637
        %v2653 = vadd.f32 %v2519, %v2640
        %v2654 = vadd.f32 %v2520, %v2642
        %v2655 = vadd.f32 %v2521, %v2645
        %v2656 = vadd.f32 %v2522, %v2647
        %v2657 = vld [vmem:[%s1936] sm:$0xf]
        %v2658 = vld [vmem:[%s1936 + $0x4] sm:$0x1]
        %v2659 = vld [vmem:[%s1936 + $0x8] sm:$0xf]
        %v2660 = vld [vmem:[%s1936 + $0xc] sm:$0x1]
        %v2661 = vld [vmem:[%s1936 + $0x10] sm:$0xf]
        %v2662 = vld [vmem:[%s1936 + $0x14] sm:$0x1]
        %v2663 = vld [vmem:[%s1936 + $0x18] sm:$0xf]
        %v2664 = vld [vmem:[%s1936 + $0x1c] sm:$0x1]
        %v2665 = vld [vmem:[%s1936 + $0x20] sm:$0xf]
        %v2666 = vld [vmem:[%s1936 + $0x24] sm:$0x1]
        %v2667 = vld [vmem:[%s1936 + $0x28] sm:$0xf]
        %v2668 = vld [vmem:[%s1936 + $0x2c] sm:$0x1]
        %v2669 = vld [vmem:[%s1936 + $0x30] sm:$0xf]
        %v2670 = vld [vmem:[%s1936 + $0x34] sm:$0x1]
        %v2671 = vld [vmem:[%s1936 + $0x38] sm:$0xf]
        %v2672 = vld [vmem:[%s1936 + $0x3c] sm:$0x1]
        %v2674 = vshrl.u32 %v2657, 16
        %v2676 = vrot.slane %v2674, 4
        %v2677 = vshll.u32 %v2657, 16
        %v2679 = vrot.slane %v2677, 5
        %v2680 = vor.u32 %v2676, %v2679
        %v2681 = vrot.slane %v2680, 4
        %v2683 = vshll.u32 %v2658, 16
        %v2685 = vrot.slane %v2683, 5
        %v2686 = vsel %vm624, %v2681, %v2685
        %v2688 = vshrl.u32 %v2659, 16
        %v2690 = vrot.slane %v2688, 4
        %v2691 = vshll.u32 %v2659, 16
        %v2693 = vrot.slane %v2691, 5
        %v2694 = vor.u32 %v2690, %v2693
        %v2695 = vrot.slane %v2694, 4
        %v2697 = vshll.u32 %v2660, 16
        %v2699 = vrot.slane %v2697, 5
        %v2700 = vsel %vm624, %v2695, %v2699
        %v2702 = vshrl.u32 %v2661, 16
        %v2704 = vrot.slane %v2702, 4
        %v2705 = vshll.u32 %v2661, 16
        %v2707 = vrot.slane %v2705, 5
        %v2708 = vor.u32 %v2704, %v2707
        %v2709 = vrot.slane %v2708, 4
        %v2711 = vshll.u32 %v2662, 16
        %v2713 = vrot.slane %v2711, 5
        %v2714 = vsel %vm624, %v2709, %v2713
        %v2716 = vshrl.u32 %v2663, 16
        %v2718 = vrot.slane %v2716, 4
        %v2719 = vshll.u32 %v2663, 16
        %v2721 = vrot.slane %v2719, 5
        %v2722 = vor.u32 %v2718, %v2721
        %v2723 = vrot.slane %v2722, 4
        %v2725 = vshll.u32 %v2664, 16
        %v2727 = vrot.slane %v2725, 5
        %v2728 = vsel %vm624, %v2723, %v2727
        %v2730 = vshrl.u32 %v2665, 16
        %v2732 = vrot.slane %v2730, 4
        %v2733 = vshll.u32 %v2665, 16
        %v2735 = vrot.slane %v2733, 5
        %v2736 = vor.u32 %v2732, %v2735
        %v2737 = vrot.slane %v2736, 4
        %v2739 = vshll.u32 %v2666, 16
        %v2741 = vrot.slane %v2739, 5
        %v2742 = vsel %vm624, %v2737, %v2741
        %v2744 = vshrl.u32 %v2667, 16
        %v2746 = vrot.slane %v2744, 4
        %v2747 = vshll.u32 %v2667, 16
        %v2749 = vrot.slane %v2747, 5
        %v2750 = vor.u32 %v2746, %v2749
        %v2751 = vrot.slane %v2750, 4
        %v2753 = vshll.u32 %v2668, 16
        %v2755 = vrot.slane %v2753, 5
        %v2756 = vsel %vm624, %v2751, %v2755
        %v2758 = vshrl.u32 %v2669, 16
        %v2760 = vrot.slane %v2758, 4
        %v2761 = vshll.u32 %v2669, 16
        %v2763 = vrot.slane %v2761, 5
        %v2764 = vor.u32 %v2760, %v2763
        %v2765 = vrot.slane %v2764, 4
        %v2767 = vshll.u32 %v2670, 16
        %v2769 = vrot.slane %v2767, 5
        %v2770 = vsel %vm624, %v2765, %v2769
        %v2772 = vshrl.u32 %v2671, 16
        %v2774 = vrot.slane %v2772, 4
        %v2775 = vshll.u32 %v2671, 16
        %v2777 = vrot.slane %v2775, 5
        %v2778 = vor.u32 %v2774, %v2777
        %v2779 = vrot.slane %v2778, 4
        %v2781 = vshll.u32 %v2672, 16
        %v2783 = vrot.slane %v2781, 5
        %v2784 = vsel %vm624, %v2779, %v2783
        %s2785 = scalar_lea.vmem %s3, 256
        %v2786 = vld [vmem:[%s2785] sm:$0xf]
        %v2787 = vld [vmem:[%s2785 + $0x4] sm:$0xf]
        %v2788 = vld [vmem:[%s2785 + $0x8] sm:$0xf]
        %v2789 = vld [vmem:[%s2785 + $0xc] sm:$0xf]
        %v2790 = vld [vmem:[%s2785 + $0x10] sm:$0xf]
        %v2791 = vld [vmem:[%s2785 + $0x14] sm:$0xf]
        %v2792 = vld [vmem:[%s2785 + $0x18] sm:$0xf]
        %v2793 = vld [vmem:[%s2785 + $0x1c] sm:$0xf]
        %v2794 = vld [vmem:[%s2785 + $0x20] sm:$0xf]
        %v2795 = vld [vmem:[%s2785 + $0x24] sm:$0xf]
        %v2796 = vld [vmem:[%s2785 + $0x28] sm:$0xf]
        %v2797 = vld [vmem:[%s2785 + $0x2c] sm:$0xf]
        %v2798 = vld [vmem:[%s2785 + $0x30] sm:$0xf]
        %v2799 = vld [vmem:[%s2785 + $0x34] sm:$0xf]
        %v2800 = vld [vmem:[%s2785 + $0x38] sm:$0xf]
        %v2801 = vld [vmem:[%s2785 + $0x3c] sm:$0xf]
        %v2802 = vunpack.c.l.b16 %v2686
        %v2803 = vunpack.c.l.b16 %v2700
        %v2804 = vunpack.c.l.b16 %v2714
        %v2805 = vunpack.c.l.b16 %v2728
        %v2806 = vunpack.c.l.b16 %v2742
        %v2807 = vunpack.c.l.b16 %v2756
        %v2808 = vunpack.c.l.b16 %v2770
        %v2809 = vunpack.c.l.b16 %v2784
        %v2810 = vpack.c.b16 %v2803, %v2802
        %v2811 = vpack.c.b16 %v2805, %v2804
        %v2812 = vpack.c.b16 %v2807, %v2806
        %v2813 = vpack.c.b16 %v2809, %v2808
        %v2834 = vunpack.c.l.b16 %v2786
        %v2835 = vunpack.c.l.b16 %v2787
        %v2836 = vunpack.c.l.b16 %v2788
        %v2837 = vunpack.c.l.b16 %v2789
        %v2838 = vunpack.c.l.b16 %v2790
        %v2839 = vunpack.c.l.b16 %v2791
        %v2840 = vunpack.c.l.b16 %v2792
        %v2841 = vunpack.c.l.b16 %v2793
        %v2842 = vunpack.c.l.b16 %v2794
        %v2843 = vunpack.c.l.b16 %v2795
        %v2844 = vunpack.c.l.b16 %v2796
        %v2845 = vunpack.c.l.b16 %v2797
        %v2846 = vunpack.c.l.b16 %v2798
        %v2847 = vunpack.c.l.b16 %v2799
        %v2848 = vunpack.c.l.b16 %v2800
        %v2849 = vunpack.c.l.b16 %v2801
        %v2850 = vpack.c.b16 %v2835, %v2834
        %v2851 = vpack.c.b16 %v2837, %v2836
        %v2852 = vpack.c.b16 %v2839, %v2838
        %v2853 = vpack.c.b16 %v2841, %v2840
        %v2854 = vpack.c.b16 %v2843, %v2842
        %v2855 = vpack.c.b16 %v2845, %v2844
        %v2856 = vpack.c.b16 %v2847, %v2846
        %v2857 = vpack.c.b16 %v2849, %v2848
        %2866 = vmatpush.bf16.msra.mxu0 %v2857
        %2867 = vmatpush.bf16.msra.mxu0 %v2856
        %2868 = vmatpush.bf16.msra.mxu0 %v2855
        %2869 = vmatpush.bf16.msra.mxu0 %v2854
        %2870 = vmatpush.bf16.msra.mxu0 %v2853
        %2871 = vmatpush.bf16.msra.mxu0 %v2852
        %2872 = vmatpush.bf16.msra.mxu0 %v2851
        %2873 = vmatpush.bf16.msra.mxu0 %v2850
        %2874 = vmatmul.bf16.gmra.mxu0 %v2810
        %v2875 = vpop.f32.mrf.mxu0
        %v2876 = vadd.f32 0.0, %v2875
        %v2877 = vpop.f32.mrf.mxu0
        %v2878 = vadd.f32 0.0, %v2877
        %2879 = vmatmul.bf16.gmra.mxu0 %v2811
        %v2880 = vpop.f32.mrf.mxu0
        %v2881 = vadd.f32 0.0, %v2880
        %v2882 = vpop.f32.mrf.mxu0
        %v2883 = vadd.f32 0.0, %v2882
        %2884 = vmatmul.bf16.gmra.mxu0 %v2812
        %v2885 = vpop.f32.mrf.mxu0
        %v2886 = vadd.f32 0.0, %v2885
        %v2887 = vpop.f32.mrf.mxu0
        %v2888 = vadd.f32 0.0, %v2887
        %2889 = vmatmul.bf16.gmra.mxu0 %v2813
        %v2890 = vpop.f32.mrf.mxu0
        %v2891 = vadd.f32 0.0, %v2890
        %v2892 = vpop.f32.mrf.mxu0
        %v2893 = vadd.f32 0.0, %v2892
        %2894 = vdwg.mxu0
        %v2895 = vadd.f32 %v2649, %v2876
        %v2896 = vadd.f32 %v2650, %v2878
        %v2897 = vadd.f32 %v2651, %v2881
        %v2898 = vadd.f32 %v2652, %v2883
        %v2899 = vadd.f32 %v2653, %v2886
        %v2900 = vadd.f32 %v2654, %v2888
        %v2901 = vadd.f32 %v2655, %v2891
        %v2902 = vadd.f32 %v2656, %v2893
        %v2903 = vld [vmem:[%s1936] sm:$0xe]
        %v2904 = vld [vmem:[%s1936 + $0x8] sm:$0xe]
        %v2905 = vld [vmem:[%s1936 + $0x10] sm:$0xe]
        %v2906 = vld [vmem:[%s1936 + $0x18] sm:$0xe]
        %v2907 = vld [vmem:[%s1936 + $0x20] sm:$0xe]
        %v2908 = vld [vmem:[%s1936 + $0x28] sm:$0xe]
        %v2909 = vld [vmem:[%s1936 + $0x30] sm:$0xe]
        %v2910 = vld [vmem:[%s1936 + $0x38] sm:$0xe]
        %v2927 = vrot.slane %v2903, 5
        %v2928 = vrot.slane %v2927, 4
        %v2929 = vrot.slane %v2658, 5
        %v2930 = vsel %vm2372, %v2928, %v2929
        %v2931 = vrot.slane %v2904, 5
        %v2932 = vrot.slane %v2931, 4
        %v2933 = vrot.slane %v2660, 5
        %v2934 = vsel %vm2372, %v2932, %v2933
        %v2935 = vrot.slane %v2905, 5
        %v2936 = vrot.slane %v2935, 4
        %v2937 = vrot.slane %v2662, 5
        %v2938 = vsel %vm2372, %v2936, %v2937
        %v2939 = vrot.slane %v2906, 5
        %v2940 = vrot.slane %v2939, 4
        %v2941 = vrot.slane %v2664, 5
        %v2942 = vsel %vm2372, %v2940, %v2941
        %v2943 = vrot.slane %v2907, 5
        %v2944 = vrot.slane %v2943, 4
        %v2945 = vrot.slane %v2666, 5
        %v2946 = vsel %vm2372, %v2944, %v2945
        %v2947 = vrot.slane %v2908, 5
        %v2948 = vrot.slane %v2947, 4
        %v2949 = vrot.slane %v2668, 5
        %v2950 = vsel %vm2372, %v2948, %v2949
        %v2951 = vrot.slane %v2909, 5
        %v2952 = vrot.slane %v2951, 4
        %v2953 = vrot.slane %v2670, 5
        %v2954 = vsel %vm2372, %v2952, %v2953
        %v2955 = vrot.slane %v2910, 5
        %v2956 = vrot.slane %v2955, 4
        %v2957 = vrot.slane %v2672, 5
        %v2958 = vsel %vm2372, %v2956, %v2957
        %s2959 = scalar_lea.vmem %s3, 320
        %v2960 = vld [vmem:[%s2959] sm:$0xf]
        %v2961 = vld [vmem:[%s2959 + $0x4] sm:$0xf]
        %v2962 = vld [vmem:[%s2959 + $0x8] sm:$0xf]
        %v2963 = vld [vmem:[%s2959 + $0xc] sm:$0xf]
        %v2964 = vld [vmem:[%s2959 + $0x10] sm:$0xf]
        %v2965 = vld [vmem:[%s2959 + $0x14] sm:$0xf]
        %v2966 = vld [vmem:[%s2959 + $0x18] sm:$0xf]
        %v2967 = vld [vmem:[%s2959 + $0x1c] sm:$0xf]
        %v2968 = vld [vmem:[%s2959 + $0x20] sm:$0xf]
        %v2969 = vld [vmem:[%s2959 + $0x24] sm:$0xf]
        %v2970 = vld [vmem:[%s2959 + $0x28] sm:$0xf]
        %v2971 = vld [vmem:[%s2959 + $0x2c] sm:$0xf]
        %v2972 = vld [vmem:[%s2959 + $0x30] sm:$0xf]
        %v2973 = vld [vmem:[%s2959 + $0x34] sm:$0xf]
        %v2974 = vld [vmem:[%s2959 + $0x38] sm:$0xf]
        %v2975 = vld [vmem:[%s2959 + $0x3c] sm:$0xf]
        %v2976 = vunpack.c.l.b16 %v2930
        %v2977 = vunpack.c.l.b16 %v2934
        %v2978 = vunpack.c.l.b16 %v2938
        %v2979 = vunpack.c.l.b16 %v2942
        %v2980 = vunpack.c.l.b16 %v2946
        %v2981 = vunpack.c.l.b16 %v2950
        %v2982 = vunpack.c.l.b16 %v2954
        %v2983 = vunpack.c.l.b16 %v2958
        %v2984 = vpack.c.b16 %v2977, %v2976
        %v2985 = vpack.c.b16 %v2979, %v2978
        %v2986 = vpack.c.b16 %v2981, %v2980
        %v2987 = vpack.c.b16 %v2983, %v2982
        %v3008 = vunpack.c.l.b16 %v2960
        %v3009 = vunpack.c.l.b16 %v2961
        %v3010 = vunpack.c.l.b16 %v2962
        %v3011 = vunpack.c.l.b16 %v2963
        %v3012 = vunpack.c.l.b16 %v2964
        %v3013 = vunpack.c.l.b16 %v2965
        %v3014 = vunpack.c.l.b16 %v2966
        %v3015 = vunpack.c.l.b16 %v2967
        %v3016 = vunpack.c.l.b16 %v2968
        %v3017 = vunpack.c.l.b16 %v2969
        %v3018 = vunpack.c.l.b16 %v2970
        %v3019 = vunpack.c.l.b16 %v2971
        %v3020 = vunpack.c.l.b16 %v2972
        %v3021 = vunpack.c.l.b16 %v2973
        %v3022 = vunpack.c.l.b16 %v2974
        %v3023 = vunpack.c.l.b16 %v2975
        %v3024 = vpack.c.b16 %v3009, %v3008
        %v3025 = vpack.c.b16 %v3011, %v3010
        %v3026 = vpack.c.b16 %v3013, %v3012
        %v3027 = vpack.c.b16 %v3015, %v3014
        %v3028 = vpack.c.b16 %v3017, %v3016
        %v3029 = vpack.c.b16 %v3019, %v3018
        %v3030 = vpack.c.b16 %v3021, %v3020
        %v3031 = vpack.c.b16 %v3023, %v3022
        %3040 = vmatpush.bf16.msra.mxu0 %v3031
        %3041 = vmatpush.bf16.msra.mxu0 %v3030
        %3042 = vmatpush.bf16.msra.mxu0 %v3029
        %3043 = vmatpush.bf16.msra.mxu0 %v3028
        %3044 = vmatpush.bf16.msra.mxu0 %v3027
        %3045 = vmatpush.bf16.msra.mxu0 %v3026
        %3046 = vmatpush.bf16.msra.mxu0 %v3025
        %3047 = vmatpush.bf16.msra.mxu0 %v3024
        %3048 = vmatmul.bf16.gmra.mxu0 %v2984
        %v3049 = vpop.f32.mrf.mxu0
        %v3050 = vadd.f32 0.0, %v3049
        %v3051 = vpop.f32.mrf.mxu0
        %v3052 = vadd.f32 0.0, %v3051
        %3053 = vmatmul.bf16.gmra.mxu0 %v2985
        %v3054 = vpop.f32.mrf.mxu0
        %v3055 = vadd.f32 0.0, %v3054
        %v3056 = vpop.f32.mrf.mxu0
        %v3057 = vadd.f32 0.0, %v3056
        %3058 = vmatmul.bf16.gmra.mxu0 %v2986
        %v3059 = vpop.f32.mrf.mxu0
        %v3060 = vadd.f32 0.0, %v3059
        %v3061 = vpop.f32.mrf.mxu0
        %v3062 = vadd.f32 0.0, %v3061
        %3063 = vmatmul.bf16.gmra.mxu0 %v2987
        %v3064 = vpop.f32.mrf.mxu0
        %v3065 = vadd.f32 0.0, %v3064
        %v3066 = vpop.f32.mrf.mxu0
        %v3067 = vadd.f32 0.0, %v3066
        %3068 = vdwg.mxu0
        %v3069 = vadd.f32 %v2895, %v3050
        %v3070 = vadd.f32 %v2896, %v3052
        %v3071 = vadd.f32 %v2897, %v3055
        %v3072 = vadd.f32 %v2898, %v3057
        %v3073 = vadd.f32 %v2899, %v3060
        %v3074 = vadd.f32 %v2900, %v3062
        %v3075 = vadd.f32 %v2901, %v3065
        %v3076 = vadd.f32 %v2902, %v3067
        %s3077 = scalar_lea.vmem [#allocation2], 16
        %v3078 = vld [vmem:[%s3077] sm:$0xf]
        %v3079 = vld [vmem:[%s3077 + $0x8] sm:$0xf]
        %v3080 = vld [vmem:[%s3077 + $0x10] sm:$0xf]
        %v3081 = vld [vmem:[%s3077 + $0x18] sm:$0xf]
        %v3082 = vld [vmem:[%s3077 + $0x20] sm:$0xf]
        %v3083 = vld [vmem:[%s3077 + $0x28] sm:$0xf]
        %v3084 = vld [vmem:[%s3077 + $0x30] sm:$0xf]
        %v3085 = vld [vmem:[%s3077 + $0x38] sm:$0xf]
        %s3086 = scalar_lea.vmem %s3, 384
        %v3087 = vld [vmem:[%s3086] sm:$0xf]
        %v3088 = vld [vmem:[%s3086 + $0x4] sm:$0xf]
        %v3089 = vld [vmem:[%s3086 + $0x8] sm:$0xf]
        %v3090 = vld [vmem:[%s3086 + $0xc] sm:$0xf]
        %v3091 = vld [vmem:[%s3086 + $0x10] sm:$0xf]
        %v3092 = vld [vmem:[%s3086 + $0x14] sm:$0xf]
        %v3093 = vld [vmem:[%s3086 + $0x18] sm:$0xf]
        %v3094 = vld [vmem:[%s3086 + $0x1c] sm:$0xf]
        %v3095 = vld [vmem:[%s3086 + $0x20] sm:$0xf]
        %v3096 = vld [vmem:[%s3086 + $0x24] sm:$0xf]
        %v3097 = vld [vmem:[%s3086 + $0x28] sm:$0xf]
        %v3098 = vld [vmem:[%s3086 + $0x2c] sm:$0xf]
        %v3099 = vld [vmem:[%s3086 + $0x30] sm:$0xf]
        %v3100 = vld [vmem:[%s3086 + $0x34] sm:$0xf]
        %v3101 = vld [vmem:[%s3086 + $0x38] sm:$0xf]
        %v3102 = vld [vmem:[%s3086 + $0x3c] sm:$0xf]
        %v3111 = vunpack.c.l.b16 %v3078
        %v3112 = vunpack.c.l.b16 %v3079
        %v3113 = vunpack.c.l.b16 %v3080
        %v3114 = vunpack.c.l.b16 %v3081
        %v3115 = vunpack.c.l.b16 %v3082
        %v3116 = vunpack.c.l.b16 %v3083
        %v3117 = vunpack.c.l.b16 %v3084
        %v3118 = vunpack.c.l.b16 %v3085
        %v3119 = vpack.c.b16 %v3112, %v3111
        %v3120 = vpack.c.b16 %v3114, %v3113
        %v3121 = vpack.c.b16 %v3116, %v3115
        %v3122 = vpack.c.b16 %v3118, %v3117
        %v3143 = vunpack.c.l.b16 %v3087
        %v3144 = vunpack.c.l.b16 %v3088
        %v3145 = vunpack.c.l.b16 %v3089
        %v3146 = vunpack.c.l.b16 %v3090
        %v3147 = vunpack.c.l.b16 %v3091
        %v3148 = vunpack.c.l.b16 %v3092
        %v3149 = vunpack.c.l.b16 %v3093
        %v3150 = vunpack.c.l.b16 %v3094
        %v3151 = vunpack.c.l.b16 %v3095
        %v3152 = vunpack.c.l.b16 %v3096
        %v3153 = vunpack.c.l.b16 %v3097
        %v3154 = vunpack.c.l.b16 %v3098
        %v3155 = vunpack.c.l.b16 %v3099
        %v3156 = vunpack.c.l.b16 %v3100
        %v3157 = vunpack.c.l.b16 %v3101
        %v3158 = vunpack.c.l.b16 %v3102
        %v3159 = vpack.c.b16 %v3144, %v3143
        %v3160 = vpack.c.b16 %v3146, %v3145
        %v3161 = vpack.c.b16 %v3148, %v3147
        %v3162 = vpack.c.b16 %v3150, %v3149
        %v3163 = vpack.c.b16 %v3152, %v3151
        %v3164 = vpack.c.b16 %v3154, %v3153
        %v3165 = vpack.c.b16 %v3156, %v3155
        %v3166 = vpack.c.b16 %v3158, %v3157
        %3175 = vmatpush.bf16.msra.mxu0 %v3166
        %3176 = vmatpush.bf16.msra.mxu0 %v3165
        %3177 = vmatpush.bf16.msra.mxu0 %v3164
        %3178 = vmatpush.bf16.msra.mxu0 %v3163
        %3179 = vmatpush.bf16.msra.mxu0 %v3162
        %3180 = vmatpush.bf16.msra.mxu0 %v3161
        %3181 = vmatpush.bf16.msra.mxu0 %v3160
        %3182 = vmatpush.bf16.msra.mxu0 %v3159
        %3183 = vmatmul.bf16.gmra.mxu0 %v3119
        %v3184 = vpop.f32.mrf.mxu0
        %v3185 = vadd.f32 0.0, %v3184
        %v3186 = vpop.f32.mrf.mxu0
        %v3187 = vadd.f32 0.0, %v3186
        %3188 = vmatmul.bf16.gmra.mxu0 %v3120
        %v3189 = vpop.f32.mrf.mxu0
        %v3190 = vadd.f32 0.0, %v3189
        %v3191 = vpop.f32.mrf.mxu0
        %v3192 = vadd.f32 0.0, %v3191
        %3193 = vmatmul.bf16.gmra.mxu0 %v3121
        %v3194 = vpop.f32.mrf.mxu0
        %v3195 = vadd.f32 0.0, %v3194
        %v3196 = vpop.f32.mrf.mxu0
        %v3197 = vadd.f32 0.0, %v3196
        %3198 = vmatmul.bf16.gmra.mxu0 %v3122
        %v3199 = vpop.f32.mrf.mxu0
        %v3200 = vadd.f32 0.0, %v3199
        %v3201 = vpop.f32.mrf.mxu0
        %v3202 = vadd.f32 0.0, %v3201
        %3203 = vdwg.mxu0
        %v3204 = vadd.f32 %v3069, %v3185
        %v3205 = vadd.f32 %v3070, %v3187
        %v3206 = vadd.f32 %v3071, %v3190
        %v3207 = vadd.f32 %v3072, %v3192
        %v3208 = vadd.f32 %v3073, %v3195
        %v3209 = vadd.f32 %v3074, %v3197
        %v3210 = vadd.f32 %v3075, %v3200
        %v3211 = vadd.f32 %v3076, %v3202
        %v3212 = vld [vmem:[%s3077] sm:$0xf]
        %v3213 = vld [vmem:[%s3077 + $0x4] sm:$0x1]
        %v3214 = vld [vmem:[%s3077 + $0x8] sm:$0xf]
        %v3215 = vld [vmem:[%s3077 + $0xc] sm:$0x1]
        %v3216 = vld [vmem:[%s3077 + $0x10] sm:$0xf]
        %v3217 = vld [vmem:[%s3077 + $0x14] sm:$0x1]
        %v3218 = vld [vmem:[%s3077 + $0x18] sm:$0xf]
        %v3219 = vld [vmem:[%s3077 + $0x1c] sm:$0x1]
        %v3220 = vld [vmem:[%s3077 + $0x20] sm:$0xf]
        %v3221 = vld [vmem:[%s3077 + $0x24] sm:$0x1]
        %v3222 = vld [vmem:[%s3077 + $0x28] sm:$0xf]
        %v3223 = vld [vmem:[%s3077 + $0x2c] sm:$0x1]
        %v3224 = vld [vmem:[%s3077 + $0x30] sm:$0xf]
        %v3225 = vld [vmem:[%s3077 + $0x34] sm:$0x1]
        %v3226 = vld [vmem:[%s3077 + $0x38] sm:$0xf]
        %v3227 = vld [vmem:[%s3077 + $0x3c] sm:$0x1]
        %v3229 = vshrl.u32 %v3212, 16
        %v3231 = vrot.slane %v3229, 4
        %v3232 = vshll.u32 %v3212, 16
        %v3234 = vrot.slane %v3232, 5
        %v3235 = vor.u32 %v3231, %v3234
        %v3236 = vrot.slane %v3235, 4
        %v3238 = vshll.u32 %v3213, 16
        %v3240 = vrot.slane %v3238, 5
        %v3241 = vsel %vm624, %v3236, %v3240
        %v3243 = vshrl.u32 %v3214, 16
        %v3245 = vrot.slane %v3243, 4
        %v3246 = vshll.u32 %v3214, 16
        %v3248 = vrot.slane %v3246, 5
        %v3249 = vor.u32 %v3245, %v3248
        %v3250 = vrot.slane %v3249, 4
        %v3252 = vshll.u32 %v3215, 16
        %v3254 = vrot.slane %v3252, 5
        %v3255 = vsel %vm624, %v3250, %v3254
        %v3257 = vshrl.u32 %v3216, 16
        %v3259 = vrot.slane %v3257, 4
        %v3260 = vshll.u32 %v3216, 16
        %v3262 = vrot.slane %v3260, 5
        %v3263 = vor.u32 %v3259, %v3262
        %v3264 = vrot.slane %v3263, 4
        %v3266 = vshll.u32 %v3217, 16
        %v3268 = vrot.slane %v3266, 5
        %v3269 = vsel %vm624, %v3264, %v3268
        %v3271 = vshrl.u32 %v3218, 16
        %v3273 = vrot.slane %v3271, 4
        %v3274 = vshll.u32 %v3218, 16
        %v3276 = vrot.slane %v3274, 5
        %v3277 = vor.u32 %v3273, %v3276
        %v3278 = vrot.slane %v3277, 4
        %v3280 = vshll.u32 %v3219, 16
        %v3282 = vrot.slane %v3280, 5
        %v3283 = vsel %vm624, %v3278, %v3282
        %v3285 = vshrl.u32 %v3220, 16
        %v3287 = vrot.slane %v3285, 4
        %v3288 = vshll.u32 %v3220, 16
        %v3290 = vrot.slane %v3288, 5
        %v3291 = vor.u32 %v3287, %v3290
        %v3292 = vrot.slane %v3291, 4
        %v3294 = vshll.u32 %v3221, 16
        %v3296 = vrot.slane %v3294, 5
        %v3297 = vsel %vm624, %v3292, %v3296
        %v3299 = vshrl.u32 %v3222, 16
        %v3301 = vrot.slane %v3299, 4
        %v3302 = vshll.u32 %v3222, 16
        %v3304 = vrot.slane %v3302, 5
        %v3305 = vor.u32 %v3301, %v3304
        %v3306 = vrot.slane %v3305, 4
        %v3308 = vshll.u32 %v3223, 16
        %v3310 = vrot.slane %v3308, 5
        %v3311 = vsel %vm624, %v3306, %v3310
        %v3313 = vshrl.u32 %v3224, 16
        %v3315 = vrot.slane %v3313, 4
        %v3316 = vshll.u32 %v3224, 16
        %v3318 = vrot.slane %v3316, 5
        %v3319 = vor.u32 %v3315, %v3318
        %v3320 = vrot.slane %v3319, 4
        %v3322 = vshll.u32 %v3225, 16
        %v3324 = vrot.slane %v3322, 5
        %v3325 = vsel %vm624, %v3320, %v3324
        %v3327 = vshrl.u32 %v3226, 16
        %v3329 = vrot.slane %v3327, 4
        %v3330 = vshll.u32 %v3226, 16
        %v3332 = vrot.slane %v3330, 5
        %v3333 = vor.u32 %v3329, %v3332
        %v3334 = vrot.slane %v3333, 4
        %v3336 = vshll.u32 %v3227, 16
        %v3338 = vrot.slane %v3336, 5
        %v3339 = vsel %vm624, %v3334, %v3338
        %s3340 = scalar_lea.vmem %s3, 448
        %v3341 = vld [vmem:[%s3340] sm:$0xf]
        %v3342 = vld [vmem:[%s3340 + $0x4] sm:$0xf]
        %v3343 = vld [vmem:[%s3340 + $0x8] sm:$0xf]
        %v3344 = vld [vmem:[%s3340 + $0xc] sm:$0xf]
        %v3345 = vld [vmem:[%s3340 + $0x10] sm:$0xf]
        %v3346 = vld [vmem:[%s3340 + $0x14] sm:$0xf]
        %v3347 = vld [vmem:[%s3340 + $0x18] sm:$0xf]
        %v3348 = vld [vmem:[%s3340 + $0x1c] sm:$0xf]
        %v3349 = vld [vmem:[%s3340 + $0x20] sm:$0xf]
        %v3350 = vld [vmem:[%s3340 + $0x24] sm:$0xf]
        %v3351 = vld [vmem:[%s3340 + $0x28] sm:$0xf]
        %v3352 = vld [vmem:[%s3340 + $0x2c] sm:$0xf]
        %v3353 = vld [vmem:[%s3340 + $0x30] sm:$0xf]
        %v3354 = vld [vmem:[%s3340 + $0x34] sm:$0xf]
        %v3355 = vld [vmem:[%s3340 + $0x38] sm:$0xf]
        %v3356 = vld [vmem:[%s3340 + $0x3c] sm:$0xf]
        %v3357 = vunpack.c.l.b16 %v3241
        %v3358 = vunpack.c.l.b16 %v3255
        %v3359 = vunpack.c.l.b16 %v3269
        %v3360 = vunpack.c.l.b16 %v3283
        %v3361 = vunpack.c.l.b16 %v3297
        %v3362 = vunpack.c.l.b16 %v3311
        %v3363 = vunpack.c.l.b16 %v3325
        %v3364 = vunpack.c.l.b16 %v3339
        %v3365 = vpack.c.b16 %v3358, %v3357
        %v3366 = vpack.c.b16 %v3360, %v3359
        %v3367 = vpack.c.b16 %v3362, %v3361
        %v3368 = vpack.c.b16 %v3364, %v3363
        %v3389 = vunpack.c.l.b16 %v3341
        %v3390 = vunpack.c.l.b16 %v3342
        %v3391 = vunpack.c.l.b16 %v3343
        %v3392 = vunpack.c.l.b16 %v3344
        %v3393 = vunpack.c.l.b16 %v3345
        %v3394 = vunpack.c.l.b16 %v3346
        %v3395 = vunpack.c.l.b16 %v3347
        %v3396 = vunpack.c.l.b16 %v3348
        %v3397 = vunpack.c.l.b16 %v3349
        %v3398 = vunpack.c.l.b16 %v3350
        %v3399 = vunpack.c.l.b16 %v3351
        %v3400 = vunpack.c.l.b16 %v3352
        %v3401 = vunpack.c.l.b16 %v3353
        %v3402 = vunpack.c.l.b16 %v3354
        %v3403 = vunpack.c.l.b16 %v3355
        %v3404 = vunpack.c.l.b16 %v3356
        %v3405 = vpack.c.b16 %v3390, %v3389
        %v3406 = vpack.c.b16 %v3392, %v3391
        %v3407 = vpack.c.b16 %v3394, %v3393
        %v3408 = vpack.c.b16 %v3396, %v3395
        %v3409 = vpack.c.b16 %v3398, %v3397
        %v3410 = vpack.c.b16 %v3400, %v3399
        %v3411 = vpack.c.b16 %v3402, %v3401
        %v3412 = vpack.c.b16 %v3404, %v3403
        %3421 = vmatpush.bf16.msra.mxu0 %v3412
        %3422 = vmatpush.bf16.msra.mxu0 %v3411
        %3423 = vmatpush.bf16.msra.mxu0 %v3410
        %3424 = vmatpush.bf16.msra.mxu0 %v3409
        %3425 = vmatpush.bf16.msra.mxu0 %v3408
        %3426 = vmatpush.bf16.msra.mxu0 %v3407
        %3427 = vmatpush.bf16.msra.mxu0 %v3406
        %3428 = vmatpush.bf16.msra.mxu0 %v3405
        %3429 = vmatmul.bf16.gmra.mxu0 %v3365
        %v3430 = vpop.f32.mrf.mxu0
        %v3431 = vadd.f32 0.0, %v3430
        %v3432 = vpop.f32.mrf.mxu0
        %v3433 = vadd.f32 0.0, %v3432
        %3434 = vmatmul.bf16.gmra.mxu0 %v3366
        %v3435 = vpop.f32.mrf.mxu0
        %v3436 = vadd.f32 0.0, %v3435
        %v3437 = vpop.f32.mrf.mxu0
        %v3438 = vadd.f32 0.0, %v3437
        %3439 = vmatmul.bf16.gmra.mxu0 %v3367
        %v3440 = vpop.f32.mrf.mxu0
        %v3441 = vadd.f32 0.0, %v3440
        %v3442 = vpop.f32.mrf.mxu0
        %v3443 = vadd.f32 0.0, %v3442
        %3444 = vmatmul.bf16.gmra.mxu0 %v3368
        %v3445 = vpop.f32.mrf.mxu0
        %v3446 = vadd.f32 0.0, %v3445
        %v3447 = vpop.f32.mrf.mxu0
        %v3448 = vadd.f32 0.0, %v3447
        %3449 = vdwg.mxu0
        %v3450 = vadd.f32 %v3204, %v3431
        %v3451 = vadd.f32 %v3205, %v3433
        %v3452 = vadd.f32 %v3206, %v3436
        %v3453 = vadd.f32 %v3207, %v3438
        %v3454 = vadd.f32 %v3208, %v3441
        %v3455 = vadd.f32 %v3209, %v3443
        %v3456 = vadd.f32 %v3210, %v3446
        %v3457 = vadd.f32 %v3211, %v3448
        %v3458 = vld [vmem:[%s3077] sm:$0xe]
        %v3459 = vld [vmem:[%s3077 + $0x8] sm:$0xe]
        %v3460 = vld [vmem:[%s3077 + $0x10] sm:$0xe]
        %v3461 = vld [vmem:[%s3077 + $0x18] sm:$0xe]
        %v3462 = vld [vmem:[%s3077 + $0x20] sm:$0xe]
        %v3463 = vld [vmem:[%s3077 + $0x28] sm:$0xe]
        %v3464 = vld [vmem:[%s3077 + $0x30] sm:$0xe]
        %v3465 = vld [vmem:[%s3077 + $0x38] sm:$0xe]
        %v3482 = vrot.slane %v3458, 5
        %v3483 = vrot.slane %v3482, 4
        %v3484 = vrot.slane %v3213, 5
        %v3485 = vsel %vm2372, %v3483, %v3484
        %v3486 = vrot.slane %v3459, 5
        %v3487 = vrot.slane %v3486, 4
        %v3488 = vrot.slane %v3215, 5
        %v3489 = vsel %vm2372, %v3487, %v3488
        %v3490 = vrot.slane %v3460, 5
        %v3491 = vrot.slane %v3490, 4
        %v3492 = vrot.slane %v3217, 5
        %v3493 = vsel %vm2372, %v3491, %v3492
        %v3494 = vrot.slane %v3461, 5
        %v3495 = vrot.slane %v3494, 4
        %v3496 = vrot.slane %v3219, 5
        %v3497 = vsel %vm2372, %v3495, %v3496
        %v3498 = vrot.slane %v3462, 5
        %v3499 = vrot.slane %v3498, 4
        %v3500 = vrot.slane %v3221, 5
        %v3501 = vsel %vm2372, %v3499, %v3500
        %v3502 = vrot.slane %v3463, 5
        %v3503 = vrot.slane %v3502, 4
        %v3504 = vrot.slane %v3223, 5
        %v3505 = vsel %vm2372, %v3503, %v3504
        %v3506 = vrot.slane %v3464, 5
        %v3507 = vrot.slane %v3506, 4
        %v3508 = vrot.slane %v3225, 5
        %v3509 = vsel %vm2372, %v3507, %v3508
        %v3510 = vrot.slane %v3465, 5
        %v3511 = vrot.slane %v3510, 4
        %v3512 = vrot.slane %v3227, 5
        %v3513 = vsel %vm2372, %v3511, %v3512
        %s3514 = scalar_lea.vmem %s3, 512
        %v3515 = vld [vmem:[%s3514] sm:$0xf]
        %v3516 = vld [vmem:[%s3514 + $0x4] sm:$0xf]
        %v3517 = vld [vmem:[%s3514 + $0x8] sm:$0xf]
        %v3518 = vld [vmem:[%s3514 + $0xc] sm:$0xf]
        %v3519 = vld [vmem:[%s3514 + $0x10] sm:$0xf]
        %v3520 = vld [vmem:[%s3514 + $0x14] sm:$0xf]
        %v3521 = vld [vmem:[%s3514 + $0x18] sm:$0xf]
        %v3522 = vld [vmem:[%s3514 + $0x1c] sm:$0xf]
        %v3523 = vld [vmem:[%s3514 + $0x20] sm:$0xf]
        %v3524 = vld [vmem:[%s3514 + $0x24] sm:$0xf]
        %v3525 = vld [vmem:[%s3514 + $0x28] sm:$0xf]
        %v3526 = vld [vmem:[%s3514 + $0x2c] sm:$0xf]
        %v3527 = vld [vmem:[%s3514 + $0x30] sm:$0xf]
        %v3528 = vld [vmem:[%s3514 + $0x34] sm:$0xf]
        %v3529 = vld [vmem:[%s3514 + $0x38] sm:$0xf]
        %v3530 = vld [vmem:[%s3514 + $0x3c] sm:$0xf]
        %v3531 = vunpack.c.l.b16 %v3485
        %v3532 = vunpack.c.l.b16 %v3489
        %v3533 = vunpack.c.l.b16 %v3493
        %v3534 = vunpack.c.l.b16 %v3497
        %v3535 = vunpack.c.l.b16 %v3501
        %v3536 = vunpack.c.l.b16 %v3505
        %v3537 = vunpack.c.l.b16 %v3509
        %v3538 = vunpack.c.l.b16 %v3513
        %v3539 = vpack.c.b16 %v3532, %v3531
        %v3540 = vpack.c.b16 %v3534, %v3533
        %v3541 = vpack.c.b16 %v3536, %v3535
        %v3542 = vpack.c.b16 %v3538, %v3537
        %v3563 = vunpack.c.l.b16 %v3515
        %v3564 = vunpack.c.l.b16 %v3516
        %v3565 = vunpack.c.l.b16 %v3517
        %v3566 = vunpack.c.l.b16 %v3518
        %v3567 = vunpack.c.l.b16 %v3519
        %v3568 = vunpack.c.l.b16 %v3520
        %v3569 = vunpack.c.l.b16 %v3521
        %v3570 = vunpack.c.l.b16 %v3522
        %v3571 = vunpack.c.l.b16 %v3523
        %v3572 = vunpack.c.l.b16 %v3524
        %v3573 = vunpack.c.l.b16 %v3525
        %v3574 = vunpack.c.l.b16 %v3526
        %v3575 = vunpack.c.l.b16 %v3527
        %v3576 = vunpack.c.l.b16 %v3528
        %v3577 = vunpack.c.l.b16 %v3529
        %v3578 = vunpack.c.l.b16 %v3530
        %v3579 = vpack.c.b16 %v3564, %v3563
        %v3580 = vpack.c.b16 %v3566, %v3565
        %v3581 = vpack.c.b16 %v3568, %v3567
        %v3582 = vpack.c.b16 %v3570, %v3569
        %v3583 = vpack.c.b16 %v3572, %v3571
        %v3584 = vpack.c.b16 %v3574, %v3573
        %v3585 = vpack.c.b16 %v3576, %v3575
        %v3586 = vpack.c.b16 %v3578, %v3577
        %3595 = vmatpush.bf16.msra.mxu0 %v3586
        %3596 = vmatpush.bf16.msra.mxu0 %v3585
        %3597 = vmatpush.bf16.msra.mxu0 %v3584
        %3598 = vmatpush.bf16.msra.mxu0 %v3583
        %3599 = vmatpush.bf16.msra.mxu0 %v3582
        %3600 = vmatpush.bf16.msra.mxu0 %v3581
        %3601 = vmatpush.bf16.msra.mxu0 %v3580
        %3602 = vmatpush.bf16.msra.mxu0 %v3579
        %3603 = vmatmul.bf16.gmra.mxu0 %v3539
        %v3604 = vpop.f32.mrf.mxu0
        %v3605 = vadd.f32 0.0, %v3604
        %v3606 = vpop.f32.mrf.mxu0
        %v3607 = vadd.f32 0.0, %v3606
        %3608 = vmatmul.bf16.gmra.mxu0 %v3540
        %v3609 = vpop.f32.mrf.mxu0
        %v3610 = vadd.f32 0.0, %v3609
        %v3611 = vpop.f32.mrf.mxu0
        %v3612 = vadd.f32 0.0, %v3611
        %3613 = vmatmul.bf16.gmra.mxu0 %v3541
        %v3614 = vpop.f32.mrf.mxu0
        %v3615 = vadd.f32 0.0, %v3614
        %v3616 = vpop.f32.mrf.mxu0
        %v3617 = vadd.f32 0.0, %v3616
        %3618 = vmatmul.bf16.gmra.mxu0 %v3542
        %v3619 = vpop.f32.mrf.mxu0
        %v3620 = vadd.f32 0.0, %v3619
        %v3621 = vpop.f32.mrf.mxu0
        %v3622 = vadd.f32 0.0, %v3621
        %3623 = vdwg.mxu0
        %v3624 = vadd.f32 %v3450, %v3605
        %v3625 = vadd.f32 %v3451, %v3607
        %v3626 = vadd.f32 %v3452, %v3610
        %v3627 = vadd.f32 %v3453, %v3612
        %v3628 = vadd.f32 %v3454, %v3615
        %v3629 = vadd.f32 %v3455, %v3617
        %v3630 = vadd.f32 %v3456, %v3620
        %v3631 = vadd.f32 %v3457, %v3622
        %v3632 = vld [vmem:[%s4] sm:$0x1]
        %v3634 = vperm.slane %v3632, 0
        %v3636 = vadd.f32 %v3624, %v3634
        %v3637 = vadd.f32 %v3625, %v3634
        %v3638 = vadd.f32 %v3626, %v3634
        %v3639 = vadd.f32 %v3627, %v3634
        %v3640 = vadd.f32 %v3628, %v3634
        %v3641 = vadd.f32 %v3629, %v3634
        %v3642 = vadd.f32 %v3630, %v3634
        %v3643 = vadd.f32 %v3631, %v3634
        %v3644 = vld [vmem:[%s396] sm:$0x1]
        %v3646 = vperm.slane %v3644, 0
        %v3648 = vmul.f32 %v3636, %v3646
        %v3649 = vmul.f32 %v3637, %v3646
        %v3650 = vmul.f32 %v3638, %v3646
        %v3651 = vmul.f32 %v3639, %v3646
        %v3652 = vmul.f32 %v3640, %v3646
        %v3653 = vmul.f32 %v3641, %v3646
        %v3654 = vmul.f32 %v3642, %v3646
        %v3655 = vmul.f32 %v3643, %v3646
        %v3656 = vadd.f32 %v3648, %v1820
        %v3657 = vadd.f32 %v3649, %v1821
        %v3658 = vadd.f32 %v3650, %v1822
        %v3659 = vadd.f32 %v3651, %v1823
        %v3660 = vadd.f32 %v3652, %v1824
        %v3661 = vadd.f32 %v3653, %v1825
        %v3662 = vadd.f32 %v3654, %v1826
        %v3663 = vadd.f32 %v3655, %v1827
        %v3664 = vmax.f32 %v3656, 0.0
        %v3665 = vmax.f32 %v3657, 0.0
        %v3666 = vmax.f32 %v3658, 0.0
        %v3667 = vmax.f32 %v3659, 0.0
        %v3668 = vmax.f32 %v3660, 0.0
        %v3669 = vmax.f32 %v3661, 0.0
        %v3670 = vmax.f32 %v3662, 0.0
        %v3671 = vmax.f32 %v3663, 0.0
        %3672 = vst [vmem:[%s385] sm:$0xff] %v3664
        %3673 = vst [vmem:[%s385 + $0x8] sm:$0xff] %v3665
        %3674 = vst [vmem:[%s385 + $0x10] sm:$0xff] %v3666
        %3675 = vst [vmem:[%s385 + $0x18] sm:$0xff] %v3667
        %3676 = vst [vmem:[%s385 + $0x20] sm:$0xff] %v3668
        %3677 = vst [vmem:[%s385 + $0x28] sm:$0xff] %v3669
        %3678 = vst [vmem:[%s385 + $0x30] sm:$0xff] %v3670
        %3679 = vst [vmem:[%s385 + $0x38] sm:$0xff] %v3671
        %s3680 = sand.u32 %s262, 1
        %s3681 = scalar_lea.sflag [#allocation4], %s3680
        %s3682 = sand.u32 %s262, 1
        %s3683 = smul.addr %s3682, 64
        %s3684 = scalar_lea.vmem [#allocation3], %s3683
        // Predicated region
        $region61: #{_lambda_.1} parent=59 // pred_check
          %p3685 = pneg %p272
        $region62: #{_lambda_.1} parent=59 // pred_check_branch
          %3687 = sbr.rel (%p3685) target = $region64
        $region63: #{_lambda_.1} parent=59 // pred_region
          %3689 = vsyncadd %s3681, 0
          %s3690 = smul.addr %s24, 8
          %s3691 = smul.addr %s3690, 8
          %s3692 = scalar_lea.hbm %s10, %s3691
          %s3693 = sshll.u32 %s3684, 4
          %s3694 = int_to_ptr.vmem [resolvable:$true] %s3693
          %s3695 = sshll.u32 %s3692, 4
          %s3696 = int_to_ptr.hbm [resolvable:$true] %s3695
          %3701 = dma.vmem_to_hbm [thread:$0]  %s3694, 1024, %s3696, %s3681, 128, 128, 8
        $region64: #{_lambda_.1} parent=59 // pred_fallthru
          _
      $region60: #{_lambda_.1} parent=5 // pred_fallthru
        _
      %p3702 = scmp.le.s32.totalorder 2, %s19
      // Predicated region
      $region65: #{_lambda_.1} parent=5 // pred_check
        %p3703 = pneg %p3702
      $region66: #{_lambda_.1} parent=5 // pred_check_branch
        %3705 = sbr.rel (%p3703) target = $region68
      $region67: #{_lambda_.1} parent=5 // pred_region
        %s3706 = ssub.s32 %s19, 2
        // Predicated region
        $region69: #{_lambda_.1} parent=67 // pred_check
          %p3707 = pneg %p278
        $region70: #{_lambda_.1} parent=67 // pred_check_branch
          %3709 = sbr.rel (%p3707) target = $region72
        $region71: #{_lambda_.1} parent=67 // pred_region
          %s3710 = sand.u32 %s263, 1
          %s3711 = scalar_lea.sflag [#allocation4], %s3710
          %s3712 = sand.u32 %s263, 1
          %s3713 = smul.addr %s3712, 64
          %s3714 = scalar_lea.vmem [#allocation3], %s3713
          %3716 = dma.done %s3711, 1024
        $region72: #{_lambda_.1} parent=67 // pred_fallthru
          _
      $region68: #{_lambda_.1} parent=5 // pred_fallthru
        _
    $region6: #{_lambda_.1} parent=1 // loop_footer
      %s23 = sadd.s32 1, %s19
    $region7: #{_lambda_.1} parent=1 // loop_footer_branch
      %18 = sbr.rel target = $region3
    $region8: #{_lambda_.1} parent=1 // loop_exit
      _
    %3717 = vsyncpa [#allocation4], 1
    %s3718 = scalar_lea.sflag [#allocation4], 1
    %3719 = vsyncpa %s3718, 1

</llo_original>
